<compile_context>
chip_gen: v7x
topology: tpu7x:2x2x1
jax: 0.10.0
libtpu: 0.0.40
codegen_flags: <defaults>
</compile_context>

<pallas_src>
import functools

import jax
import jax.numpy as jnp
from jax.experimental import pallas as pl
from jax.experimental.pallas import tpu as pltpu

EMB_DIM = 384                  # emb_dim from the PyTorch module
HIDDEN_DIM = 4 * EMB_DIM       # 1536
HIDDEN_CHUNK = 512             # 1536 = 3 * 512 ; live intermediate stays small
DROPOUT_P = 0.2                # identity at inference
_ROW_ALIGN = 16                # bf16 sublane packing granularity
_MIN_ROWS_FOR_SPLIT = 256      # once n_pad >= 2*this, force >= 2 grid steps


def _round_up(x, m):
    return ((x + m - 1) // m) * m


def _pick_block_rows(n_pad, max_rows):
    """Largest multiple of 16 that divides n_pad and is <= cap.

    cap = max_rows (clamped to a multiple of 16); for large inputs it is also
    limited to n_pad // 2 so the grid has >= 2 steps (lets v7x split rows
    across its two TensorCores and gives the pipeline something to overlap).
    """
    cap = max(_ROW_ALIGN, (max_rows // _ROW_ALIGN) * _ROW_ALIGN)
    if n_pad >= 2 * _MIN_ROWS_FOR_SPLIT:
        cap = min(cap, n_pad // 2)
    cap = min(cap, n_pad)
    m = n_pad // _ROW_ALIGN
    for d in range(cap // _ROW_ALIGN, 0, -1):
        if m % d == 0:
            return d * _ROW_ALIGN
    return _ROW_ALIGN


# ------------------------------- Pallas kernel --------------------------------
def ffn_kernel(x_ref, w1_ref, b1_ref, w2_ref, b2_ref, o_ref):
    """Fused Linear(D->4D) + ReLU + Linear(4D->D) on one row block.

    The hidden dim is processed in HIDDEN_CHUNK-column slices so only a
    (bn, HIDDEN_CHUNK) f32 intermediate is live at a time.
    """
    x = x_ref[...].astype(jnp.bfloat16)                    # cast on VPU
    acc = jnp.zeros(o_ref.shape, jnp.float32)
    hidden = w1_ref.shape[-1]
    for c in range(hidden // HIDDEN_CHUNK):                # static, 3 iterations
        lo = c * HIDDEN_CHUNK
        hi = lo + HIDDEN_CHUNK
        # first linear: bf16 x bf16 -> f32 accumulation on the MXU
        h = jnp.dot(x, w1_ref[:, lo:hi], preferred_element_type=jnp.float32)
        h = jnp.maximum(h + b1_ref[:, lo:hi], 0.0)         # bias + ReLU in f32
        # second linear (projection), accumulated over hidden chunks
        acc = acc + jnp.dot(h.astype(jnp.bfloat16), w2_ref[lo:hi, :],
                            preferred_element_type=jnp.float32)
    # Dropout(p=0.2) is identity in eval mode.
    o_ref[...] = (acc + b2_ref[...]).astype(o_ref.dtype)


# ------------------------------ pallas_call wrapper ----------------------------
@functools.partial(jax.jit, static_argnames=("block_rows",))
def feed_forward(x, params, block_rows=512):
    """Equivalent of FeedForward.forward(x) in eval mode.

    x: (..., EMB_DIM) float32.  `params` must come from prepare_params()
    (bf16 weights, f32 biases).  All leading dims are flattened into one row
    slab handled by a single fused kernel call.
    """
    w1, b1, w2, b2 = params["w1"], params["b1"], params["w2"], params["b2"]
    d = x.shape[-1]
    hidden = w1.shape[-1]
    assert w1.shape == (d, hidden) and w2.shape == (hidden, d)
    assert hidden % HIDDEN_CHUNK == 0 and d % 128 == 0

    orig_shape = x.shape
    x2 = x.reshape(-1, d)                      # no dtype cast here (done in-kernel)
    n = x2.shape[0]
    n_pad = _round_up(n, _ROW_ALIGN)           # minimal 16-row alignment only
    if n_pad != n:
        x2 = jnp.pad(x2, ((0, n_pad - n), (0, 0)))

    bn = _pick_block_rows(n_pad, block_rows)
    grid = (n_pad // bn,)

    flops = 4 * n_pad * d * hidden             # two matmuls
    bytes_accessed = (x2.size * x2.dtype.itemsize          # x in
                      + n_pad * d * 4                      # out (f32)
                      + w1.size * w1.dtype.itemsize        # W1 (bf16)
                      + w2.size * w2.dtype.itemsize        # W2 (bf16)
                      + (b1.size + b2.size) * 4)           # biases

    out = pl.pallas_call(
        ffn_kernel,
        out_shape=jax.ShapeDtypeStruct((n_pad, d), jnp.float32),
        grid=grid,
        in_specs=[
            pl.BlockSpec((bn, d), lambda i: (i, 0)),          # x rows
            pl.BlockSpec((d, hidden), lambda i: (0, 0)),      # W1 (resident)
            pl.BlockSpec((1, hidden), lambda i: (0, 0)),      # b1
            pl.BlockSpec((hidden, d), lambda i: (0, 0)),      # W2 (resident)
            pl.BlockSpec((1, d), lambda i: (0, 0)),           # b2
        ],
        out_specs=pl.BlockSpec((bn, d), lambda i: (i, 0)),
        compiler_params=pltpu.CompilerParams(
            dimension_semantics=("parallel",),   # rows split across TCs on v7x
            vmem_limit_bytes=40 * 1024 * 1024,
        ),
        cost_estimate=pl.CostEstimate(
            flops=flops, transcendentals=0, bytes_accessed=bytes_accessed),
    )(x2, w1, b1, w2, b2)

    if n_pad != n:
        out = out[:n]
    return out.reshape(orig_shape)


# ----------------------- references (for correctness check) --------------------
def reference_f32(x, params):
    """Exact PyTorch (f32) semantics."""
    h = jnp.maximum(x @ params["w1"] + params["b1"], 0.0)
    return h @ params["w2"] + params["b2"]


def reference_bf16(x, params):
    """Same bf16-operand / f32-accumulate recipe as the kernel."""
    h = jnp.dot(x.astype(jnp.bfloat16), params["w1"].astype(jnp.bfloat16),
                preferred_element_type=jnp.float32) + params["b1"]
    h = jnp.maximum(h, 0.0).astype(jnp.bfloat16)
    return jnp.dot(h, params["w2"].astype(jnp.bfloat16),
                   preferred_element_type=jnp.float32) + params["b2"]


# ----------------------------- parameter handling ------------------------------
def init_params(key, emb_dim=EMB_DIM):
    """f32 parameters, matching the PyTorch module layout (y = x @ W + b)."""
    hidden = 4 * emb_dim
    k1, k2, k3, k4 = jax.random.split(key, 4)
    scale = 0.02
    return {
        "w1": scale * jax.random.normal(k1, (emb_dim, hidden), jnp.float32),
        "b1": 0.01 * jax.random.normal(k3, (1, hidden), jnp.float32),
        "w2": scale * jax.random.normal(k2, (hidden, emb_dim), jnp.float32),
        "b2": 0.01 * jax.random.normal(k4, (1, emb_dim), jnp.float32),
    }


def prepare_params(params):
    """One-time cast of matmul weights to bf16 (MXU-native).

    Call this ONCE at load time; keep the result around. Doing the cast per
    forward call would add a full weight read+write over HBM each step.
    """
    return {
        "w1": params["w1"].astype(jnp.bfloat16),
        "b1": params["b1"].astype(jnp.float32).reshape(1, -1),
        "w2": params["w2"].astype(jnp.bfloat16),
        "b2": params["b2"].astype(jnp.float32).reshape(1, -1),
    }


# ----------------------------------- main ---------------------------------------
if __name__ == "__main__":
    key = jax.random.PRNGKey(0)
    kx, kp = jax.random.split(key)
    params_f32 = init_params(kp)
    params = prepare_params(params_f32)        # bf16 weights, cast once

    test_shapes = [
        (2, 8, EMB_DIM),     # batch=2, seq=8  -> N=16 rows (single small block)
        (2, 10, EMB_DIM),    # N=20 rows (ragged tail -> padded to 32, sliced)
        (4, 64, EMB_DIM),    # N=256 rows (full-width MXU block)
    ]
    for shape in test_shapes:
        x = jax.random.normal(kx, shape, dtype=jnp.float32)
        out = jax.block_until_ready(feed_forward(x, params))
        assert out.shape == shape, (out.shape, shape)

        # tight check against a reference using the same bf16-operand recipe
        ref_b = reference_bf16(x, params_f32)
        err_b = float(jnp.max(jnp.abs(out - ref_b)))
        assert jnp.allclose(out, ref_b, atol=2e-3, rtol=2e-3), err_b

        # loose check against exact f32 PyTorch semantics (bf16 quantization)
        ref_f = reference_f32(x, params_f32)
        err_f = float(jnp.max(jnp.abs(out - ref_f)))
        assert jnp.allclose(out, ref_f, atol=3e-2, rtol=3e-2), err_f

    print("KERNEL_OK")
</pallas_src>

<mosaic_0001>
module attributes {stable_mosaic.version = 11 : i64} {
  func.func @ffn_kernel(%arg0: i32, %arg1: memref<16x384xf32, #tpu.memory_space<vmem>>, %arg2: memref<384x1536xbf16, #tpu.memory_space<vmem>>, %arg3: memref<1x1536xf32, #tpu.memory_space<vmem>>, %arg4: memref<1536x384xbf16, #tpu.memory_space<vmem>>, %arg5: memref<1x384xf32, #tpu.memory_space<vmem>>, %arg6: memref<16x384xf32, #tpu.memory_space<vmem>>) attributes {dimension_semantics = [#tpu.dimension_semantics<parallel>], iteration_bounds = array<i64: 1>, scalar_prefetch = 0 : i64, scratch_operands = 0 : i64, tpu.core_type = #tpu.core_type<tc>, window_params = [{transform_indices = @transform_0, window_bounds = array<i64: 16, 384>}, {pipeline_mode = #tpu.pipeline_mode<synchronous>, transform_indices = @transform_1, window_bounds = array<i64: 384, 1536>}, {pipeline_mode = #tpu.pipeline_mode<synchronous>, transform_indices = @transform_2, window_bounds = array<i64: 1, 1536>}, {pipeline_mode = #tpu.pipeline_mode<synchronous>, transform_indices = @transform_3, window_bounds = array<i64: 1536, 384>}, {pipeline_mode = #tpu.pipeline_mode<synchronous>, transform_indices = @transform_4, window_bounds = array<i64: 1, 384>}, {transform_indices = @transform_5, window_bounds = array<i64: 16, 384>}]} {
    %c0 = arith.constant 0 : index
    %c0_0 = arith.constant 0 : index
    %0 = vector.load %arg1[%c0, %c0_0] : memref<16x384xf32, #tpu.memory_space<vmem>>, vector<16x384xf32>
    %1 = arith.truncf %0 : vector<16x384xf32> to vector<16x384xbf16>
    %cst = arith.constant 0.000000e+00 : f32
    %2 = vector.broadcast %cst : f32 to vector<16x384xf32>
    %c0_1 = arith.constant 0 : index
    %c0_2 = arith.constant 0 : index
    %3 = vector.load %arg2[%c0_1, %c0_2] : memref<384x1536xbf16, #tpu.memory_space<vmem>>, vector<384x512xbf16>
    %cst_3 = arith.constant dense<0.000000e+00> : vector<16x512xf32>
    %4 = tpu.matmul %1, %3, %cst_3 {dimension_numbers = #tpu.dot_dimension_numbers<[1], [0], [0], [1], [0, 0, 1, 1], [], []>} : vector<16x384xbf16>, vector<384x512xbf16>, vector<16x512xf32> -> vector<16x512xf32>
    %c0_4 = arith.constant 0 : index
    %c0_5 = arith.constant 0 : index
    %5 = vector.load %arg3[%c0_4, %c0_5] : memref<1x1536xf32, #tpu.memory_space<vmem>>, vector<1x512xf32>
    %6 = vector.broadcast %5 : vector<1x512xf32> to vector<16x512xf32>
    %7 = arith.addf %4, %6 : vector<16x512xf32>
    %cst_6 = arith.constant 0.000000e+00 : f32
    %8 = vector.broadcast %cst_6 : f32 to vector<16x512xf32>
    %9 = arith.maximumf %7, %8 : vector<16x512xf32>
    %10 = arith.truncf %9 : vector<16x512xf32> to vector<16x512xbf16>
    %c0_7 = arith.constant 0 : index
    %c0_8 = arith.constant 0 : index
    %11 = vector.load %arg4[%c0_7, %c0_8] : memref<1536x384xbf16, #tpu.memory_space<vmem>>, vector<512x384xbf16>
    %cst_9 = arith.constant dense<0.000000e+00> : vector<16x384xf32>
    %12 = tpu.matmul %10, %11, %cst_9 {dimension_numbers = #tpu.dot_dimension_numbers<[1], [0], [0], [1], [0, 0, 1, 1], [], []>} : vector<16x512xbf16>, vector<512x384xbf16>, vector<16x384xf32> -> vector<16x384xf32>
    %13 = arith.addf %2, %12 : vector<16x384xf32>
    %c0_10 = arith.constant 0 : index
    %c512 = arith.constant 512 : index
    %14 = vector.load %arg2[%c0_10, %c512] : memref<384x1536xbf16, #tpu.memory_space<vmem>>, vector<384x512xbf16>
    %cst_11 = arith.constant dense<0.000000e+00> : vector<16x512xf32>
    %15 = tpu.matmul %1, %14, %cst_11 {dimension_numbers = #tpu.dot_dimension_numbers<[1], [0], [0], [1], [0, 0, 1, 1], [], []>} : vector<16x384xbf16>, vector<384x512xbf16>, vector<16x512xf32> -> vector<16x512xf32>
    %c0_12 = arith.constant 0 : index
    %c512_13 = arith.constant 512 : index
    %16 = vector.load %arg3[%c0_12, %c512_13] : memref<1x1536xf32, #tpu.memory_space<vmem>>, vector<1x512xf32>
    %17 = vector.broadcast %16 : vector<1x512xf32> to vector<16x512xf32>
    %18 = arith.addf %15, %17 : vector<16x512xf32>
    %cst_14 = arith.constant 0.000000e+00 : f32
    %19 = vector.broadcast %cst_14 : f32 to vector<16x512xf32>
    %20 = arith.maximumf %18, %19 : vector<16x512xf32>
    %21 = arith.truncf %20 : vector<16x512xf32> to vector<16x512xbf16>
    %c512_15 = arith.constant 512 : index
    %c0_16 = arith.constant 0 : index
    %22 = vector.load %arg4[%c512_15, %c0_16] : memref<1536x384xbf16, #tpu.memory_space<vmem>>, vector<512x384xbf16>
    %cst_17 = arith.constant dense<0.000000e+00> : vector<16x384xf32>
    %23 = tpu.matmul %21, %22, %cst_17 {dimension_numbers = #tpu.dot_dimension_numbers<[1], [0], [0], [1], [0, 0, 1, 1], [], []>} : vector<16x512xbf16>, vector<512x384xbf16>, vector<16x384xf32> -> vector<16x384xf32>
    %24 = arith.addf %13, %23 : vector<16x384xf32>
    %c0_18 = arith.constant 0 : index
    %c1024 = arith.constant 1024 : index
    %25 = vector.load %arg2[%c0_18, %c1024] : memref<384x1536xbf16, #tpu.memory_space<vmem>>, vector<384x512xbf16>
    %cst_19 = arith.constant dense<0.000000e+00> : vector<16x512xf32>
    %26 = tpu.matmul %1, %25, %cst_19 {dimension_numbers = #tpu.dot_dimension_numbers<[1], [0], [0], [1], [0, 0, 1, 1], [], []>} : vector<16x384xbf16>, vector<384x512xbf16>, vector<16x512xf32> -> vector<16x512xf32>
    %c0_20 = arith.constant 0 : index
    %c1024_21 = arith.constant 1024 : index
    %27 = vector.load %arg3[%c0_20, %c1024_21] : memref<1x1536xf32, #tpu.memory_space<vmem>>, vector<1x512xf32>
    %28 = vector.broadcast %27 : vector<1x512xf32> to vector<16x512xf32>
    %29 = arith.addf %26, %28 : vector<16x512xf32>
    %cst_22 = arith.constant 0.000000e+00 : f32
    %30 = vector.broadcast %cst_22 : f32 to vector<16x512xf32>
    %31 = arith.maximumf %29, %30 : vector<16x512xf32>
    %32 = arith.truncf %31 : vector<16x512xf32> to vector<16x512xbf16>
    %c1024_23 = arith.constant 1024 : index
    %c0_24 = arith.constant 0 : index
    %33 = vector.load %arg4[%c1024_23, %c0_24] : memref<1536x384xbf16, #tpu.memory_space<vmem>>, vector<512x384xbf16>
    %cst_25 = arith.constant dense<0.000000e+00> : vector<16x384xf32>
    %34 = tpu.matmul %32, %33, %cst_25 {dimension_numbers = #tpu.dot_dimension_numbers<[1], [0], [0], [1], [0, 0, 1, 1], [], []>} : vector<16x512xbf16>, vector<512x384xbf16>, vector<16x384xf32> -> vector<16x384xf32>
    %35 = arith.addf %24, %34 : vector<16x384xf32>
    %c0_26 = arith.constant 0 : index
    %c0_27 = arith.constant 0 : index
    %36 = vector.load %arg5[%c0_26, %c0_27] : memref<1x384xf32, #tpu.memory_space<vmem>>, vector<1x384xf32>
    %37 = vector.broadcast %36 : vector<1x384xf32> to vector<16x384xf32>
    %38 = arith.addf %35, %37 : vector<16x384xf32>
    %c0_28 = arith.constant 0 : index
    %c0_29 = arith.constant 0 : index
    %39 = vector.load %arg6[%c0_28, %c0_29] : memref<16x384xf32, #tpu.memory_space<vmem>>, vector<16x384xf32>
    tpu.vector_store %arg6[%c0_28, %c0_29], %38 {strides = array<i32>} : memref<16x384xf32, #tpu.memory_space<vmem>>, vector<16x384xf32>,
    return
  }
  func.func @transform_0(%arg0: i32) -> (i32, i32) {
    %c0_i32 = arith.constant 0 : i32
    %c0_i32_0 = arith.constant 0 : i32
    return %arg0, %c0_i32 : i32, i32
  }
  func.func @transform_1(%arg0: i32) -> (i32, i32) {
    %c0_i32 = arith.constant 0 : i32
    %c0_i32_0 = arith.constant 0 : i32
    %c0_i32_1 = arith.constant 0 : i32
    return %c0_i32, %c0_i32_0 : i32, i32
  }
  func.func @transform_2(%arg0: i32) -> (i32, i32) {
    %c0_i32 = arith.constant 0 : i32
    %c0_i32_0 = arith.constant 0 : i32
    %c0_i32_1 = arith.constant 0 : i32
    return %c0_i32, %c0_i32_0 : i32, i32
  }
  func.func @transform_3(%arg0: i32) -> (i32, i32) {
    %c0_i32 = arith.constant 0 : i32
    %c0_i32_0 = arith.constant 0 : i32
    %c0_i32_1 = arith.constant 0 : i32
    return %c0_i32, %c0_i32_0 : i32, i32
  }
  func.func @transform_4(%arg0: i32) -> (i32, i32) {
    %c0_i32 = arith.constant 0 : i32
    %c0_i32_0 = arith.constant 0 : i32
    %c0_i32_1 = arith.constant 0 : i32
    return %c0_i32, %c0_i32_0 : i32, i32
  }
  func.func @transform_5(%arg0: i32) -> (i32, i32) {
    %c0_i32 = arith.constant 0 : i32
    %c0_i32_0 = arith.constant 0 : i32
    return %arg0, %c0_i32 : i32, i32
  }
}

</mosaic_0001>

<llo_original>
// kernel: feed_forward.1
$region0: #{feed_forward.1}
  #allocation0 [shape = 'u32[]', space=smem, size = 0x4, offset = 0x4, fixed_abs, tag = 'smem constant byte address 0x4 - core index']
  #allocation1 [shape = 'u32[144,128]{1,0:T(1,128)}', space=vmem, size = 0x12000, scoped, tag = 'internal scratch']
  %s0 = inlined_call_operand.hbm [shape: f32[16,384], index: 0, kind: input, shape index: {}]
  %s1 = inlined_call_operand.hbm [shape: bf16[384,1536], index: 1, kind: input, shape index: {}]
  %s2 = inlined_call_operand.hbm [shape: f32[1,1536], index: 2, kind: input, shape index: {}]
  %s3 = inlined_call_operand.hbm [shape: bf16[1536,384], index: 3, kind: input, shape index: {}]
  %s4 = inlined_call_operand.hbm [shape: f32[1,384], index: 4, kind: input, shape index: {}]
  %s5 = inlined_call_operand.hbm [shape: f32[16,384], index: 5, kind: output, shape index: {}]
  %s6 = sld [smem:[#allocation0]]
  $region50: #{feed_forward.1} parent=0
    _
  %s8 = ssub.s32 1, %s6
  %s9 = scalar_select 0, %s8, %s6
  $region1: #{feed_forward.1} parent=0
    #allocation2 [shape = 'u8[24576]{0}', space=vmem, size = 0x6000, scoped, tag = 'input window, operand 0, single buffered']
    #allocation3 [shape = 's32[1]{0}', space=sflag, size = 0x4, scoped, tag = 'scoped memory for feed_forward.1']
    #allocation4 [shape = 's32[1]{0}', space=sflag, size = 0x4, scoped, tag = 'scoped memory for feed_forward.1']
    #allocation5 [shape = 'u8[1179648]{0}', space=vmem, size = 0x120000, scoped, tag = 'input window, operand 1, single buffered']
    #allocation6 [shape = 's32[1]{0}', space=sflag, size = 0x4, scoped, tag = 'scoped memory for feed_forward.1']
    #allocation7 [shape = 'u8[6144]{0}', space=vmem, size = 0x1800, scoped, tag = 'input window, operand 2, single buffered']
    #allocation8 [shape = 'u8[1179648]{0}', space=vmem, size = 0x120000, scoped, tag = 'input window, operand 3, single buffered']
    #allocation9 [shape = 's32[1]{0}', space=sflag, size = 0x4, scoped, tag = 'scoped memory for feed_forward.1']
    #allocation10 [shape = 'u8[1536]{0}', space=vmem, size = 0x800, scoped, tag = 'input window, operand 4, single buffered']
    #allocation11 [shape = 'u8[24576]{0}', space=vmem, size = 0x6000, scoped, tag = 'output window, operand 0, single buffered']
    %10 = vsyncpa [#allocation3], 0
    %11 = vsyncpa [#allocation6], 0
    %12 = vsyncpa [#allocation9], 0
    %13 = vsyncpa [#allocation4], 0
    // Predicated region
    $region2: #{feed_forward.1} parent=1 // pred_check
      _
    $region3: #{feed_forward.1} parent=1 // pred_check_branch
      %15 = sbr.rel (0) target = $region5
    $region4: #{feed_forward.1} parent=1 // pred_region
      %s17 = ssub.s32 768, 768
      %18 = vsyncadd [#allocation3], %s17
      %s19 = sshll.u32 [#allocation2], 4
      %s20 = int_to_ptr.vmem [resolvable:$true] %s19
      %25 = dma.hbm_to_vmem [thread:$0]  %s0, 768, %s20, [#allocation3], 384, 384, 24
    $region5: #{feed_forward.1} parent=1 // pred_fallthru
      _
    // Predicated region
    $region6: #{feed_forward.1} parent=1 // pred_check
      _
    $region7: #{feed_forward.1} parent=1 // pred_check_branch
      %27 = sbr.rel (0) target = $region9
    $region8: #{feed_forward.1} parent=1 // pred_region
      %s29 = ssub.s32 36864, 36864
      %30 = vsyncadd [#allocation6], %s29
      %s31 = sshll.u32 [#allocation5], 4
      %s32 = int_to_ptr.vmem [resolvable:$true] %s31
      %37 = dma.hbm_to_vmem [thread:$0]  %s1, 36864, %s32, [#allocation6], 768, 768, 48
    $region9: #{feed_forward.1} parent=1 // pred_fallthru
      _
    // Predicated region
    $region10: #{feed_forward.1} parent=1 // pred_check
      _
    $region11: #{feed_forward.1} parent=1 // pred_check_branch
      %39 = sbr.rel (0) target = $region13
    $region12: #{feed_forward.1} parent=1 // pred_region
      %s41 = ssub.s32 192, 192
      %42 = vsyncadd [#allocation6], %s41
      %s44 = sshll.u32 [#allocation7], 4
      %s45 = int_to_ptr.vmem [resolvable:$true] %s44
      %47 = dma.hbm_to_vmem [thread:$0]  %s2, 192, %s45, [#allocation6]
    $region13: #{feed_forward.1} parent=1 // pred_fallthru
      _
    // Predicated region
    $region14: #{feed_forward.1} parent=1 // pred_check
      _
    $region15: #{feed_forward.1} parent=1 // pred_check_branch
      %49 = sbr.rel (0) target = $region17
    $region16: #{feed_forward.1} parent=1 // pred_region
      %s51 = ssub.s32 36864, 36864
      %52 = vsyncadd [#allocation9], %s51
      %s53 = sshll.u32 [#allocation8], 4
      %s54 = int_to_ptr.vmem [resolvable:$true] %s53
      %59 = dma.hbm_to_vmem [thread:$0]  %s3, 36864, %s54, [#allocation9], 192, 192, 12
    $region17: #{feed_forward.1} parent=1 // pred_fallthru
      _
    // Predicated region
    $region18: #{feed_forward.1} parent=1 // pred_check
      _
    $region19: #{feed_forward.1} parent=1 // pred_check_branch
      %61 = sbr.rel (0) target = $region21
    $region20: #{feed_forward.1} parent=1 // pred_region
      %s63 = ssub.s32 48, 48
      %64 = vsyncadd [#allocation9], %s63
      %s66 = sshll.u32 [#allocation10], 4
      %s67 = int_to_ptr.vmem [resolvable:$true] %s66
      %69 = dma.hbm_to_vmem [thread:$0]  %s4, 48, %s67, [#allocation9]
    $region21: #{feed_forward.1} parent=1 // pred_fallthru
      _
    // Predicated region
    $region22: #{feed_forward.1} parent=1 // pred_check
      _
    $region23: #{feed_forward.1} parent=1 // pred_check_branch
      %71 = sbr.rel (0) target = $region25
    $region24: #{feed_forward.1} parent=1 // pred_region
      %72 = dma.done [#allocation3], 768
    $region25: #{feed_forward.1} parent=1 // pred_fallthru
      _
    // Predicated region
    $region26: #{feed_forward.1} parent=1 // pred_check
      _
    $region27: #{feed_forward.1} parent=1 // pred_check_branch
      %74 = sbr.rel (0) target = $region29
    $region28: #{feed_forward.1} parent=1 // pred_region
      %75 = dma.done [#allocation6], 36864
    $region29: #{feed_forward.1} parent=1 // pred_fallthru
      _
    // Predicated region
    $region30: #{feed_forward.1} parent=1 // pred_check
      _
    $region31: #{feed_forward.1} parent=1 // pred_check_branch
      %77 = sbr.rel (0) target = $region33
    $region32: #{feed_forward.1} parent=1 // pred_region
      %78 = dma.done [#allocation6], 192
    $region33: #{feed_forward.1} parent=1 // pred_fallthru
      _
    // Predicated region
    $region34: #{feed_forward.1} parent=1 // pred_check
      _
    $region35: #{feed_forward.1} parent=1 // pred_check_branch
      %80 = sbr.rel (0) target = $region37
    $region36: #{feed_forward.1} parent=1 // pred_region
      %81 = dma.done [#allocation9], 36864
    $region37: #{feed_forward.1} parent=1 // pred_fallthru
      _
    // Predicated region
    $region38: #{feed_forward.1} parent=1 // pred_check
      _
    $region39: #{feed_forward.1} parent=1 // pred_check_branch
      %83 = sbr.rel (0) target = $region41
    $region40: #{feed_forward.1} parent=1 // pred_region
      %84 = dma.done [#allocation9], 48
    $region41: #{feed_forward.1} parent=1 // pred_fallthru
      _
    %v86 = vld [vmem:[#allocation2] sm:$0xff]
    %v87 = vld [vmem:[#allocation2 + $0x8] sm:$0xff]
    %v88 = vld [vmem:[#allocation2 + $0x10] sm:$0xff]
    %v89 = vld [vmem:[#allocation2 + $0x18] sm:$0xff]
    %v90 = vld [vmem:[#allocation2 + $0x20] sm:$0xff]
    %v91 = vld [vmem:[#allocation2 + $0x28] sm:$0xff]
    %v92 = vpack.c.bf16 %v89, %v86
    %v93 = vpack.c.bf16 %v90, %v87
    %v94 = vpack.c.bf16 %v91, %v88
    %v95 = vld [vmem:[#allocation5] sm:$0xff]
    %v96 = vld [vmem:[#allocation5 + $0x8] sm:$0xff]
    %v97 = vld [vmem:[#allocation5 + $0x30] sm:$0xff]
    %v98 = vld [vmem:[#allocation5 + $0x38] sm:$0xff]
    %v99 = vld [vmem:[#allocation5 + $0x60] sm:$0xff]
    %v100 = vld [vmem:[#allocation5 + $0x68] sm:$0xff]
    %v101 = vld [vmem:[#allocation5 + $0x90] sm:$0xff]
    %v102 = vld [vmem:[#allocation5 + $0x98] sm:$0xff]
    %v103 = vld [vmem:[#allocation5 + $0xc0] sm:$0xff]
    %v104 = vld [vmem:[#allocation5 + $0xc8] sm:$0xff]
    %v105 = vld [vmem:[#allocation5 + $0xf0] sm:$0xff]
    %v106 = vld [vmem:[#allocation5 + $0xf8] sm:$0xff]
    %v107 = vld [vmem:[#allocation5 + $0x120] sm:$0xff]
    %v108 = vld [vmem:[#allocation5 + $0x128] sm:$0xff]
    %v109 = vld [vmem:[#allocation5 + $0x150] sm:$0xff]
    %v110 = vld [vmem:[#allocation5 + $0x158] sm:$0xff]
    %v111 = vld [vmem:[#allocation5 + $0x180] sm:$0xff]
    %v112 = vld [vmem:[#allocation5 + $0x188] sm:$0xff]
    %v113 = vld [vmem:[#allocation5 + $0x1b0] sm:$0xff]
    %v114 = vld [vmem:[#allocation5 + $0x1b8] sm:$0xff]
    %v115 = vld [vmem:[#allocation5 + $0x1e0] sm:$0xff]
    %v116 = vld [vmem:[#allocation5 + $0x1e8] sm:$0xff]
    %v117 = vld [vmem:[#allocation5 + $0x210] sm:$0xff]
    %v118 = vld [vmem:[#allocation5 + $0x218] sm:$0xff]
    %v119 = vld [vmem:[#allocation5 + $0x240] sm:$0xff]
    %v120 = vld [vmem:[#allocation5 + $0x248] sm:$0xff]
    %v121 = vld [vmem:[#allocation5 + $0x270] sm:$0xff]
    %v122 = vld [vmem:[#allocation5 + $0x278] sm:$0xff]
    %v123 = vld [vmem:[#allocation5 + $0x2a0] sm:$0xff]
    %v124 = vld [vmem:[#allocation5 + $0x2a8] sm:$0xff]
    %v125 = vld [vmem:[#allocation5 + $0x2d0] sm:$0xff]
    %v126 = vld [vmem:[#allocation5 + $0x2d8] sm:$0xff]
    %v127 = vld [vmem:[#allocation5 + $0x300] sm:$0xff]
    %v128 = vld [vmem:[#allocation5 + $0x308] sm:$0xff]
    %v129 = vld [vmem:[#allocation5 + $0x330] sm:$0xff]
    %v130 = vld [vmem:[#allocation5 + $0x338] sm:$0xff]
    %v131 = vld [vmem:[#allocation5 + $0x360] sm:$0xff]
    %v132 = vld [vmem:[#allocation5 + $0x368] sm:$0xff]
    %v133 = vld [vmem:[#allocation5 + $0x390] sm:$0xff]
    %v134 = vld [vmem:[#allocation5 + $0x398] sm:$0xff]
    %v135 = vld [vmem:[#allocation5 + $0x3c0] sm:$0xff]
    %v136 = vld [vmem:[#allocation5 + $0x3c8] sm:$0xff]
    %v137 = vld [vmem:[#allocation5 + $0x3f0] sm:$0xff]
    %v138 = vld [vmem:[#allocation5 + $0x3f8] sm:$0xff]
    %v139 = vld [vmem:[#allocation5 + $0x420] sm:$0xff]
    %v140 = vld [vmem:[#allocation5 + $0x428] sm:$0xff]
    %v141 = vld [vmem:[#allocation5 + $0x450] sm:$0xff]
    %v142 = vld [vmem:[#allocation5 + $0x458] sm:$0xff]
    %v143 = vld [vmem:[#allocation5 + $0x480] sm:$0xff]
    %v144 = vld [vmem:[#allocation5 + $0x488] sm:$0xff]
    %v145 = vld [vmem:[#allocation5 + $0x4b0] sm:$0xff]
    %v146 = vld [vmem:[#allocation5 + $0x4b8] sm:$0xff]
    %v147 = vld [vmem:[#allocation5 + $0x4e0] sm:$0xff]
    %v148 = vld [vmem:[#allocation5 + $0x4e8] sm:$0xff]
    %v149 = vld [vmem:[#allocation5 + $0x510] sm:$0xff]
    %v150 = vld [vmem:[#allocation5 + $0x518] sm:$0xff]
    %v151 = vld [vmem:[#allocation5 + $0x540] sm:$0xff]
    %v152 = vld [vmem:[#allocation5 + $0x548] sm:$0xff]
    %v153 = vld [vmem:[#allocation5 + $0x570] sm:$0xff]
    %v154 = vld [vmem:[#allocation5 + $0x578] sm:$0xff]
    %v155 = vld [vmem:[#allocation5 + $0x5a0] sm:$0xff]
    %v156 = vld [vmem:[#allocation5 + $0x5a8] sm:$0xff]
    %v157 = vld [vmem:[#allocation5 + $0x5d0] sm:$0xff]
    %v158 = vld [vmem:[#allocation5 + $0x5d8] sm:$0xff]
    %v159 = vld [vmem:[#allocation5 + $0x600] sm:$0xff]
    %v160 = vld [vmem:[#allocation5 + $0x608] sm:$0xff]
    %v161 = vld [vmem:[#allocation5 + $0x630] sm:$0xff]
    %v162 = vld [vmem:[#allocation5 + $0x638] sm:$0xff]
    %v163 = vld [vmem:[#allocation5 + $0x660] sm:$0xff]
    %v164 = vld [vmem:[#allocation5 + $0x668] sm:$0xff]
    %v165 = vld [vmem:[#allocation5 + $0x690] sm:$0xff]
    %v166 = vld [vmem:[#allocation5 + $0x698] sm:$0xff]
    %v167 = vld [vmem:[#allocation5 + $0x6c0] sm:$0xff]
    %v168 = vld [vmem:[#allocation5 + $0x6c8] sm:$0xff]
    %v169 = vld [vmem:[#allocation5 + $0x6f0] sm:$0xff]
    %v170 = vld [vmem:[#allocation5 + $0x6f8] sm:$0xff]
    %v171 = vld [vmem:[#allocation5 + $0x720] sm:$0xff]
    %v172 = vld [vmem:[#allocation5 + $0x728] sm:$0xff]
    %v173 = vld [vmem:[#allocation5 + $0x750] sm:$0xff]
    %v174 = vld [vmem:[#allocation5 + $0x758] sm:$0xff]
    %v175 = vld [vmem:[#allocation5 + $0x780] sm:$0xff]
    %v176 = vld [vmem:[#allocation5 + $0x788] sm:$0xff]
    %v177 = vld [vmem:[#allocation5 + $0x7b0] sm:$0xff]
    %v178 = vld [vmem:[#allocation5 + $0x7b8] sm:$0xff]
    %v179 = vld [vmem:[#allocation5 + $0x7e0] sm:$0xff]
    %v180 = vld [vmem:[#allocation5 + $0x7e8] sm:$0xff]
    %v181 = vld [vmem:[#allocation5 + $0x810] sm:$0xff]
    %v182 = vld [vmem:[#allocation5 + $0x818] sm:$0xff]
    %v183 = vld [vmem:[#allocation5 + $0x840] sm:$0xff]
    %v184 = vld [vmem:[#allocation5 + $0x848] sm:$0xff]
    %v185 = vld [vmem:[#allocation5 + $0x870] sm:$0xff]
    %v186 = vld [vmem:[#allocation5 + $0x878] sm:$0xff]
    %v187 = vld [vmem:[#allocation5 + $0x8a0] sm:$0xff]
    %v188 = vld [vmem:[#allocation5 + $0x8a8] sm:$0xff]
    %v189 = vld [vmem:[#allocation5 + $0x8d0] sm:$0xff]
    %v190 = vld [vmem:[#allocation5 + $0x8d8] sm:$0xff]
    %v191 = vld [vmem:[#allocation7] sm:$0xf]
    %v193 = vlaneseq
    %v194 = vshrl.u32 %v193, 7
    %v195 = vsub.s32 0, %v194
    %v196 = vrot.slane %v191, %v195
    %v197 = vlaneseq
    %v198 = vshrl.u32 %v197, 7
    %v199 = vsub.s32 1, %v198
    %v200 = vrot.slane %v191, %v199
    %v201 = vlaneseq
    %v202 = vshrl.u32 %v201, 7
    %v203 = vsub.s32 2, %v202
    %v204 = vrot.slane %v191, %v203
    %v205 = vlaneseq
    %v206 = vshrl.u32 %v205, 7
    %v207 = vsub.s32 3, %v206
    %v208 = vrot.slane %v191, %v207
    %v309 = vunpack.c.l.b16 %v95
    %v310 = vunpack.c.h.b16 %v95
    %v311 = vunpack.c.l.b16 %v96
    %v312 = vunpack.c.h.b16 %v96
    %v313 = vunpack.c.l.b16 %v97
    %v314 = vunpack.c.h.b16 %v97
    %v315 = vunpack.c.l.b16 %v98
    %v316 = vunpack.c.h.b16 %v98
    %v317 = vunpack.c.l.b16 %v99
    %v318 = vunpack.c.h.b16 %v99
    %v319 = vunpack.c.l.b16 %v100
    %v320 = vunpack.c.h.b16 %v100
    %v321 = vunpack.c.l.b16 %v101
    %v322 = vunpack.c.h.b16 %v101
    %v323 = vunpack.c.l.b16 %v102
    %v324 = vunpack.c.h.b16 %v102
    %v325 = vunpack.c.l.b16 %v103
    %v326 = vunpack.c.h.b16 %v103
    %v327 = vunpack.c.l.b16 %v104
    %v328 = vunpack.c.h.b16 %v104
    %v329 = vunpack.c.l.b16 %v105
    %v330 = vunpack.c.h.b16 %v105
    %v331 = vunpack.c.l.b16 %v106
    %v332 = vunpack.c.h.b16 %v106
    %v333 = vunpack.c.l.b16 %v107
    %v334 = vunpack.c.h.b16 %v107
    %v335 = vunpack.c.l.b16 %v108
    %v336 = vunpack.c.h.b16 %v108
    %v337 = vunpack.c.l.b16 %v109
    %v338 = vunpack.c.h.b16 %v109
    %v339 = vunpack.c.l.b16 %v110
    %v340 = vunpack.c.h.b16 %v110
    %v341 = vunpack.c.l.b16 %v111
    %v342 = vunpack.c.h.b16 %v111
    %v343 = vunpack.c.l.b16 %v112
    %v344 = vunpack.c.h.b16 %v112
    %v345 = vunpack.c.l.b16 %v113
    %v346 = vunpack.c.h.b16 %v113
    %v347 = vunpack.c.l.b16 %v114
    %v348 = vunpack.c.h.b16 %v114
    %v349 = vunpack.c.l.b16 %v115
    %v350 = vunpack.c.h.b16 %v115
    %v351 = vunpack.c.l.b16 %v116
    %v352 = vunpack.c.h.b16 %v116
    %v353 = vunpack.c.l.b16 %v117
    %v354 = vunpack.c.h.b16 %v117
    %v355 = vunpack.c.l.b16 %v118
    %v356 = vunpack.c.h.b16 %v118
    %v357 = vunpack.c.l.b16 %v119
    %v358 = vunpack.c.h.b16 %v119
    %v359 = vunpack.c.l.b16 %v120
    %v360 = vunpack.c.h.b16 %v120
    %v361 = vunpack.c.l.b16 %v121
    %v362 = vunpack.c.h.b16 %v121
    %v363 = vunpack.c.l.b16 %v122
    %v364 = vunpack.c.h.b16 %v122
    %v365 = vunpack.c.l.b16 %v123
    %v366 = vunpack.c.h.b16 %v123
    %v367 = vunpack.c.l.b16 %v124
    %v368 = vunpack.c.h.b16 %v124
    %v369 = vunpack.c.l.b16 %v125
    %v370 = vunpack.c.h.b16 %v125
    %v371 = vunpack.c.l.b16 %v126
    %v372 = vunpack.c.h.b16 %v126
    %v373 = vunpack.c.l.b16 %v127
    %v374 = vunpack.c.h.b16 %v127
    %v375 = vunpack.c.l.b16 %v128
    %v376 = vunpack.c.h.b16 %v128
    %v377 = vunpack.c.l.b16 %v129
    %v378 = vunpack.c.h.b16 %v129
    %v379 = vunpack.c.l.b16 %v130
    %v380 = vunpack.c.h.b16 %v130
    %v381 = vunpack.c.l.b16 %v131
    %v382 = vunpack.c.h.b16 %v131
    %v383 = vunpack.c.l.b16 %v132
    %v384 = vunpack.c.h.b16 %v132
    %v385 = vunpack.c.l.b16 %v133
    %v386 = vunpack.c.h.b16 %v133
    %v387 = vunpack.c.l.b16 %v134
    %v388 = vunpack.c.h.b16 %v134
    %v389 = vunpack.c.l.b16 %v135
    %v390 = vunpack.c.h.b16 %v135
    %v391 = vunpack.c.l.b16 %v136
    %v392 = vunpack.c.h.b16 %v136
    %v393 = vunpack.c.l.b16 %v137
    %v394 = vunpack.c.h.b16 %v137
    %v395 = vunpack.c.l.b16 %v138
    %v396 = vunpack.c.h.b16 %v138
    %v397 = vunpack.c.l.b16 %v139
    %v398 = vunpack.c.h.b16 %v139
    %v399 = vunpack.c.l.b16 %v140
    %v400 = vunpack.c.h.b16 %v140
    %v401 = vunpack.c.l.b16 %v141
    %v402 = vunpack.c.h.b16 %v141
    %v403 = vunpack.c.l.b16 %v142
    %v404 = vunpack.c.h.b16 %v142
    %v405 = vunpack.c.l.b16 %v143
    %v406 = vunpack.c.h.b16 %v143
    %v407 = vunpack.c.l.b16 %v144
    %v408 = vunpack.c.h.b16 %v144
    %v409 = vunpack.c.l.b16 %v145
    %v410 = vunpack.c.h.b16 %v145
    %v411 = vunpack.c.l.b16 %v146
    %v412 = vunpack.c.h.b16 %v146
    %v413 = vunpack.c.l.b16 %v147
    %v414 = vunpack.c.h.b16 %v147
    %v415 = vunpack.c.l.b16 %v148
    %v416 = vunpack.c.h.b16 %v148
    %v417 = vunpack.c.l.b16 %v149
    %v418 = vunpack.c.h.b16 %v149
    %v419 = vunpack.c.l.b16 %v150
    %v420 = vunpack.c.h.b16 %v150
    %v421 = vunpack.c.l.b16 %v151
    %v422 = vunpack.c.h.b16 %v151
    %v423 = vunpack.c.l.b16 %v152
    %v424 = vunpack.c.h.b16 %v152
    %v425 = vunpack.c.l.b16 %v153
    %v426 = vunpack.c.h.b16 %v153
    %v427 = vunpack.c.l.b16 %v154
    %v428 = vunpack.c.h.b16 %v154
    %v429 = vunpack.c.l.b16 %v155
    %v430 = vunpack.c.h.b16 %v155
    %v431 = vunpack.c.l.b16 %v156
    %v432 = vunpack.c.h.b16 %v156
    %v433 = vunpack.c.l.b16 %v157
    %v434 = vunpack.c.h.b16 %v157
    %v435 = vunpack.c.l.b16 %v158
    %v436 = vunpack.c.h.b16 %v158
    %v437 = vunpack.c.l.b16 %v159
    %v438 = vunpack.c.h.b16 %v159
    %v439 = vunpack.c.l.b16 %v160
    %v440 = vunpack.c.h.b16 %v160
    %v441 = vunpack.c.l.b16 %v161
    %v442 = vunpack.c.h.b16 %v161
    %v443 = vunpack.c.l.b16 %v162
    %v444 = vunpack.c.h.b16 %v162
    %v445 = vunpack.c.l.b16 %v163
    %v446 = vunpack.c.h.b16 %v163
    %v447 = vunpack.c.l.b16 %v164
    %v448 = vunpack.c.h.b16 %v164
    %v449 = vunpack.c.l.b16 %v165
    %v450 = vunpack.c.h.b16 %v165
    %v451 = vunpack.c.l.b16 %v166
    %v452 = vunpack.c.h.b16 %v166
    %v453 = vunpack.c.l.b16 %v167
    %v454 = vunpack.c.h.b16 %v167
    %v455 = vunpack.c.l.b16 %v168
    %v456 = vunpack.c.h.b16 %v168
    %v457 = vunpack.c.l.b16 %v169
    %v458 = vunpack.c.h.b16 %v169
    %v459 = vunpack.c.l.b16 %v170
    %v460 = vunpack.c.h.b16 %v170
    %v461 = vunpack.c.l.b16 %v171
    %v462 = vunpack.c.h.b16 %v171
    %v463 = vunpack.c.l.b16 %v172
    %v464 = vunpack.c.h.b16 %v172
    %v465 = vunpack.c.l.b16 %v173
    %v466 = vunpack.c.h.b16 %v173
    %v467 = vunpack.c.l.b16 %v174
    %v468 = vunpack.c.h.b16 %v174
    %v469 = vunpack.c.l.b16 %v175
    %v470 = vunpack.c.h.b16 %v175
    %v471 = vunpack.c.l.b16 %v176
    %v472 = vunpack.c.h.b16 %v176
    %v473 = vunpack.c.l.b16 %v177
    %v474 = vunpack.c.h.b16 %v177
    %v475 = vunpack.c.l.b16 %v178
    %v476 = vunpack.c.h.b16 %v178
    %v477 = vunpack.c.l.b16 %v179
    %v478 = vunpack.c.h.b16 %v179
    %v479 = vunpack.c.l.b16 %v180
    %v480 = vunpack.c.h.b16 %v180
    %v481 = vunpack.c.l.b16 %v181
    %v482 = vunpack.c.h.b16 %v181
    %v483 = vunpack.c.l.b16 %v182
    %v484 = vunpack.c.h.b16 %v182
    %v485 = vunpack.c.l.b16 %v183
    %v486 = vunpack.c.h.b16 %v183
    %v487 = vunpack.c.l.b16 %v184
    %v488 = vunpack.c.h.b16 %v184
    %v489 = vunpack.c.l.b16 %v185
    %v490 = vunpack.c.h.b16 %v185
    %v491 = vunpack.c.l.b16 %v186
    %v492 = vunpack.c.h.b16 %v186
    %v493 = vunpack.c.l.b16 %v187
    %v494 = vunpack.c.h.b16 %v187
    %v495 = vunpack.c.l.b16 %v188
    %v496 = vunpack.c.h.b16 %v188
    %v497 = vunpack.c.l.b16 %v189
    %v498 = vunpack.c.h.b16 %v189
    %v499 = vunpack.c.l.b16 %v190
    %v500 = vunpack.c.h.b16 %v190
    %v501 = vpack.c.b16 %v313, %v309
    %v502 = vpack.c.b16 %v314, %v310
    %v503 = vpack.c.b16 %v315, %v311
    %v504 = vpack.c.b16 %v316, %v312
    %v505 = vpack.c.b16 %v321, %v317
    %v506 = vpack.c.b16 %v322, %v318
    %v507 = vpack.c.b16 %v323, %v319
    %v508 = vpack.c.b16 %v324, %v320
    %v509 = vpack.c.b16 %v329, %v325
    %v510 = vpack.c.b16 %v330, %v326
    %v511 = vpack.c.b16 %v331, %v327
    %v512 = vpack.c.b16 %v332, %v328
    %v513 = vpack.c.b16 %v337, %v333
    %v514 = vpack.c.b16 %v338, %v334
    %v515 = vpack.c.b16 %v339, %v335
    %v516 = vpack.c.b16 %v340, %v336
    %v517 = vpack.c.b16 %v345, %v341
    %v518 = vpack.c.b16 %v346, %v342
    %v519 = vpack.c.b16 %v347, %v343
    %v520 = vpack.c.b16 %v348, %v344
    %v521 = vpack.c.b16 %v353, %v349
    %v522 = vpack.c.b16 %v354, %v350
    %v523 = vpack.c.b16 %v355, %v351
    %v524 = vpack.c.b16 %v356, %v352
    %v525 = vpack.c.b16 %v361, %v357
    %v526 = vpack.c.b16 %v362, %v358
    %v527 = vpack.c.b16 %v363, %v359
    %v528 = vpack.c.b16 %v364, %v360
    %v529 = vpack.c.b16 %v369, %v365
    %v530 = vpack.c.b16 %v370, %v366
    %v531 = vpack.c.b16 %v371, %v367
    %v532 = vpack.c.b16 %v372, %v368
    %v533 = vpack.c.b16 %v377, %v373
    %v534 = vpack.c.b16 %v378, %v374
    %v535 = vpack.c.b16 %v379, %v375
    %v536 = vpack.c.b16 %v380, %v376
    %v537 = vpack.c.b16 %v385, %v381
    %v538 = vpack.c.b16 %v386, %v382
    %v539 = vpack.c.b16 %v387, %v383
    %v540 = vpack.c.b16 %v388, %v384
    %v541 = vpack.c.b16 %v393, %v389
    %v542 = vpack.c.b16 %v394, %v390
    %v543 = vpack.c.b16 %v395, %v391
    %v544 = vpack.c.b16 %v396, %v392
    %v545 = vpack.c.b16 %v401, %v397
    %v546 = vpack.c.b16 %v402, %v398
    %v547 = vpack.c.b16 %v403, %v399
    %v548 = vpack.c.b16 %v404, %v400
    %v549 = vpack.c.b16 %v409, %v405
    %v550 = vpack.c.b16 %v410, %v406
    %v551 = vpack.c.b16 %v411, %v407
    %v552 = vpack.c.b16 %v412, %v408
    %v553 = vpack.c.b16 %v417, %v413
    %v554 = vpack.c.b16 %v418, %v414
    %v555 = vpack.c.b16 %v419, %v415
    %v556 = vpack.c.b16 %v420, %v416
    %v557 = vpack.c.b16 %v425, %v421
    %v558 = vpack.c.b16 %v426, %v422
    %v559 = vpack.c.b16 %v427, %v423
    %v560 = vpack.c.b16 %v428, %v424
    %v561 = vpack.c.b16 %v433, %v429
    %v562 = vpack.c.b16 %v434, %v430
    %v563 = vpack.c.b16 %v435, %v431
    %v564 = vpack.c.b16 %v436, %v432
    %v565 = vpack.c.b16 %v441, %v437
    %v566 = vpack.c.b16 %v442, %v438
    %v567 = vpack.c.b16 %v443, %v439
    %v568 = vpack.c.b16 %v444, %v440
    %v569 = vpack.c.b16 %v449, %v445
    %v570 = vpack.c.b16 %v450, %v446
    %v571 = vpack.c.b16 %v451, %v447
    %v572 = vpack.c.b16 %v452, %v448
    %v573 = vpack.c.b16 %v457, %v453
    %v574 = vpack.c.b16 %v458, %v454
    %v575 = vpack.c.b16 %v459, %v455
    %v576 = vpack.c.b16 %v460, %v456
    %v577 = vpack.c.b16 %v465, %v461
    %v578 = vpack.c.b16 %v466, %v462
    %v579 = vpack.c.b16 %v467, %v463
    %v580 = vpack.c.b16 %v468, %v464
    %v581 = vpack.c.b16 %v473, %v469
    %v582 = vpack.c.b16 %v474, %v470
    %v583 = vpack.c.b16 %v475, %v471
    %v584 = vpack.c.b16 %v476, %v472
    %v585 = vpack.c.b16 %v481, %v477
    %v586 = vpack.c.b16 %v482, %v478
    %v587 = vpack.c.b16 %v483, %v479
    %v588 = vpack.c.b16 %v484, %v480
    %v589 = vpack.c.b16 %v489, %v485
    %v590 = vpack.c.b16 %v490, %v486
    %v591 = vpack.c.b16 %v491, %v487
    %v592 = vpack.c.b16 %v492, %v488
    %v593 = vpack.c.b16 %v497, %v493
    %v594 = vpack.c.b16 %v498, %v494
    %v595 = vpack.c.b16 %v499, %v495
    %v596 = vpack.c.b16 %v500, %v496
    %693 = vmatprep.subr.bf16.mxu0 %v502
    %694 = vmatpush1.bf16.msra.mxu0 %v501
    %695 = vmatprep.subr.bf16.mxu0 %v506
    %696 = vmatpush1.bf16.msra.mxu0 %v505
    %697 = vmatprep.subr.bf16.mxu0 %v510
    %698 = vmatpush1.bf16.msra.mxu0 %v509
    %699 = vmatprep.subr.bf16.mxu0 %v514
    %700 = vmatpush1.bf16.msra.mxu0 %v513
    %701 = vmatprep.subr.bf16.mxu0 %v518
    %702 = vmatpush1.bf16.msra.mxu0 %v517
    %703 = vmatprep.subr.bf16.mxu0 %v522
    %704 = vmatpush1.bf16.msra.mxu0 %v521
    %705 = vmatprep.subr.bf16.mxu0 %v526
    %706 = vmatpush1.bf16.msra.mxu0 %v525
    %707 = vmatprep.subr.bf16.mxu0 %v530
    %708 = vmatpush1.bf16.msra.mxu0 %v529
    %709 = vmatprep.subr.bf16.mxu0 %v534
    %710 = vmatpush1.bf16.msra.mxu0 %v533
    %711 = vmatprep.subr.bf16.mxu0 %v538
    %712 = vmatpush1.bf16.msra.mxu0 %v537
    %713 = vmatprep.subr.bf16.mxu0 %v542
    %714 = vmatpush1.bf16.msra.mxu0 %v541
    %715 = vmatprep.subr.bf16.mxu0 %v546
    %716 = vmatpush1.bf16.msra.mxu0 %v545
    %717 = vmatprep.subr.bf16.mxu0 %v550
    %718 = vmatpush1.bf16.msra.mxu0 %v549
    %719 = vmatprep.subr.bf16.mxu0 %v554
    %720 = vmatpush1.bf16.msra.mxu0 %v553
    %721 = vmatprep.subr.bf16.mxu0 %v558
    %722 = vmatpush1.bf16.msra.mxu0 %v557
    %723 = vmatprep.subr.bf16.mxu0 %v562
    %724 = vmatpush1.bf16.msra.mxu0 %v561
    %725 = vmatprep.mubr.bf16.mxu0 %v93
    %726 = vmatmul.mubr.bf16.gmra.mrb[0].mxu0 %v92
    %v727 = vpop.f32.mrb[0].mxu0
    %v728 = vadd.f32 %v196, %v727
    %v729 = vpop.f32.mrb[0].mxu0
    %v730 = vadd.f32 %v200, %v729
    %v731 = vpop.f32.mrb[0].mxu0
    %v732 = vadd.f32 %v196, %v731
    %v733 = vpop.f32.mrb[0].mxu0
    %v734 = vadd.f32 %v200, %v733
    %735 = vdwg.mxu0
    %736 = vmatprep.subr.bf16.mxu0 %v566
    %737 = vmatpush1.bf16.msra.mxu0 %v565
    %738 = vmatprep.subr.bf16.mxu0 %v570
    %739 = vmatpush1.bf16.msra.mxu0 %v569
    %740 = vmatprep.subr.bf16.mxu0 %v574
    %741 = vmatpush1.bf16.msra.mxu0 %v573
    %742 = vmatprep.subr.bf16.mxu0 %v578
    %743 = vmatpush1.bf16.msra.mxu0 %v577
    %744 = vmatprep.subr.bf16.mxu0 %v582
    %745 = vmatpush1.bf16.msra.mxu0 %v581
    %746 = vmatprep.subr.bf16.mxu0 %v586
    %747 = vmatpush1.bf16.msra.mxu0 %v585
    %748 = vmatprep.subr.bf16.mxu0 %v590
    %749 = vmatpush1.bf16.msra.mxu0 %v589
    %750 = vmatprep.subr.bf16.mxu0 %v594
    %751 = vmatpush1.bf16.msra.mxu0 %v593
    %752 = vmatprep.subr.bf16.mxu0 0
    %753 = vmatpush1.bf16.msra.mxu0 0
    %754 = vmatprep.subr.bf16.mxu0 0
    %755 = vmatpush1.bf16.msra.mxu0 0
    %756 = vmatprep.subr.bf16.mxu0 0
    %757 = vmatpush1.bf16.msra.mxu0 0
    %758 = vmatprep.subr.bf16.mxu0 0
    %759 = vmatpush1.bf16.msra.mxu0 0
    %760 = vmatprep.subr.bf16.mxu0 0
    %761 = vmatpush1.bf16.msra.mxu0 0
    %762 = vmatprep.subr.bf16.mxu0 0
    %763 = vmatpush1.bf16.msra.mxu0 0
    %764 = vmatprep.subr.bf16.mxu0 0
    %765 = vmatpush1.bf16.msra.mxu0 0
    %766 = vmatprep.subr.bf16.mxu0 0
    %767 = vmatpush1.bf16.msra.mxu0 0
    %768 = vmatprep.mubr.bf16.mxu0 0
    %769 = vmatmul.mubr.bf16.gmra.mrb[0].mxu0 %v94
    %v770 = vpop.f32.mrb[0].mxu0
    %v771 = vadd.f32 %v728, %v770
    %v772 = vpop.f32.mrb[0].mxu0
    %v773 = vadd.f32 %v730, %v772
    %v774 = vpop.f32.mrb[0].mxu0
    %v775 = vadd.f32 %v732, %v774
    %v776 = vpop.f32.mrb[0].mxu0
    %v777 = vadd.f32 %v734, %v776
    %778 = vdwg.mxu0
    %779 = vmatprep.subr.bf16.mxu0 %v504
    %780 = vmatpush1.bf16.msra.mxu0 %v503
    %781 = vmatprep.subr.bf16.mxu0 %v508
    %782 = vmatpush1.bf16.msra.mxu0 %v507
    %783 = vmatprep.subr.bf16.mxu0 %v512
    %784 = vmatpush1.bf16.msra.mxu0 %v511
    %785 = vmatprep.subr.bf16.mxu0 %v516
    %786 = vmatpush1.bf16.msra.mxu0 %v515
    %787 = vmatprep.subr.bf16.mxu0 %v520
    %788 = vmatpush1.bf16.msra.mxu0 %v519
    %789 = vmatprep.subr.bf16.mxu0 %v524
    %790 = vmatpush1.bf16.msra.mxu0 %v523
    %791 = vmatprep.subr.bf16.mxu0 %v528
    %792 = vmatpush1.bf16.msra.mxu0 %v527
    %793 = vmatprep.subr.bf16.mxu0 %v532
    %794 = vmatpush1.bf16.msra.mxu0 %v531
    %795 = vmatprep.subr.bf16.mxu0 %v536
    %796 = vmatpush1.bf16.msra.mxu0 %v535
    %797 = vmatprep.subr.bf16.mxu0 %v540
    %798 = vmatpush1.bf16.msra.mxu0 %v539
    %799 = vmatprep.subr.bf16.mxu0 %v544
    %800 = vmatpush1.bf16.msra.mxu0 %v543
    %801 = vmatprep.subr.bf16.mxu0 %v548
    %802 = vmatpush1.bf16.msra.mxu0 %v547
    %803 = vmatprep.subr.bf16.mxu0 %v552
    %804 = vmatpush1.bf16.msra.mxu0 %v551
    %805 = vmatprep.subr.bf16.mxu0 %v556
    %806 = vmatpush1.bf16.msra.mxu0 %v555
    %807 = vmatprep.subr.bf16.mxu0 %v560
    %808 = vmatpush1.bf16.msra.mxu0 %v559
    %809 = vmatprep.subr.bf16.mxu0 %v564
    %810 = vmatpush1.bf16.msra.mxu0 %v563
    %811 = vmatprep.mubr.bf16.mxu0 %v93
    %812 = vmatmul.mubr.bf16.gmra.mrb[0].mxu0 %v92
    %v813 = vpop.f32.mrb[0].mxu0
    %v814 = vadd.f32 %v204, %v813
    %v815 = vpop.f32.mrb[0].mxu0
    %v816 = vadd.f32 %v208, %v815
    %v817 = vpop.f32.mrb[0].mxu0
    %v818 = vadd.f32 %v204, %v817
    %v819 = vpop.f32.mrb[0].mxu0
    %v820 = vadd.f32 %v208, %v819
    %821 = vdwg.mxu0
    %822 = vmatprep.subr.bf16.mxu0 %v568
    %823 = vmatpush1.bf16.msra.mxu0 %v567
    %824 = vmatprep.subr.bf16.mxu0 %v572
    %825 = vmatpush1.bf16.msra.mxu0 %v571
    %826 = vmatprep.subr.bf16.mxu0 %v576
    %827 = vmatpush1.bf16.msra.mxu0 %v575
    %828 = vmatprep.subr.bf16.mxu0 %v580
    %829 = vmatpush1.bf16.msra.mxu0 %v579
    %830 = vmatprep.subr.bf16.mxu0 %v584
    %831 = vmatpush1.bf16.msra.mxu0 %v583
    %832 = vmatprep.subr.bf16.mxu0 %v588
    %833 = vmatpush1.bf16.msra.mxu0 %v587
    %834 = vmatprep.subr.bf16.mxu0 %v592
    %835 = vmatpush1.bf16.msra.mxu0 %v591
    %836 = vmatprep.subr.bf16.mxu0 %v596
    %837 = vmatpush1.bf16.msra.mxu0 %v595
    %838 = vmatprep.subr.bf16.mxu0 0
    %839 = vmatpush1.bf16.msra.mxu0 0
    %840 = vmatprep.subr.bf16.mxu0 0
    %841 = vmatpush1.bf16.msra.mxu0 0
    %842 = vmatprep.subr.bf16.mxu0 0
    %843 = vmatpush1.bf16.msra.mxu0 0
    %844 = vmatprep.subr.bf16.mxu0 0
    %845 = vmatpush1.bf16.msra.mxu0 0
    %846 = vmatprep.subr.bf16.mxu0 0
    %847 = vmatpush1.bf16.msra.mxu0 0
    %848 = vmatprep.subr.bf16.mxu0 0
    %849 = vmatpush1.bf16.msra.mxu0 0
    %850 = vmatprep.subr.bf16.mxu0 0
    %851 = vmatpush1.bf16.msra.mxu0 0
    %852 = vmatprep.subr.bf16.mxu0 0
    %853 = vmatpush1.bf16.msra.mxu0 0
    %854 = vmatprep.mubr.bf16.mxu0 0
    %855 = vmatmul.mubr.bf16.gmra.mrb[0].mxu0 %v94
    %v856 = vpop.f32.mrb[0].mxu0
    %v857 = vadd.f32 %v814, %v856
    %v858 = vpop.f32.mrb[0].mxu0
    %v859 = vadd.f32 %v816, %v858
    %v860 = vpop.f32.mrb[0].mxu0
    %v861 = vadd.f32 %v818, %v860
    %v862 = vpop.f32.mrb[0].mxu0
    %v863 = vadd.f32 %v820, %v862
    %864 = vdwg.mxu0
    %v865 = vmax.f32 %v771, 0.0
    %v866 = vmax.f32 %v773, 0.0
    %v867 = vmax.f32 %v857, 0.0
    %v868 = vmax.f32 %v859, 0.0
    %v869 = vmax.f32 %v775, 0.0
    %v870 = vmax.f32 %v777, 0.0
    %v871 = vmax.f32 %v861, 0.0
    %v872 = vmax.f32 %v863, 0.0
    %v873 = vpack.c.bf16 %v869, %v865
    %v874 = vpack.c.bf16 %v870, %v866
    %v875 = vpack.c.bf16 %v871, %v867
    %v876 = vpack.c.bf16 %v872, %v868
    %v877 = vld [vmem:[#allocation8] sm:$0xff]
    %v878 = vld [vmem:[#allocation8 + $0x8] sm:$0xf]
    %v879 = vld [vmem:[#allocation8 + $0xc] sm:$0xff]
    %v880 = vld [vmem:[#allocation8 + $0x14] sm:$0xf]
    %v881 = vld [vmem:[#allocation8 + $0x18] sm:$0xff]
    %v882 = vld [vmem:[#allocation8 + $0x20] sm:$0xf]
    %v883 = vld [vmem:[#allocation8 + $0x24] sm:$0xff]
    %v884 = vld [vmem:[#allocation8 + $0x2c] sm:$0xf]
    %v885 = vld [vmem:[#allocation8 + $0x30] sm:$0xff]
    %v886 = vld [vmem:[#allocation8 + $0x38] sm:$0xf]
    %v887 = vld [vmem:[#allocation8 + $0x3c] sm:$0xff]
    %v888 = vld [vmem:[#allocation8 + $0x44] sm:$0xf]
    %v889 = vld [vmem:[#allocation8 + $0x48] sm:$0xff]
    %v890 = vld [vmem:[#allocation8 + $0x50] sm:$0xf]
    %v891 = vld [vmem:[#allocation8 + $0x54] sm:$0xff]
    %v892 = vld [vmem:[#allocation8 + $0x5c] sm:$0xf]
    %v893 = vld [vmem:[#allocation8 + $0x60] sm:$0xff]
    %v894 = vld [vmem:[#allocation8 + $0x68] sm:$0xf]
    %v895 = vld [vmem:[#allocation8 + $0x6c] sm:$0xff]
    %v896 = vld [vmem:[#allocation8 + $0x74] sm:$0xf]
    %v897 = vld [vmem:[#allocation8 + $0x78] sm:$0xff]
    %v898 = vld [vmem:[#allocation8 + $0x80] sm:$0xf]
    %v899 = vld [vmem:[#allocation8 + $0x84] sm:$0xff]
    %v900 = vld [vmem:[#allocation8 + $0x8c] sm:$0xf]
    %v901 = vld [vmem:[#allocation8 + $0x90] sm:$0xff]
    %v902 = vld [vmem:[#allocation8 + $0x98] sm:$0xf]
    %v903 = vld [vmem:[#allocation8 + $0x9c] sm:$0xff]
    %v904 = vld [vmem:[#allocation8 + $0xa4] sm:$0xf]
    %v905 = vld [vmem:[#allocation8 + $0xa8] sm:$0xff]
    %v906 = vld [vmem:[#allocation8 + $0xb0] sm:$0xf]
    %v907 = vld [vmem:[#allocation8 + $0xb4] sm:$0xff]
    %v908 = vld [vmem:[#allocation8 + $0xbc] sm:$0xf]
    %v909 = vld [vmem:[#allocation8 + $0xc0] sm:$0xff]
    %v910 = vld [vmem:[#allocation8 + $0xc8] sm:$0xf]
    %v911 = vld [vmem:[#allocation8 + $0xcc] sm:$0xff]
    %v912 = vld [vmem:[#allocation8 + $0xd4] sm:$0xf]
    %v913 = vld [vmem:[#allocation8 + $0xd8] sm:$0xff]
    %v914 = vld [vmem:[#allocation8 + $0xe0] sm:$0xf]
    %v915 = vld [vmem:[#allocation8 + $0xe4] sm:$0xff]
    %v916 = vld [vmem:[#allocation8 + $0xec] sm:$0xf]
    %v917 = vld [vmem:[#allocation8 + $0xf0] sm:$0xff]
    %v918 = vld [vmem:[#allocation8 + $0xf8] sm:$0xf]
    %v919 = vld [vmem:[#allocation8 + $0xfc] sm:$0xff]
    %v920 = vld [vmem:[#allocation8 + $0x104] sm:$0xf]
    %v921 = vld [vmem:[#allocation8 + $0x108] sm:$0xff]
    %v922 = vld [vmem:[#allocation8 + $0x110] sm:$0xf]
    %v923 = vld [vmem:[#allocation8 + $0x114] sm:$0xff]
    %v924 = vld [vmem:[#allocation8 + $0x11c] sm:$0xf]
    %v925 = vld [vmem:[#allocation8 + $0x120] sm:$0xff]
    %v926 = vld [vmem:[#allocation8 + $0x128] sm:$0xf]
    %v927 = vld [vmem:[#allocation8 + $0x12c] sm:$0xff]
    %v928 = vld [vmem:[#allocation8 + $0x134] sm:$0xf]
    %v929 = vld [vmem:[#allocation8 + $0x138] sm:$0xff]
    %v930 = vld [vmem:[#allocation8 + $0x140] sm:$0xf]
    %v931 = vld [vmem:[#allocation8 + $0x144] sm:$0xff]
    %v932 = vld [vmem:[#allocation8 + $0x14c] sm:$0xf]
    %v933 = vld [vmem:[#allocation8 + $0x150] sm:$0xff]
    %v934 = vld [vmem:[#allocation8 + $0x158] sm:$0xf]
    %v935 = vld [vmem:[#allocation8 + $0x15c] sm:$0xff]
    %v936 = vld [vmem:[#allocation8 + $0x164] sm:$0xf]
    %v937 = vld [vmem:[#allocation8 + $0x168] sm:$0xff]
    %v938 = vld [vmem:[#allocation8 + $0x170] sm:$0xf]
    %v939 = vld [vmem:[#allocation8 + $0x174] sm:$0xff]
    %v940 = vld [vmem:[#allocation8 + $0x17c] sm:$0xf]
    %v941 = vld [vmem:[#allocation8 + $0x180] sm:$0xff]
    %v942 = vld [vmem:[#allocation8 + $0x188] sm:$0xf]
    %v943 = vld [vmem:[#allocation8 + $0x18c] sm:$0xff]
    %v944 = vld [vmem:[#allocation8 + $0x194] sm:$0xf]
    %v945 = vld [vmem:[#allocation8 + $0x198] sm:$0xff]
    %v946 = vld [vmem:[#allocation8 + $0x1a0] sm:$0xf]
    %v947 = vld [vmem:[#allocation8 + $0x1a4] sm:$0xff]
    %v948 = vld [vmem:[#allocation8 + $0x1ac] sm:$0xf]
    %v949 = vld [vmem:[#allocation8 + $0x1b0] sm:$0xff]
    %v950 = vld [vmem:[#allocation8 + $0x1b8] sm:$0xf]
    %v951 = vld [vmem:[#allocation8 + $0x1bc] sm:$0xff]
    %v952 = vld [vmem:[#allocation8 + $0x1c4] sm:$0xf]
    %v953 = vld [vmem:[#allocation8 + $0x1c8] sm:$0xff]
    %v954 = vld [vmem:[#allocation8 + $0x1d0] sm:$0xf]
    %v955 = vld [vmem:[#allocation8 + $0x1d4] sm:$0xff]
    %v956 = vld [vmem:[#allocation8 + $0x1dc] sm:$0xf]
    %v957 = vld [vmem:[#allocation8 + $0x1e0] sm:$0xff]
    %v958 = vld [vmem:[#allocation8 + $0x1e8] sm:$0xf]
    %v959 = vld [vmem:[#allocation8 + $0x1ec] sm:$0xff]
    %v960 = vld [vmem:[#allocation8 + $0x1f4] sm:$0xf]
    %v961 = vld [vmem:[#allocation8 + $0x1f8] sm:$0xff]
    %v962 = vld [vmem:[#allocation8 + $0x200] sm:$0xf]
    %v963 = vld [vmem:[#allocation8 + $0x204] sm:$0xff]
    %v964 = vld [vmem:[#allocation8 + $0x20c] sm:$0xf]
    %v965 = vld [vmem:[#allocation8 + $0x210] sm:$0xff]
    %v966 = vld [vmem:[#allocation8 + $0x218] sm:$0xf]
    %v967 = vld [vmem:[#allocation8 + $0x21c] sm:$0xff]
    %v968 = vld [vmem:[#allocation8 + $0x224] sm:$0xf]
    %v969 = vld [vmem:[#allocation8 + $0x228] sm:$0xff]
    %v970 = vld [vmem:[#allocation8 + $0x230] sm:$0xf]
    %v971 = vld [vmem:[#allocation8 + $0x234] sm:$0xff]
    %v972 = vld [vmem:[#allocation8 + $0x23c] sm:$0xf]
    %v973 = vld [vmem:[#allocation8 + $0x240] sm:$0xff]
    %v974 = vld [vmem:[#allocation8 + $0x248] sm:$0xf]
    %v975 = vld [vmem:[#allocation8 + $0x24c] sm:$0xff]
    %v976 = vld [vmem:[#allocation8 + $0x254] sm:$0xf]
    %v977 = vld [vmem:[#allocation8 + $0x258] sm:$0xff]
    %v978 = vld [vmem:[#allocation8 + $0x260] sm:$0xf]
    %v979 = vld [vmem:[#allocation8 + $0x264] sm:$0xff]
    %v980 = vld [vmem:[#allocation8 + $0x26c] sm:$0xf]
    %v981 = vld [vmem:[#allocation8 + $0x270] sm:$0xff]
    %v982 = vld [vmem:[#allocation8 + $0x278] sm:$0xf]
    %v983 = vld [vmem:[#allocation8 + $0x27c] sm:$0xff]
    %v984 = vld [vmem:[#allocation8 + $0x284] sm:$0xf]
    %v985 = vld [vmem:[#allocation8 + $0x288] sm:$0xff]
    %v986 = vld [vmem:[#allocation8 + $0x290] sm:$0xf]
    %v987 = vld [vmem:[#allocation8 + $0x294] sm:$0xff]
    %v988 = vld [vmem:[#allocation8 + $0x29c] sm:$0xf]
    %v989 = vld [vmem:[#allocation8 + $0x2a0] sm:$0xff]
    %v990 = vld [vmem:[#allocation8 + $0x2a8] sm:$0xf]
    %v991 = vld [vmem:[#allocation8 + $0x2ac] sm:$0xff]
    %v992 = vld [vmem:[#allocation8 + $0x2b4] sm:$0xf]
    %v993 = vld [vmem:[#allocation8 + $0x2b8] sm:$0xff]
    %v994 = vld [vmem:[#allocation8 + $0x2c0] sm:$0xf]
    %v995 = vld [vmem:[#allocation8 + $0x2c4] sm:$0xff]
    %v996 = vld [vmem:[#allocation8 + $0x2cc] sm:$0xf]
    %v997 = vld [vmem:[#allocation8 + $0x2d0] sm:$0xff]
    %v998 = vld [vmem:[#allocation8 + $0x2d8] sm:$0xf]
    %v999 = vld [vmem:[#allocation8 + $0x2dc] sm:$0xff]
    %v1000 = vld [vmem:[#allocation8 + $0x2e4] sm:$0xf]
    %v1001 = vld [vmem:[#allocation8 + $0x2e8] sm:$0xff]
    %v1002 = vld [vmem:[#allocation8 + $0x2f0] sm:$0xf]
    %v1003 = vld [vmem:[#allocation8 + $0x2f4] sm:$0xff]
    %v1004 = vld [vmem:[#allocation8 + $0x2fc] sm:$0xf]
    %v1005 = vld [vmem:[#allocation5 + $0x10] sm:$0xff]
    %v1006 = vld [vmem:[#allocation5 + $0x18] sm:$0xff]
    %v1007 = vld [vmem:[#allocation5 + $0x40] sm:$0xff]
    %v1008 = vld [vmem:[#allocation5 + $0x48] sm:$0xff]
    %v1009 = vld [vmem:[#allocation5 + $0x70] sm:$0xff]
    %v1010 = vld [vmem:[#allocation5 + $0x78] sm:$0xff]
    %v1011 = vld [vmem:[#allocation5 + $0xa0] sm:$0xff]
    %v1012 = vld [vmem:[#allocation5 + $0xa8] sm:$0xff]
    %v1013 = vld [vmem:[#allocation5 + $0xd0] sm:$0xff]
    %v1014 = vld [vmem:[#allocation5 + $0xd8] sm:$0xff]
    %v1015 = vld [vmem:[#allocation5 + $0x100] sm:$0xff]
    %v1016 = vld [vmem:[#allocation5 + $0x108] sm:$0xff]
    %v1017 = vld [vmem:[#allocation5 + $0x130] sm:$0xff]
    %v1018 = vld [vmem:[#allocation5 + $0x138] sm:$0xff]
    %v1019 = vld [vmem:[#allocation5 + $0x160] sm:$0xff]
    %v1020 = vld [vmem:[#allocation5 + $0x168] sm:$0xff]
    %v1021 = vld [vmem:[#allocation5 + $0x190] sm:$0xff]
    %v1022 = vld [vmem:[#allocation5 + $0x198] sm:$0xff]
    %v1023 = vld [vmem:[#allocation5 + $0x1c0] sm:$0xff]
    %v1024 = vld [vmem:[#allocation5 + $0x1c8] sm:$0xff]
    %v1025 = vld [vmem:[#allocation5 + $0x1f0] sm:$0xff]
    %v1026 = vld [vmem:[#allocation5 + $0x1f8] sm:$0xff]
    %v1027 = vld [vmem:[#allocation5 + $0x220] sm:$0xff]
    %v1028 = vld [vmem:[#allocation5 + $0x228] sm:$0xff]
    %v1029 = vld [vmem:[#allocation5 + $0x250] sm:$0xff]
    %v1030 = vld [vmem:[#allocation5 + $0x258] sm:$0xff]
    %v1031 = vld [vmem:[#allocation5 + $0x280] sm:$0xff]
    %v1032 = vld [vmem:[#allocation5 + $0x288] sm:$0xff]
    %v1033 = vld [vmem:[#allocation5 + $0x2b0] sm:$0xff]
    %v1034 = vld [vmem:[#allocation5 + $0x2b8] sm:$0xff]
    %v1035 = vld [vmem:[#allocation5 + $0x2e0] sm:$0xff]
    %v1036 = vld [vmem:[#allocation5 + $0x2e8] sm:$0xff]
    %v1037 = vld [vmem:[#allocation5 + $0x310] sm:$0xff]
    %v1038 = vld [vmem:[#allocation5 + $0x318] sm:$0xff]
    %v1039 = vld [vmem:[#allocation5 + $0x340] sm:$0xff]
    %v1040 = vld [vmem:[#allocation5 + $0x348] sm:$0xff]
    %v1041 = vld [vmem:[#allocation5 + $0x370] sm:$0xff]
    %v1042 = vld [vmem:[#allocation5 + $0x378] sm:$0xff]
    %v1043 = vld [vmem:[#allocation5 + $0x3a0] sm:$0xff]
    %v1044 = vld [vmem:[#allocation5 + $0x3a8] sm:$0xff]
    %v1045 = vld [vmem:[#allocation5 + $0x3d0] sm:$0xff]
    %v1046 = vld [vmem:[#allocation5 + $0x3d8] sm:$0xff]
    %v1047 = vld [vmem:[#allocation5 + $0x400] sm:$0xff]
    %v1048 = vld [vmem:[#allocation5 + $0x408] sm:$0xff]
    %v1049 = vld [vmem:[#allocation5 + $0x430] sm:$0xff]
    %v1050 = vld [vmem:[#allocation5 + $0x438] sm:$0xff]
    %v1051 = vld [vmem:[#allocation5 + $0x460] sm:$0xff]
    %v1052 = vld [vmem:[#allocation5 + $0x468] sm:$0xff]
    %v1053 = vld [vmem:[#allocation5 + $0x490] sm:$0xff]
    %v1054 = vld [vmem:[#allocation5 + $0x498] sm:$0xff]
    %v1055 = vld [vmem:[#allocation5 + $0x4c0] sm:$0xff]
    %v1056 = vld [vmem:[#allocation5 + $0x4c8] sm:$0xff]
    %v1057 = vld [vmem:[#allocation5 + $0x4f0] sm:$0xff]
    %v1058 = vld [vmem:[#allocation5 + $0x4f8] sm:$0xff]
    %v1059 = vld [vmem:[#allocation5 + $0x520] sm:$0xff]
    %v1060 = vld [vmem:[#allocation5 + $0x528] sm:$0xff]
    %v1061 = vld [vmem:[#allocation5 + $0x550] sm:$0xff]
    %v1062 = vld [vmem:[#allocation5 + $0x558] sm:$0xff]
    %v1063 = vld [vmem:[#allocation5 + $0x580] sm:$0xff]
    %v1064 = vld [vmem:[#allocation5 + $0x588] sm:$0xff]
    %v1065 = vld [vmem:[#allocation5 + $0x5b0] sm:$0xff]
    %v1066 = vld [vmem:[#allocation5 + $0x5b8] sm:$0xff]
    %v1067 = vld [vmem:[#allocation5 + $0x5e0] sm:$0xff]
    %v1068 = vld [vmem:[#allocation5 + $0x5e8] sm:$0xff]
    %v1069 = vld [vmem:[#allocation5 + $0x610] sm:$0xff]
    %v1070 = vld [vmem:[#allocation5 + $0x618] sm:$0xff]
    %v1071 = vld [vmem:[#allocation5 + $0x640] sm:$0xff]
    %v1072 = vld [vmem:[#allocation5 + $0x648] sm:$0xff]
    %v1073 = vld [vmem:[#allocation5 + $0x670] sm:$0xff]
    %v1074 = vld [vmem:[#allocation5 + $0x678] sm:$0xff]
    %v1075 = vld [vmem:[#allocation5 + $0x6a0] sm:$0xff]
    %v1076 = vld [vmem:[#allocation5 + $0x6a8] sm:$0xff]
    %v1077 = vld [vmem:[#allocation5 + $0x6d0] sm:$0xff]
    %v1078 = vld [vmem:[#allocation5 + $0x6d8] sm:$0xff]
    %v1079 = vld [vmem:[#allocation5 + $0x700] sm:$0xff]
    %v1080 = vld [vmem:[#allocation5 + $0x708] sm:$0xff]
    %v1081 = vld [vmem:[#allocation5 + $0x730] sm:$0xff]
    %v1082 = vld [vmem:[#allocation5 + $0x738] sm:$0xff]
    %v1083 = vld [vmem:[#allocation5 + $0x760] sm:$0xff]
    %v1084 = vld [vmem:[#allocation5 + $0x768] sm:$0xff]
    %v1085 = vld [vmem:[#allocation5 + $0x790] sm:$0xff]
    %v1086 = vld [vmem:[#allocation5 + $0x798] sm:$0xff]
    %v1087 = vld [vmem:[#allocation5 + $0x7c0] sm:$0xff]
    %v1088 = vld [vmem:[#allocation5 + $0x7c8] sm:$0xff]
    %v1089 = vld [vmem:[#allocation5 + $0x7f0] sm:$0xff]
    %v1090 = vld [vmem:[#allocation5 + $0x7f8] sm:$0xff]
    %v1091 = vld [vmem:[#allocation5 + $0x820] sm:$0xff]
    %v1092 = vld [vmem:[#allocation5 + $0x828] sm:$0xff]
    %v1093 = vld [vmem:[#allocation5 + $0x850] sm:$0xff]
    %v1094 = vld [vmem:[#allocation5 + $0x858] sm:$0xff]
    %v1095 = vld [vmem:[#allocation5 + $0x880] sm:$0xff]
    %v1096 = vld [vmem:[#allocation5 + $0x888] sm:$0xff]
    %v1097 = vld [vmem:[#allocation5 + $0x8b0] sm:$0xff]
    %v1098 = vld [vmem:[#allocation5 + $0x8b8] sm:$0xff]
    %v1099 = vld [vmem:[#allocation5 + $0x8e0] sm:$0xff]
    %v1100 = vld [vmem:[#allocation5 + $0x8e8] sm:$0xff]
    %v1101 = vld [vmem:[#allocation7 + $0x4] sm:$0xf]
    %v1103 = vlaneseq
    %v1104 = vshrl.u32 %v1103, 7
    %v1105 = vsub.s32 0, %v1104
    %v1106 = vrot.slane %v1101, %v1105
    %v1107 = vlaneseq
    %v1108 = vshrl.u32 %v1107, 7
    %v1109 = vsub.s32 1, %v1108
    %v1110 = vrot.slane %v1101, %v1109
    %v1111 = vlaneseq
    %v1112 = vshrl.u32 %v1111, 7
    %v1113 = vsub.s32 2, %v1112
    %v1114 = vrot.slane %v1101, %v1113
    %v1115 = vlaneseq
    %v1116 = vshrl.u32 %v1115, 7
    %v1117 = vsub.s32 3, %v1116
    %v1118 = vrot.slane %v1101, %v1117
    %v1219 = vunpack.c.l.b16 %v1005
    %v1220 = vunpack.c.h.b16 %v1005
    %v1221 = vunpack.c.l.b16 %v1006
    %v1222 = vunpack.c.h.b16 %v1006
    %v1223 = vunpack.c.l.b16 %v1007
    %v1224 = vunpack.c.h.b16 %v1007
    %v1225 = vunpack.c.l.b16 %v1008
    %v1226 = vunpack.c.h.b16 %v1008
    %v1227 = vunpack.c.l.b16 %v1009
    %v1228 = vunpack.c.h.b16 %v1009
    %v1229 = vunpack.c.l.b16 %v1010
    %v1230 = vunpack.c.h.b16 %v1010
    %v1231 = vunpack.c.l.b16 %v1011
    %v1232 = vunpack.c.h.b16 %v1011
    %v1233 = vunpack.c.l.b16 %v1012
    %v1234 = vunpack.c.h.b16 %v1012
    %v1235 = vunpack.c.l.b16 %v1013
    %v1236 = vunpack.c.h.b16 %v1013
    %v1237 = vunpack.c.l.b16 %v1014
    %v1238 = vunpack.c.h.b16 %v1014
    %v1239 = vunpack.c.l.b16 %v1015
    %v1240 = vunpack.c.h.b16 %v1015
    %v1241 = vunpack.c.l.b16 %v1016
    %v1242 = vunpack.c.h.b16 %v1016
    %v1243 = vunpack.c.l.b16 %v1017
    %v1244 = vunpack.c.h.b16 %v1017
    %v1245 = vunpack.c.l.b16 %v1018
    %v1246 = vunpack.c.h.b16 %v1018
    %v1247 = vunpack.c.l.b16 %v1019
    %v1248 = vunpack.c.h.b16 %v1019
    %v1249 = vunpack.c.l.b16 %v1020
    %v1250 = vunpack.c.h.b16 %v1020
    %v1251 = vunpack.c.l.b16 %v1021
    %v1252 = vunpack.c.h.b16 %v1021
    %v1253 = vunpack.c.l.b16 %v1022
    %v1254 = vunpack.c.h.b16 %v1022
    %v1255 = vunpack.c.l.b16 %v1023
    %v1256 = vunpack.c.h.b16 %v1023
    %v1257 = vunpack.c.l.b16 %v1024
    %v1258 = vunpack.c.h.b16 %v1024
    %v1259 = vunpack.c.l.b16 %v1025
    %v1260 = vunpack.c.h.b16 %v1025
    %v1261 = vunpack.c.l.b16 %v1026
    %v1262 = vunpack.c.h.b16 %v1026
    %v1263 = vunpack.c.l.b16 %v1027
    %v1264 = vunpack.c.h.b16 %v1027
    %v1265 = vunpack.c.l.b16 %v1028
    %v1266 = vunpack.c.h.b16 %v1028
    %v1267 = vunpack.c.l.b16 %v1029
    %v1268 = vunpack.c.h.b16 %v1029
    %v1269 = vunpack.c.l.b16 %v1030
    %v1270 = vunpack.c.h.b16 %v1030
    %v1271 = vunpack.c.l.b16 %v1031
    %v1272 = vunpack.c.h.b16 %v1031
    %v1273 = vunpack.c.l.b16 %v1032
    %v1274 = vunpack.c.h.b16 %v1032
    %v1275 = vunpack.c.l.b16 %v1033
    %v1276 = vunpack.c.h.b16 %v1033
    %v1277 = vunpack.c.l.b16 %v1034
    %v1278 = vunpack.c.h.b16 %v1034
    %v1279 = vunpack.c.l.b16 %v1035
    %v1280 = vunpack.c.h.b16 %v1035
    %v1281 = vunpack.c.l.b16 %v1036
    %v1282 = vunpack.c.h.b16 %v1036
    %v1283 = vunpack.c.l.b16 %v1037
    %v1284 = vunpack.c.h.b16 %v1037
    %v1285 = vunpack.c.l.b16 %v1038
    %v1286 = vunpack.c.h.b16 %v1038
    %v1287 = vunpack.c.l.b16 %v1039
    %v1288 = vunpack.c.h.b16 %v1039
    %v1289 = vunpack.c.l.b16 %v1040
    %v1290 = vunpack.c.h.b16 %v1040
    %v1291 = vunpack.c.l.b16 %v1041
    %v1292 = vunpack.c.h.b16 %v1041
    %v1293 = vunpack.c.l.b16 %v1042
    %v1294 = vunpack.c.h.b16 %v1042
    %v1295 = vunpack.c.l.b16 %v1043
    %v1296 = vunpack.c.h.b16 %v1043
    %v1297 = vunpack.c.l.b16 %v1044
    %v1298 = vunpack.c.h.b16 %v1044
    %v1299 = vunpack.c.l.b16 %v1045
    %v1300 = vunpack.c.h.b16 %v1045
    %v1301 = vunpack.c.l.b16 %v1046
    %v1302 = vunpack.c.h.b16 %v1046
    %v1303 = vunpack.c.l.b16 %v1047
    %v1304 = vunpack.c.h.b16 %v1047
    %v1305 = vunpack.c.l.b16 %v1048
    %v1306 = vunpack.c.h.b16 %v1048
    %v1307 = vunpack.c.l.b16 %v1049
    %v1308 = vunpack.c.h.b16 %v1049
    %v1309 = vunpack.c.l.b16 %v1050
    %v1310 = vunpack.c.h.b16 %v1050
    %v1311 = vunpack.c.l.b16 %v1051
    %v1312 = vunpack.c.h.b16 %v1051
    %v1313 = vunpack.c.l.b16 %v1052
    %v1314 = vunpack.c.h.b16 %v1052
    %v1315 = vunpack.c.l.b16 %v1053
    %v1316 = vunpack.c.h.b16 %v1053
    %v1317 = vunpack.c.l.b16 %v1054
    %v1318 = vunpack.c.h.b16 %v1054
    %v1319 = vunpack.c.l.b16 %v1055
    %v1320 = vunpack.c.h.b16 %v1055
    %v1321 = vunpack.c.l.b16 %v1056
    %v1322 = vunpack.c.h.b16 %v1056
    %v1323 = vunpack.c.l.b16 %v1057
    %v1324 = vunpack.c.h.b16 %v1057
    %v1325 = vunpack.c.l.b16 %v1058
    %v1326 = vunpack.c.h.b16 %v1058
    %v1327 = vunpack.c.l.b16 %v1059
    %v1328 = vunpack.c.h.b16 %v1059
    %v1329 = vunpack.c.l.b16 %v1060
    %v1330 = vunpack.c.h.b16 %v1060
    %v1331 = vunpack.c.l.b16 %v1061
    %v1332 = vunpack.c.h.b16 %v1061
    %v1333 = vunpack.c.l.b16 %v1062
    %v1334 = vunpack.c.h.b16 %v1062
    %v1335 = vunpack.c.l.b16 %v1063
    %v1336 = vunpack.c.h.b16 %v1063
    %v1337 = vunpack.c.l.b16 %v1064
    %v1338 = vunpack.c.h.b16 %v1064
    %v1339 = vunpack.c.l.b16 %v1065
    %v1340 = vunpack.c.h.b16 %v1065
    %v1341 = vunpack.c.l.b16 %v1066
    %v1342 = vunpack.c.h.b16 %v1066
    %v1343 = vunpack.c.l.b16 %v1067
    %v1344 = vunpack.c.h.b16 %v1067
    %v1345 = vunpack.c.l.b16 %v1068
    %v1346 = vunpack.c.h.b16 %v1068
    %v1347 = vunpack.c.l.b16 %v1069
    %v1348 = vunpack.c.h.b16 %v1069
    %v1349 = vunpack.c.l.b16 %v1070
    %v1350 = vunpack.c.h.b16 %v1070
    %v1351 = vunpack.c.l.b16 %v1071
    %v1352 = vunpack.c.h.b16 %v1071
    %v1353 = vunpack.c.l.b16 %v1072
    %v1354 = vunpack.c.h.b16 %v1072
    %v1355 = vunpack.c.l.b16 %v1073
    %v1356 = vunpack.c.h.b16 %v1073
    %v1357 = vunpack.c.l.b16 %v1074
    %v1358 = vunpack.c.h.b16 %v1074
    %v1359 = vunpack.c.l.b16 %v1075
    %v1360 = vunpack.c.h.b16 %v1075
    %v1361 = vunpack.c.l.b16 %v1076
    %v1362 = vunpack.c.h.b16 %v1076
    %v1363 = vunpack.c.l.b16 %v1077
    %v1364 = vunpack.c.h.b16 %v1077
    %v1365 = vunpack.c.l.b16 %v1078
    %v1366 = vunpack.c.h.b16 %v1078
    %v1367 = vunpack.c.l.b16 %v1079
    %v1368 = vunpack.c.h.b16 %v1079
    %v1369 = vunpack.c.l.b16 %v1080
    %v1370 = vunpack.c.h.b16 %v1080
    %v1371 = vunpack.c.l.b16 %v1081
    %v1372 = vunpack.c.h.b16 %v1081
    %v1373 = vunpack.c.l.b16 %v1082
    %v1374 = vunpack.c.h.b16 %v1082
    %v1375 = vunpack.c.l.b16 %v1083
    %v1376 = vunpack.c.h.b16 %v1083
    %v1377 = vunpack.c.l.b16 %v1084
    %v1378 = vunpack.c.h.b16 %v1084
    %v1379 = vunpack.c.l.b16 %v1085
    %v1380 = vunpack.c.h.b16 %v1085
    %v1381 = vunpack.c.l.b16 %v1086
    %v1382 = vunpack.c.h.b16 %v1086
    %v1383 = vunpack.c.l.b16 %v1087
    %v1384 = vunpack.c.h.b16 %v1087
    %v1385 = vunpack.c.l.b16 %v1088
    %v1386 = vunpack.c.h.b16 %v1088
    %v1387 = vunpack.c.l.b16 %v1089
    %v1388 = vunpack.c.h.b16 %v1089
    %v1389 = vunpack.c.l.b16 %v1090
    %v1390 = vunpack.c.h.b16 %v1090
    %v1391 = vunpack.c.l.b16 %v1091
    %v1392 = vunpack.c.h.b16 %v1091
    %v1393 = vunpack.c.l.b16 %v1092
    %v1394 = vunpack.c.h.b16 %v1092
    %v1395 = vunpack.c.l.b16 %v1093
    %v1396 = vunpack.c.h.b16 %v1093
    %v1397 = vunpack.c.l.b16 %v1094
    %v1398 = vunpack.c.h.b16 %v1094
    %v1399 = vunpack.c.l.b16 %v1095
    %v1400 = vunpack.c.h.b16 %v1095
    %v1401 = vunpack.c.l.b16 %v1096
    %v1402 = vunpack.c.h.b16 %v1096
    %v1403 = vunpack.c.l.b16 %v1097
    %v1404 = vunpack.c.h.b16 %v1097
    %v1405 = vunpack.c.l.b16 %v1098
    %v1406 = vunpack.c.h.b16 %v1098
    %v1407 = vunpack.c.l.b16 %v1099
    %v1408 = vunpack.c.h.b16 %v1099
    %v1409 = vunpack.c.l.b16 %v1100
    %v1410 = vunpack.c.h.b16 %v1100
    %v1411 = vpack.c.b16 %v1223, %v1219
    %v1412 = vpack.c.b16 %v1224, %v1220
    %v1413 = vpack.c.b16 %v1225, %v1221
    %v1414 = vpack.c.b16 %v1226, %v1222
    %v1415 = vpack.c.b16 %v1231, %v1227
    %v1416 = vpack.c.b16 %v1232, %v1228
    %v1417 = vpack.c.b16 %v1233, %v1229
    %v1418 = vpack.c.b16 %v1234, %v1230
    %v1419 = vpack.c.b16 %v1239, %v1235
    %v1420 = vpack.c.b16 %v1240, %v1236
    %v1421 = vpack.c.b16 %v1241, %v1237
    %v1422 = vpack.c.b16 %v1242, %v1238
    %v1423 = vpack.c.b16 %v1247, %v1243
    %v1424 = vpack.c.b16 %v1248, %v1244
    %v1425 = vpack.c.b16 %v1249, %v1245
    %v1426 = vpack.c.b16 %v1250, %v1246
    %v1427 = vpack.c.b16 %v1255, %v1251
    %v1428 = vpack.c.b16 %v1256, %v1252
    %v1429 = vpack.c.b16 %v1257, %v1253
    %v1430 = vpack.c.b16 %v1258, %v1254
    %v1431 = vpack.c.b16 %v1263, %v1259
    %v1432 = vpack.c.b16 %v1264, %v1260
    %v1433 = vpack.c.b16 %v1265, %v1261
    %v1434 = vpack.c.b16 %v1266, %v1262
    %v1435 = vpack.c.b16 %v1271, %v1267
    %v1436 = vpack.c.b16 %v1272, %v1268
    %v1437 = vpack.c.b16 %v1273, %v1269
    %v1438 = vpack.c.b16 %v1274, %v1270
    %v1439 = vpack.c.b16 %v1279, %v1275
    %v1440 = vpack.c.b16 %v1280, %v1276
    %v1441 = vpack.c.b16 %v1281, %v1277
    %v1442 = vpack.c.b16 %v1282, %v1278
    %v1443 = vpack.c.b16 %v1287, %v1283
    %v1444 = vpack.c.b16 %v1288, %v1284
    %v1445 = vpack.c.b16 %v1289, %v1285
    %v1446 = vpack.c.b16 %v1290, %v1286
    %v1447 = vpack.c.b16 %v1295, %v1291
    %v1448 = vpack.c.b16 %v1296, %v1292
    %v1449 = vpack.c.b16 %v1297, %v1293
    %v1450 = vpack.c.b16 %v1298, %v1294
    %v1451 = vpack.c.b16 %v1303, %v1299
    %v1452 = vpack.c.b16 %v1304, %v1300
    %v1453 = vpack.c.b16 %v1305, %v1301
    %v1454 = vpack.c.b16 %v1306, %v1302
    %v1455 = vpack.c.b16 %v1311, %v1307
    %v1456 = vpack.c.b16 %v1312, %v1308
    %v1457 = vpack.c.b16 %v1313, %v1309
    %v1458 = vpack.c.b16 %v1314, %v1310
    %v1459 = vpack.c.b16 %v1319, %v1315
    %v1460 = vpack.c.b16 %v1320, %v1316
    %v1461 = vpack.c.b16 %v1321, %v1317
    %v1462 = vpack.c.b16 %v1322, %v1318
    %v1463 = vpack.c.b16 %v1327, %v1323
    %v1464 = vpack.c.b16 %v1328, %v1324
    %v1465 = vpack.c.b16 %v1329, %v1325
    %v1466 = vpack.c.b16 %v1330, %v1326
    %v1467 = vpack.c.b16 %v1335, %v1331
    %v1468 = vpack.c.b16 %v1336, %v1332
    %v1469 = vpack.c.b16 %v1337, %v1333
    %v1470 = vpack.c.b16 %v1338, %v1334
    %v1471 = vpack.c.b16 %v1343, %v1339
    %v1472 = vpack.c.b16 %v1344, %v1340
    %v1473 = vpack.c.b16 %v1345, %v1341
    %v1474 = vpack.c.b16 %v1346, %v1342
    %v1475 = vpack.c.b16 %v1351, %v1347
    %v1476 = vpack.c.b16 %v1352, %v1348
    %v1477 = vpack.c.b16 %v1353, %v1349
    %v1478 = vpack.c.b16 %v1354, %v1350
    %v1479 = vpack.c.b16 %v1359, %v1355
    %v1480 = vpack.c.b16 %v1360, %v1356
    %v1481 = vpack.c.b16 %v1361, %v1357
    %v1482 = vpack.c.b16 %v1362, %v1358
    %v1483 = vpack.c.b16 %v1367, %v1363
    %v1484 = vpack.c.b16 %v1368, %v1364
    %v1485 = vpack.c.b16 %v1369, %v1365
    %v1486 = vpack.c.b16 %v1370, %v1366
    %v1487 = vpack.c.b16 %v1375, %v1371
    %v1488 = vpack.c.b16 %v1376, %v1372
    %v1489 = vpack.c.b16 %v1377, %v1373
    %v1490 = vpack.c.b16 %v1378, %v1374
    %v1491 = vpack.c.b16 %v1383, %v1379
    %v1492 = vpack.c.b16 %v1384, %v1380
    %v1493 = vpack.c.b16 %v1385, %v1381
    %v1494 = vpack.c.b16 %v1386, %v1382
    %v1495 = vpack.c.b16 %v1391, %v1387
    %v1496 = vpack.c.b16 %v1392, %v1388
    %v1497 = vpack.c.b16 %v1393, %v1389
    %v1498 = vpack.c.b16 %v1394, %v1390
    %v1499 = vpack.c.b16 %v1399, %v1395
    %v1500 = vpack.c.b16 %v1400, %v1396
    %v1501 = vpack.c.b16 %v1401, %v1397
    %v1502 = vpack.c.b16 %v1402, %v1398
    %v1503 = vpack.c.b16 %v1407, %v1403
    %v1504 = vpack.c.b16 %v1408, %v1404
    %v1505 = vpack.c.b16 %v1409, %v1405
    %v1506 = vpack.c.b16 %v1410, %v1406
    %1603 = vmatprep.subr.bf16.mxu0 %v1412
    %1604 = vmatpush1.bf16.msra.mxu0 %v1411
    %1605 = vmatprep.subr.bf16.mxu0 %v1416
    %1606 = vmatpush1.bf16.msra.mxu0 %v1415
    %1607 = vmatprep.subr.bf16.mxu0 %v1420
    %1608 = vmatpush1.bf16.msra.mxu0 %v1419
    %1609 = vmatprep.subr.bf16.mxu0 %v1424
    %1610 = vmatpush1.bf16.msra.mxu0 %v1423
    %1611 = vmatprep.subr.bf16.mxu0 %v1428
    %1612 = vmatpush1.bf16.msra.mxu0 %v1427
    %1613 = vmatprep.subr.bf16.mxu0 %v1432
    %1614 = vmatpush1.bf16.msra.mxu0 %v1431
    %1615 = vmatprep.subr.bf16.mxu0 %v1436
    %1616 = vmatpush1.bf16.msra.mxu0 %v1435
    %1617 = vmatprep.subr.bf16.mxu0 %v1440
    %1618 = vmatpush1.bf16.msra.mxu0 %v1439
    %1619 = vmatprep.subr.bf16.mxu0 %v1444
    %1620 = vmatpush1.bf16.msra.mxu0 %v1443
    %1621 = vmatprep.subr.bf16.mxu0 %v1448
    %1622 = vmatpush1.bf16.msra.mxu0 %v1447
    %1623 = vmatprep.subr.bf16.mxu0 %v1452
    %1624 = vmatpush1.bf16.msra.mxu0 %v1451
    %1625 = vmatprep.subr.bf16.mxu0 %v1456
    %1626 = vmatpush1.bf16.msra.mxu0 %v1455
    %1627 = vmatprep.subr.bf16.mxu0 %v1460
    %1628 = vmatpush1.bf16.msra.mxu0 %v1459
    %1629 = vmatprep.subr.bf16.mxu0 %v1464
    %1630 = vmatpush1.bf16.msra.mxu0 %v1463
    %1631 = vmatprep.subr.bf16.mxu0 %v1468
    %1632 = vmatpush1.bf16.msra.mxu0 %v1467
    %1633 = vmatprep.subr.bf16.mxu0 %v1472
    %1634 = vmatpush1.bf16.msra.mxu0 %v1471
    %1635 = vmatprep.mubr.bf16.mxu0 %v93
    %1636 = vmatmul.mubr.bf16.gmra.mrb[0].mxu0 %v92
    %v1637 = vpop.f32.mrb[0].mxu0
    %v1638 = vadd.f32 %v1106, %v1637
    %v1639 = vpop.f32.mrb[0].mxu0
    %v1640 = vadd.f32 %v1110, %v1639
    %v1641 = vpop.f32.mrb[0].mxu0
    %v1642 = vadd.f32 %v1106, %v1641
    %v1643 = vpop.f32.mrb[0].mxu0
    %v1644 = vadd.f32 %v1110, %v1643
    %1645 = vdwg.mxu0
    %1646 = vmatprep.subr.bf16.mxu0 %v1476
    %1647 = vmatpush1.bf16.msra.mxu0 %v1475
    %1648 = vmatprep.subr.bf16.mxu0 %v1480
    %1649 = vmatpush1.bf16.msra.mxu0 %v1479
    %1650 = vmatprep.subr.bf16.mxu0 %v1484
    %1651 = vmatpush1.bf16.msra.mxu0 %v1483
    %1652 = vmatprep.subr.bf16.mxu0 %v1488
    %1653 = vmatpush1.bf16.msra.mxu0 %v1487
    %1654 = vmatprep.subr.bf16.mxu0 %v1492
    %1655 = vmatpush1.bf16.msra.mxu0 %v1491
    %1656 = vmatprep.subr.bf16.mxu0 %v1496
    %1657 = vmatpush1.bf16.msra.mxu0 %v1495
    %1658 = vmatprep.subr.bf16.mxu0 %v1500
    %1659 = vmatpush1.bf16.msra.mxu0 %v1499
    %1660 = vmatprep.subr.bf16.mxu0 %v1504
    %1661 = vmatpush1.bf16.msra.mxu0 %v1503
    %1662 = vmatprep.subr.bf16.mxu0 0
    %1663 = vmatpush1.bf16.msra.mxu0 0
    %1664 = vmatprep.subr.bf16.mxu0 0
    %1665 = vmatpush1.bf16.msra.mxu0 0
    %1666 = vmatprep.subr.bf16.mxu0 0
    %1667 = vmatpush1.bf16.msra.mxu0 0
    %1668 = vmatprep.subr.bf16.mxu0 0
    %1669 = vmatpush1.bf16.msra.mxu0 0
    %1670 = vmatprep.subr.bf16.mxu0 0
    %1671 = vmatpush1.bf16.msra.mxu0 0
    %1672 = vmatprep.subr.bf16.mxu0 0
    %1673 = vmatpush1.bf16.msra.mxu0 0
    %1674 = vmatprep.subr.bf16.mxu0 0
    %1675 = vmatpush1.bf16.msra.mxu0 0
    %1676 = vmatprep.subr.bf16.mxu0 0
    %1677 = vmatpush1.bf16.msra.mxu0 0
    %1678 = vmatprep.mubr.bf16.mxu0 0
    %1679 = vmatmul.mubr.bf16.gmra.mrb[0].mxu0 %v94
    %v1680 = vpop.f32.mrb[0].mxu0
    %v1681 = vadd.f32 %v1638, %v1680
    %v1682 = vpop.f32.mrb[0].mxu0
    %v1683 = vadd.f32 %v1640, %v1682
    %v1684 = vpop.f32.mrb[0].mxu0
    %v1685 = vadd.f32 %v1642, %v1684
    %v1686 = vpop.f32.mrb[0].mxu0
    %v1687 = vadd.f32 %v1644, %v1686
    %1688 = vdwg.mxu0
    %1689 = vmatprep.subr.bf16.mxu0 %v1414
    %1690 = vmatpush1.bf16.msra.mxu0 %v1413
    %1691 = vmatprep.subr.bf16.mxu0 %v1418
    %1692 = vmatpush1.bf16.msra.mxu0 %v1417
    %1693 = vmatprep.subr.bf16.mxu0 %v1422
    %1694 = vmatpush1.bf16.msra.mxu0 %v1421
    %1695 = vmatprep.subr.bf16.mxu0 %v1426
    %1696 = vmatpush1.bf16.msra.mxu0 %v1425
    %1697 = vmatprep.subr.bf16.mxu0 %v1430
    %1698 = vmatpush1.bf16.msra.mxu0 %v1429
    %1699 = vmatprep.subr.bf16.mxu0 %v1434
    %1700 = vmatpush1.bf16.msra.mxu0 %v1433
    %1701 = vmatprep.subr.bf16.mxu0 %v1438
    %1702 = vmatpush1.bf16.msra.mxu0 %v1437
    %1703 = vmatprep.subr.bf16.mxu0 %v1442
    %1704 = vmatpush1.bf16.msra.mxu0 %v1441
    %1705 = vmatprep.subr.bf16.mxu0 %v1446
    %1706 = vmatpush1.bf16.msra.mxu0 %v1445
    %1707 = vmatprep.subr.bf16.mxu0 %v1450
    %1708 = vmatpush1.bf16.msra.mxu0 %v1449
    %1709 = vmatprep.subr.bf16.mxu0 %v1454
    %1710 = vmatpush1.bf16.msra.mxu0 %v1453
    %1711 = vmatprep.subr.bf16.mxu0 %v1458
    %1712 = vmatpush1.bf16.msra.mxu0 %v1457
    %1713 = vmatprep.subr.bf16.mxu0 %v1462
    %1714 = vmatpush1.bf16.msra.mxu0 %v1461
    %1715 = vmatprep.subr.bf16.mxu0 %v1466
    %1716 = vmatpush1.bf16.msra.mxu0 %v1465
    %1717 = vmatprep.subr.bf16.mxu0 %v1470
    %1718 = vmatpush1.bf16.msra.mxu0 %v1469
    %1719 = vmatprep.subr.bf16.mxu0 %v1474
    %1720 = vmatpush1.bf16.msra.mxu0 %v1473
    %1721 = vmatprep.mubr.bf16.mxu0 %v93
    %1722 = vmatmul.mubr.bf16.gmra.mrb[0].mxu0 %v92
    %v1723 = vpop.f32.mrb[0].mxu0
    %v1724 = vadd.f32 %v1114, %v1723
    %v1725 = vpop.f32.mrb[0].mxu0
    %v1726 = vadd.f32 %v1118, %v1725
    %v1727 = vpop.f32.mrb[0].mxu0
    %v1728 = vadd.f32 %v1114, %v1727
    %v1729 = vpop.f32.mrb[0].mxu0
    %v1730 = vadd.f32 %v1118, %v1729
    %1731 = vdwg.mxu0
    %1732 = vmatprep.subr.bf16.mxu0 %v1478
    %1733 = vmatpush1.bf16.msra.mxu0 %v1477
    %1734 = vmatprep.subr.bf16.mxu0 %v1482
    %1735 = vmatpush1.bf16.msra.mxu0 %v1481
    %1736 = vmatprep.subr.bf16.mxu0 %v1486
    %1737 = vmatpush1.bf16.msra.mxu0 %v1485
    %1738 = vmatprep.subr.bf16.mxu0 %v1490
    %1739 = vmatpush1.bf16.msra.mxu0 %v1489
    %1740 = vmatprep.subr.bf16.mxu0 %v1494
    %1741 = vmatpush1.bf16.msra.mxu0 %v1493
    %1742 = vmatprep.subr.bf16.mxu0 %v1498
    %1743 = vmatpush1.bf16.msra.mxu0 %v1497
    %1744 = vmatprep.subr.bf16.mxu0 %v1502
    %1745 = vmatpush1.bf16.msra.mxu0 %v1501
    %1746 = vmatprep.subr.bf16.mxu0 %v1506
    %1747 = vmatpush1.bf16.msra.mxu0 %v1505
    %1748 = vmatprep.subr.bf16.mxu0 0
    %1749 = vmatpush1.bf16.msra.mxu0 0
    %1750 = vmatprep.subr.bf16.mxu0 0
    %1751 = vmatpush1.bf16.msra.mxu0 0
    %1752 = vmatprep.subr.bf16.mxu0 0
    %1753 = vmatpush1.bf16.msra.mxu0 0
    %1754 = vmatprep.subr.bf16.mxu0 0
    %1755 = vmatpush1.bf16.msra.mxu0 0
    %1756 = vmatprep.subr.bf16.mxu0 0
    %1757 = vmatpush1.bf16.msra.mxu0 0
    %1758 = vmatprep.subr.bf16.mxu0 0
    %1759 = vmatpush1.bf16.msra.mxu0 0
    %1760 = vmatprep.subr.bf16.mxu0 0
    %1761 = vmatpush1.bf16.msra.mxu0 0
    %1762 = vmatprep.subr.bf16.mxu0 0
    %1763 = vmatpush1.bf16.msra.mxu0 0
    %1764 = vmatprep.mubr.bf16.mxu0 0
    %1765 = vmatmul.mubr.bf16.gmra.mrb[0].mxu0 %v94
    %v1766 = vpop.f32.mrb[0].mxu0
    %v1767 = vadd.f32 %v1724, %v1766
    %v1768 = vpop.f32.mrb[0].mxu0
    %v1769 = vadd.f32 %v1726, %v1768
    %v1770 = vpop.f32.mrb[0].mxu0
    %v1771 = vadd.f32 %v1728, %v1770
    %v1772 = vpop.f32.mrb[0].mxu0
    %v1773 = vadd.f32 %v1730, %v1772
    %1774 = vdwg.mxu0
    %v1775 = vmax.f32 %v1681, 0.0
    %v1776 = vmax.f32 %v1683, 0.0
    %v1777 = vmax.f32 %v1767, 0.0
    %v1778 = vmax.f32 %v1769, 0.0
    %v1779 = vmax.f32 %v1685, 0.0
    %v1780 = vmax.f32 %v1687, 0.0
    %v1781 = vmax.f32 %v1771, 0.0
    %v1782 = vmax.f32 %v1773, 0.0
    %v1783 = vpack.c.bf16 %v1779, %v1775
    %v1784 = vpack.c.bf16 %v1780, %v1776
    %v1785 = vpack.c.bf16 %v1781, %v1777
    %v1786 = vpack.c.bf16 %v1782, %v1778
    %v1787 = vld [vmem:[#allocation8 + $0x300] sm:$0xff]
    %v1788 = vld [vmem:[#allocation8 + $0x308] sm:$0xf]
    %v1789 = vld [vmem:[#allocation8 + $0x30c] sm:$0xff]
    %v1790 = vld [vmem:[#allocation8 + $0x314] sm:$0xf]
    %v1791 = vld [vmem:[#allocation8 + $0x318] sm:$0xff]
    %v1792 = vld [vmem:[#allocation8 + $0x320] sm:$0xf]
    %v1793 = vld [vmem:[#allocation8 + $0x324] sm:$0xff]
    %v1794 = vld [vmem:[#allocation8 + $0x32c] sm:$0xf]
    %v1795 = vld [vmem:[#allocation8 + $0x330] sm:$0xff]
    %v1796 = vld [vmem:[#allocation8 + $0x338] sm:$0xf]
    %v1797 = vld [vmem:[#allocation8 + $0x33c] sm:$0xff]
    %v1798 = vld [vmem:[#allocation8 + $0x344] sm:$0xf]
    %v1799 = vld [vmem:[#allocation8 + $0x348] sm:$0xff]
    %v1800 = vld [vmem:[#allocation8 + $0x350] sm:$0xf]
    %v1801 = vld [vmem:[#allocation8 + $0x354] sm:$0xff]
    %v1802 = vld [vmem:[#allocation8 + $0x35c] sm:$0xf]
    %v1803 = vld [vmem:[#allocation8 + $0x360] sm:$0xff]
    %v1804 = vld [vmem:[#allocation8 + $0x368] sm:$0xf]
    %v1805 = vld [vmem:[#allocation8 + $0x36c] sm:$0xff]
    %v1806 = vld [vmem:[#allocation8 + $0x374] sm:$0xf]
    %v1807 = vld [vmem:[#allocation8 + $0x378] sm:$0xff]
    %v1808 = vld [vmem:[#allocation8 + $0x380] sm:$0xf]
    %v1809 = vld [vmem:[#allocation8 + $0x384] sm:$0xff]
    %v1810 = vld [vmem:[#allocation8 + $0x38c] sm:$0xf]
    %v1811 = vld [vmem:[#allocation8 + $0x390] sm:$0xff]
    %v1812 = vld [vmem:[#allocation8 + $0x398] sm:$0xf]
    %v1813 = vld [vmem:[#allocation8 + $0x39c] sm:$0xff]
    %v1814 = vld [vmem:[#allocation8 + $0x3a4] sm:$0xf]
    %v1815 = vld [vmem:[#allocation8 + $0x3a8] sm:$0xff]
    %v1816 = vld [vmem:[#allocation8 + $0x3b0] sm:$0xf]
    %v1817 = vld [vmem:[#allocation8 + $0x3b4] sm:$0xff]
    %v1818 = vld [vmem:[#allocation8 + $0x3bc] sm:$0xf]
    %v1819 = vld [vmem:[#allocation8 + $0x3c0] sm:$0xff]
    %v1820 = vld [vmem:[#allocation8 + $0x3c8] sm:$0xf]
    %v1821 = vld [vmem:[#allocation8 + $0x3cc] sm:$0xff]
    %v1822 = vld [vmem:[#allocation8 + $0x3d4] sm:$0xf]
    %v1823 = vld [vmem:[#allocation8 + $0x3d8] sm:$0xff]
    %v1824 = vld [vmem:[#allocation8 + $0x3e0] sm:$0xf]
    %v1825 = vld [vmem:[#allocation8 + $0x3e4] sm:$0xff]
    %v1826 = vld [vmem:[#allocation8 + $0x3ec] sm:$0xf]
    %v1827 = vld [vmem:[#allocation8 + $0x3f0] sm:$0xff]
    %v1828 = vld [vmem:[#allocation8 + $0x3f8] sm:$0xf]
    %v1829 = vld [vmem:[#allocation8 + $0x3fc] sm:$0xff]
    %v1830 = vld [vmem:[#allocation8 + $0x404] sm:$0xf]
    %v1831 = vld [vmem:[#allocation8 + $0x408] sm:$0xff]
    %v1832 = vld [vmem:[#allocation8 + $0x410] sm:$0xf]
    %v1833 = vld [vmem:[#allocation8 + $0x414] sm:$0xff]
    %v1834 = vld [vmem:[#allocation8 + $0x41c] sm:$0xf]
    %v1835 = vld [vmem:[#allocation8 + $0x420] sm:$0xff]
    %v1836 = vld [vmem:[#allocation8 + $0x428] sm:$0xf]
    %v1837 = vld [vmem:[#allocation8 + $0x42c] sm:$0xff]
    %v1838 = vld [vmem:[#allocation8 + $0x434] sm:$0xf]
    %v1839 = vld [vmem:[#allocation8 + $0x438] sm:$0xff]
    %v1840 = vld [vmem:[#allocation8 + $0x440] sm:$0xf]
    %v1841 = vld [vmem:[#allocation8 + $0x444] sm:$0xff]
    %v1842 = vld [vmem:[#allocation8 + $0x44c] sm:$0xf]
    %v1843 = vld [vmem:[#allocation8 + $0x450] sm:$0xff]
    %v1844 = vld [vmem:[#allocation8 + $0x458] sm:$0xf]
    %v1845 = vld [vmem:[#allocation8 + $0x45c] sm:$0xff]
    %v1846 = vld [vmem:[#allocation8 + $0x464] sm:$0xf]
    %v1847 = vld [vmem:[#allocation8 + $0x468] sm:$0xff]
    %v1848 = vld [vmem:[#allocation8 + $0x470] sm:$0xf]
    %v1849 = vld [vmem:[#allocation8 + $0x474] sm:$0xff]
    %v1850 = vld [vmem:[#allocation8 + $0x47c] sm:$0xf]
    %v1851 = vld [vmem:[#allocation8 + $0x480] sm:$0xff]
    %v1852 = vld [vmem:[#allocation8 + $0x488] sm:$0xf]
    %v1853 = vld [vmem:[#allocation8 + $0x48c] sm:$0xff]
    %v1854 = vld [vmem:[#allocation8 + $0x494] sm:$0xf]
    %v1855 = vld [vmem:[#allocation8 + $0x498] sm:$0xff]
    %v1856 = vld [vmem:[#allocation8 + $0x4a0] sm:$0xf]
    %v1857 = vld [vmem:[#allocation8 + $0x4a4] sm:$0xff]
    %v1858 = vld [vmem:[#allocation8 + $0x4ac] sm:$0xf]
    %v1859 = vld [vmem:[#allocation8 + $0x4b0] sm:$0xff]
    %v1860 = vld [vmem:[#allocation8 + $0x4b8] sm:$0xf]
    %v1861 = vld [vmem:[#allocation8 + $0x4bc] sm:$0xff]
    %v1862 = vld [vmem:[#allocation8 + $0x4c4] sm:$0xf]
    %v1863 = vld [vmem:[#allocation8 + $0x4c8] sm:$0xff]
    %v1864 = vld [vmem:[#allocation8 + $0x4d0] sm:$0xf]
    %v1865 = vld [vmem:[#allocation8 + $0x4d4] sm:$0xff]
    %v1866 = vld [vmem:[#allocation8 + $0x4dc] sm:$0xf]
    %v1867 = vld [vmem:[#allocation8 + $0x4e0] sm:$0xff]
    %v1868 = vld [vmem:[#allocation8 + $0x4e8] sm:$0xf]
    %v1869 = vld [vmem:[#allocation8 + $0x4ec] sm:$0xff]
    %v1870 = vld [vmem:[#allocation8 + $0x4f4] sm:$0xf]
    %v1871 = vld [vmem:[#allocation8 + $0x4f8] sm:$0xff]
    %v1872 = vld [vmem:[#allocation8 + $0x500] sm:$0xf]
    %v1873 = vld [vmem:[#allocation8 + $0x504] sm:$0xff]
    %v1874 = vld [vmem:[#allocation8 + $0x50c] sm:$0xf]
    %v1875 = vld [vmem:[#allocation8 + $0x510] sm:$0xff]
    %v1876 = vld [vmem:[#allocation8 + $0x518] sm:$0xf]
    %v1877 = vld [vmem:[#allocation8 + $0x51c] sm:$0xff]
    %v1878 = vld [vmem:[#allocation8 + $0x524] sm:$0xf]
    %v1879 = vld [vmem:[#allocation8 + $0x528] sm:$0xff]
    %v1880 = vld [vmem:[#allocation8 + $0x530] sm:$0xf]
    %v1881 = vld [vmem:[#allocation8 + $0x534] sm:$0xff]
    %v1882 = vld [vmem:[#allocation8 + $0x53c] sm:$0xf]
    %v1883 = vld [vmem:[#allocation8 + $0x540] sm:$0xff]
    %v1884 = vld [vmem:[#allocation8 + $0x548] sm:$0xf]
    %v1885 = vld [vmem:[#allocation8 + $0x54c] sm:$0xff]
    %v1886 = vld [vmem:[#allocation8 + $0x554] sm:$0xf]
    %v1887 = vld [vmem:[#allocation8 + $0x558] sm:$0xff]
    %v1888 = vld [vmem:[#allocation8 + $0x560] sm:$0xf]
    %v1889 = vld [vmem:[#allocation8 + $0x564] sm:$0xff]
    %v1890 = vld [vmem:[#allocation8 + $0x56c] sm:$0xf]
    %v1891 = vld [vmem:[#allocation8 + $0x570] sm:$0xff]
    %v1892 = vld [vmem:[#allocation8 + $0x578] sm:$0xf]
    %v1893 = vld [vmem:[#allocation8 + $0x57c] sm:$0xff]
    %v1894 = vld [vmem:[#allocation8 + $0x584] sm:$0xf]
    %v1895 = vld [vmem:[#allocation8 + $0x588] sm:$0xff]
    %v1896 = vld [vmem:[#allocation8 + $0x590] sm:$0xf]
    %v1897 = vld [vmem:[#allocation8 + $0x594] sm:$0xff]
    %v1898 = vld [vmem:[#allocation8 + $0x59c] sm:$0xf]
    %v1899 = vld [vmem:[#allocation8 + $0x5a0] sm:$0xff]
    %v1900 = vld [vmem:[#allocation8 + $0x5a8] sm:$0xf]
    %v1901 = vld [vmem:[#allocation8 + $0x5ac] sm:$0xff]
    %v1902 = vld [vmem:[#allocation8 + $0x5b4] sm:$0xf]
    %v1903 = vld [vmem:[#allocation8 + $0x5b8] sm:$0xff]
    %v1904 = vld [vmem:[#allocation8 + $0x5c0] sm:$0xf]
    %v1905 = vld [vmem:[#allocation8 + $0x5c4] sm:$0xff]
    %v1906 = vld [vmem:[#allocation8 + $0x5cc] sm:$0xf]
    %v1907 = vld [vmem:[#allocation8 + $0x5d0] sm:$0xff]
    %v1908 = vld [vmem:[#allocation8 + $0x5d8] sm:$0xf]
    %v1909 = vld [vmem:[#allocation8 + $0x5dc] sm:$0xff]
    %v1910 = vld [vmem:[#allocation8 + $0x5e4] sm:$0xf]
    %v1911 = vld [vmem:[#allocation8 + $0x5e8] sm:$0xff]
    %v1912 = vld [vmem:[#allocation8 + $0x5f0] sm:$0xf]
    %v1913 = vld [vmem:[#allocation8 + $0x5f4] sm:$0xff]
    %v1914 = vld [vmem:[#allocation8 + $0x5fc] sm:$0xf]
    %v2043 = vunpack.c.l.b16 %v1787
    %v2044 = vunpack.c.h.b16 %v1787
    %v2045 = vunpack.c.l.b16 %v1788
    %v2046 = vunpack.c.l.b16 %v1789
    %v2047 = vunpack.c.h.b16 %v1789
    %v2048 = vunpack.c.l.b16 %v1790
    %v2049 = vunpack.c.l.b16 %v1791
    %v2050 = vunpack.c.h.b16 %v1791
    %v2051 = vunpack.c.l.b16 %v1792
    %v2052 = vunpack.c.l.b16 %v1793
    %v2053 = vunpack.c.h.b16 %v1793
    %v2054 = vunpack.c.l.b16 %v1794
    %v2055 = vunpack.c.l.b16 %v1795
    %v2056 = vunpack.c.h.b16 %v1795
    %v2057 = vunpack.c.l.b16 %v1796
    %v2058 = vunpack.c.l.b16 %v1797
    %v2059 = vunpack.c.h.b16 %v1797
    %v2060 = vunpack.c.l.b16 %v1798
    %v2061 = vunpack.c.l.b16 %v1799
    %v2062 = vunpack.c.h.b16 %v1799
    %v2063 = vunpack.c.l.b16 %v1800
    %v2064 = vunpack.c.l.b16 %v1801
    %v2065 = vunpack.c.h.b16 %v1801
    %v2066 = vunpack.c.l.b16 %v1802
    %v2067 = vunpack.c.l.b16 %v1803
    %v2068 = vunpack.c.h.b16 %v1803
    %v2069 = vunpack.c.l.b16 %v1804
    %v2070 = vunpack.c.l.b16 %v1805
    %v2071 = vunpack.c.h.b16 %v1805
    %v2072 = vunpack.c.l.b16 %v1806
    %v2073 = vunpack.c.l.b16 %v1807
    %v2074 = vunpack.c.h.b16 %v1807
    %v2075 = vunpack.c.l.b16 %v1808
    %v2076 = vunpack.c.l.b16 %v1809
    %v2077 = vunpack.c.h.b16 %v1809
    %v2078 = vunpack.c.l.b16 %v1810
    %v2079 = vunpack.c.l.b16 %v1811
    %v2080 = vunpack.c.h.b16 %v1811
    %v2081 = vunpack.c.l.b16 %v1812
    %v2082 = vunpack.c.l.b16 %v1813
    %v2083 = vunpack.c.h.b16 %v1813
    %v2084 = vunpack.c.l.b16 %v1814
    %v2085 = vunpack.c.l.b16 %v1815
    %v2086 = vunpack.c.h.b16 %v1815
    %v2087 = vunpack.c.l.b16 %v1816
    %v2088 = vunpack.c.l.b16 %v1817
    %v2089 = vunpack.c.h.b16 %v1817
    %v2090 = vunpack.c.l.b16 %v1818
    %v2091 = vunpack.c.l.b16 %v1819
    %v2092 = vunpack.c.h.b16 %v1819
    %v2093 = vunpack.c.l.b16 %v1820
    %v2094 = vunpack.c.l.b16 %v1821
    %v2095 = vunpack.c.h.b16 %v1821
    %v2096 = vunpack.c.l.b16 %v1822
    %v2097 = vunpack.c.l.b16 %v1823
    %v2098 = vunpack.c.h.b16 %v1823
    %v2099 = vunpack.c.l.b16 %v1824
    %v2100 = vunpack.c.l.b16 %v1825
    %v2101 = vunpack.c.h.b16 %v1825
    %v2102 = vunpack.c.l.b16 %v1826
    %v2103 = vunpack.c.l.b16 %v1827
    %v2104 = vunpack.c.h.b16 %v1827
    %v2105 = vunpack.c.l.b16 %v1828
    %v2106 = vunpack.c.l.b16 %v1829
    %v2107 = vunpack.c.h.b16 %v1829
    %v2108 = vunpack.c.l.b16 %v1830
    %v2109 = vunpack.c.l.b16 %v1831
    %v2110 = vunpack.c.h.b16 %v1831
    %v2111 = vunpack.c.l.b16 %v1832
    %v2112 = vunpack.c.l.b16 %v1833
    %v2113 = vunpack.c.h.b16 %v1833
    %v2114 = vunpack.c.l.b16 %v1834
    %v2115 = vunpack.c.l.b16 %v1835
    %v2116 = vunpack.c.h.b16 %v1835
    %v2117 = vunpack.c.l.b16 %v1836
    %v2118 = vunpack.c.l.b16 %v1837
    %v2119 = vunpack.c.h.b16 %v1837
    %v2120 = vunpack.c.l.b16 %v1838
    %v2121 = vunpack.c.l.b16 %v1839
    %v2122 = vunpack.c.h.b16 %v1839
    %v2123 = vunpack.c.l.b16 %v1840
    %v2124 = vunpack.c.l.b16 %v1841
    %v2125 = vunpack.c.h.b16 %v1841
    %v2126 = vunpack.c.l.b16 %v1842
    %v2127 = vunpack.c.l.b16 %v1843
    %v2128 = vunpack.c.h.b16 %v1843
    %v2129 = vunpack.c.l.b16 %v1844
    %v2130 = vunpack.c.l.b16 %v1845
    %v2131 = vunpack.c.h.b16 %v1845
    %v2132 = vunpack.c.l.b16 %v1846
    %v2133 = vunpack.c.l.b16 %v1847
    %v2134 = vunpack.c.h.b16 %v1847
    %v2135 = vunpack.c.l.b16 %v1848
    %v2136 = vunpack.c.l.b16 %v1849
    %v2137 = vunpack.c.h.b16 %v1849
    %v2138 = vunpack.c.l.b16 %v1850
    %v2139 = vunpack.c.l.b16 %v1851
    %v2140 = vunpack.c.h.b16 %v1851
    %v2141 = vunpack.c.l.b16 %v1852
    %v2142 = vunpack.c.l.b16 %v1853
    %v2143 = vunpack.c.h.b16 %v1853
    %v2144 = vunpack.c.l.b16 %v1854
    %v2145 = vunpack.c.l.b16 %v1855
    %v2146 = vunpack.c.h.b16 %v1855
    %v2147 = vunpack.c.l.b16 %v1856
    %v2148 = vunpack.c.l.b16 %v1857
    %v2149 = vunpack.c.h.b16 %v1857
    %v2150 = vunpack.c.l.b16 %v1858
    %v2151 = vunpack.c.l.b16 %v1859
    %v2152 = vunpack.c.h.b16 %v1859
    %v2153 = vunpack.c.l.b16 %v1860
    %v2154 = vunpack.c.l.b16 %v1861
    %v2155 = vunpack.c.h.b16 %v1861
    %v2156 = vunpack.c.l.b16 %v1862
    %v2157 = vunpack.c.l.b16 %v1863
    %v2158 = vunpack.c.h.b16 %v1863
    %v2159 = vunpack.c.l.b16 %v1864
    %v2160 = vunpack.c.l.b16 %v1865
    %v2161 = vunpack.c.h.b16 %v1865
    %v2162 = vunpack.c.l.b16 %v1866
    %v2163 = vunpack.c.l.b16 %v1867
    %v2164 = vunpack.c.h.b16 %v1867
    %v2165 = vunpack.c.l.b16 %v1868
    %v2166 = vunpack.c.l.b16 %v1869
    %v2167 = vunpack.c.h.b16 %v1869
    %v2168 = vunpack.c.l.b16 %v1870
    %v2169 = vunpack.c.l.b16 %v1871
    %v2170 = vunpack.c.h.b16 %v1871
    %v2171 = vunpack.c.l.b16 %v1872
    %v2172 = vunpack.c.l.b16 %v1873
    %v2173 = vunpack.c.h.b16 %v1873
    %v2174 = vunpack.c.l.b16 %v1874
    %v2175 = vunpack.c.l.b16 %v1875
    %v2176 = vunpack.c.h.b16 %v1875
    %v2177 = vunpack.c.l.b16 %v1876
    %v2178 = vunpack.c.l.b16 %v1877
    %v2179 = vunpack.c.h.b16 %v1877
    %v2180 = vunpack.c.l.b16 %v1878
    %v2181 = vunpack.c.l.b16 %v1879
    %v2182 = vunpack.c.h.b16 %v1879
    %v2183 = vunpack.c.l.b16 %v1880
    %v2184 = vunpack.c.l.b16 %v1881
    %v2185 = vunpack.c.h.b16 %v1881
    %v2186 = vunpack.c.l.b16 %v1882
    %v2187 = vunpack.c.l.b16 %v1883
    %v2188 = vunpack.c.h.b16 %v1883
    %v2189 = vunpack.c.l.b16 %v1884
    %v2190 = vunpack.c.l.b16 %v1885
    %v2191 = vunpack.c.h.b16 %v1885
    %v2192 = vunpack.c.l.b16 %v1886
    %v2193 = vunpack.c.l.b16 %v1887
    %v2194 = vunpack.c.h.b16 %v1887
    %v2195 = vunpack.c.l.b16 %v1888
    %v2196 = vunpack.c.l.b16 %v1889
    %v2197 = vunpack.c.h.b16 %v1889
    %v2198 = vunpack.c.l.b16 %v1890
    %v2199 = vunpack.c.l.b16 %v1891
    %v2200 = vunpack.c.h.b16 %v1891
    %v2201 = vunpack.c.l.b16 %v1892
    %v2202 = vunpack.c.l.b16 %v1893
    %v2203 = vunpack.c.h.b16 %v1893
    %v2204 = vunpack.c.l.b16 %v1894
    %v2205 = vunpack.c.l.b16 %v1895
    %v2206 = vunpack.c.h.b16 %v1895
    %v2207 = vunpack.c.l.b16 %v1896
    %v2208 = vunpack.c.l.b16 %v1897
    %v2209 = vunpack.c.h.b16 %v1897
    %v2210 = vunpack.c.l.b16 %v1898
    %v2211 = vunpack.c.l.b16 %v1899
    %v2212 = vunpack.c.h.b16 %v1899
    %v2213 = vunpack.c.l.b16 %v1900
    %v2214 = vunpack.c.l.b16 %v1901
    %v2215 = vunpack.c.h.b16 %v1901
    %v2216 = vunpack.c.l.b16 %v1902
    %v2217 = vunpack.c.l.b16 %v1903
    %v2218 = vunpack.c.h.b16 %v1903
    %v2219 = vunpack.c.l.b16 %v1904
    %v2220 = vunpack.c.l.b16 %v1905
    %v2221 = vunpack.c.h.b16 %v1905
    %v2222 = vunpack.c.l.b16 %v1906
    %v2223 = vunpack.c.l.b16 %v1907
    %v2224 = vunpack.c.h.b16 %v1907
    %v2225 = vunpack.c.l.b16 %v1908
    %v2226 = vunpack.c.l.b16 %v1909
    %v2227 = vunpack.c.h.b16 %v1909
    %v2228 = vunpack.c.l.b16 %v1910
    %v2229 = vunpack.c.l.b16 %v1911
    %v2230 = vunpack.c.h.b16 %v1911
    %v2231 = vunpack.c.l.b16 %v1912
    %v2232 = vunpack.c.l.b16 %v1913
    %v2233 = vunpack.c.h.b16 %v1913
    %v2234 = vunpack.c.l.b16 %v1914
    %v2235 = vpack.c.b16 %v2046, %v2043
    %v2236 = vpack.c.b16 %v2047, %v2044
    %v2237 = vpack.c.b16 %v2048, %v2045
    %v2238 = vpack.c.b16 %v2052, %v2049
    %v2239 = vpack.c.b16 %v2053, %v2050
    %v2240 = vpack.c.b16 %v2054, %v2051
    %v2241 = vpack.c.b16 %v2058, %v2055
    %v2242 = vpack.c.b16 %v2059, %v2056
    %v2243 = vpack.c.b16 %v2060, %v2057
    %v2244 = vpack.c.b16 %v2064, %v2061
    %v2245 = vpack.c.b16 %v2065, %v2062
    %v2246 = vpack.c.b16 %v2066, %v2063
    %v2247 = vpack.c.b16 %v2070, %v2067
    %v2248 = vpack.c.b16 %v2071, %v2068
    %v2249 = vpack.c.b16 %v2072, %v2069
    %v2250 = vpack.c.b16 %v2076, %v2073
    %v2251 = vpack.c.b16 %v2077, %v2074
    %v2252 = vpack.c.b16 %v2078, %v2075
    %v2253 = vpack.c.b16 %v2082, %v2079
    %v2254 = vpack.c.b16 %v2083, %v2080
    %v2255 = vpack.c.b16 %v2084, %v2081
    %v2256 = vpack.c.b16 %v2088, %v2085
    %v2257 = vpack.c.b16 %v2089, %v2086
    %v2258 = vpack.c.b16 %v2090, %v2087
    %v2259 = vpack.c.b16 %v2094, %v2091
    %v2260 = vpack.c.b16 %v2095, %v2092
    %v2261 = vpack.c.b16 %v2096, %v2093
    %v2262 = vpack.c.b16 %v2100, %v2097
    %v2263 = vpack.c.b16 %v2101, %v2098
    %v2264 = vpack.c.b16 %v2102, %v2099
    %v2265 = vpack.c.b16 %v2106, %v2103
    %v2266 = vpack.c.b16 %v2107, %v2104
    %v2267 = vpack.c.b16 %v2108, %v2105
    %v2268 = vpack.c.b16 %v2112, %v2109
    %v2269 = vpack.c.b16 %v2113, %v2110
    %v2270 = vpack.c.b16 %v2114, %v2111
    %v2271 = vpack.c.b16 %v2118, %v2115
    %v2272 = vpack.c.b16 %v2119, %v2116
    %v2273 = vpack.c.b16 %v2120, %v2117
    %v2274 = vpack.c.b16 %v2124, %v2121
    %v2275 = vpack.c.b16 %v2125, %v2122
    %v2276 = vpack.c.b16 %v2126, %v2123
    %v2277 = vpack.c.b16 %v2130, %v2127
    %v2278 = vpack.c.b16 %v2131, %v2128
    %v2279 = vpack.c.b16 %v2132, %v2129
    %v2280 = vpack.c.b16 %v2136, %v2133
    %v2281 = vpack.c.b16 %v2137, %v2134
    %v2282 = vpack.c.b16 %v2138, %v2135
    %v2283 = vpack.c.b16 %v2142, %v2139
    %v2284 = vpack.c.b16 %v2143, %v2140
    %v2285 = vpack.c.b16 %v2144, %v2141
    %v2286 = vpack.c.b16 %v2148, %v2145
    %v2287 = vpack.c.b16 %v2149, %v2146
    %v2288 = vpack.c.b16 %v2150, %v2147
    %v2289 = vpack.c.b16 %v2154, %v2151
    %v2290 = vpack.c.b16 %v2155, %v2152
    %v2291 = vpack.c.b16 %v2156, %v2153
    %v2292 = vpack.c.b16 %v2160, %v2157
    %v2293 = vpack.c.b16 %v2161, %v2158
    %v2294 = vpack.c.b16 %v2162, %v2159
    %v2295 = vpack.c.b16 %v2166, %v2163
    %v2296 = vpack.c.b16 %v2167, %v2164
    %v2297 = vpack.c.b16 %v2168, %v2165
    %v2298 = vpack.c.b16 %v2172, %v2169
    %v2299 = vpack.c.b16 %v2173, %v2170
    %v2300 = vpack.c.b16 %v2174, %v2171
    %v2301 = vpack.c.b16 %v2178, %v2175
    %v2302 = vpack.c.b16 %v2179, %v2176
    %v2303 = vpack.c.b16 %v2180, %v2177
    %v2304 = vpack.c.b16 %v2184, %v2181
    %v2305 = vpack.c.b16 %v2185, %v2182
    %v2306 = vpack.c.b16 %v2186, %v2183
    %v2307 = vpack.c.b16 %v2190, %v2187
    %v2308 = vpack.c.b16 %v2191, %v2188
    %v2309 = vpack.c.b16 %v2192, %v2189
    %v2310 = vpack.c.b16 %v2196, %v2193
    %v2311 = vpack.c.b16 %v2197, %v2194
    %v2312 = vpack.c.b16 %v2198, %v2195
    %v2313 = vpack.c.b16 %v2202, %v2199
    %v2314 = vpack.c.b16 %v2203, %v2200
    %v2315 = vpack.c.b16 %v2204, %v2201
    %v2316 = vpack.c.b16 %v2208, %v2205
    %v2317 = vpack.c.b16 %v2209, %v2206
    %v2318 = vpack.c.b16 %v2210, %v2207
    %v2319 = vpack.c.b16 %v2214, %v2211
    %v2320 = vpack.c.b16 %v2215, %v2212
    %v2321 = vpack.c.b16 %v2216, %v2213
    %v2322 = vpack.c.b16 %v2220, %v2217
    %v2323 = vpack.c.b16 %v2221, %v2218
    %v2324 = vpack.c.b16 %v2222, %v2219
    %v2325 = vpack.c.b16 %v2226, %v2223
    %v2326 = vpack.c.b16 %v2227, %v2224
    %v2327 = vpack.c.b16 %v2228, %v2225
    %v2328 = vpack.c.b16 %v2232, %v2229
    %v2329 = vpack.c.b16 %v2233, %v2230
    %v2330 = vpack.c.b16 %v2234, %v2231
    %2427 = vmatprep.subr.bf16.mxu0 %v2236
    %2428 = vmatpush1.bf16.msra.mxu0 %v2235
    %2429 = vmatprep.subr.bf16.mxu0 %v2239
    %2430 = vmatpush1.bf16.msra.mxu0 %v2238
    %2431 = vmatprep.subr.bf16.mxu0 %v2242
    %2432 = vmatpush1.bf16.msra.mxu0 %v2241
    %2433 = vmatprep.subr.bf16.mxu0 %v2245
    %2434 = vmatpush1.bf16.msra.mxu0 %v2244
    %2435 = vmatprep.subr.bf16.mxu0 %v2248
    %2436 = vmatpush1.bf16.msra.mxu0 %v2247
    %2437 = vmatprep.subr.bf16.mxu0 %v2251
    %2438 = vmatpush1.bf16.msra.mxu0 %v2250
    %2439 = vmatprep.subr.bf16.mxu0 %v2254
    %2440 = vmatpush1.bf16.msra.mxu0 %v2253
    %2441 = vmatprep.subr.bf16.mxu0 %v2257
    %2442 = vmatpush1.bf16.msra.mxu0 %v2256
    %2443 = vmatprep.subr.bf16.mxu0 %v2260
    %2444 = vmatpush1.bf16.msra.mxu0 %v2259
    %2445 = vmatprep.subr.bf16.mxu0 %v2263
    %2446 = vmatpush1.bf16.msra.mxu0 %v2262
    %2447 = vmatprep.subr.bf16.mxu0 %v2266
    %2448 = vmatpush1.bf16.msra.mxu0 %v2265
    %2449 = vmatprep.subr.bf16.mxu0 %v2269
    %2450 = vmatpush1.bf16.msra.mxu0 %v2268
    %2451 = vmatprep.subr.bf16.mxu0 %v2272
    %2452 = vmatpush1.bf16.msra.mxu0 %v2271
    %2453 = vmatprep.subr.bf16.mxu0 %v2275
    %2454 = vmatpush1.bf16.msra.mxu0 %v2274
    %2455 = vmatprep.subr.bf16.mxu0 %v2278
    %2456 = vmatpush1.bf16.msra.mxu0 %v2277
    %2457 = vmatprep.subr.bf16.mxu0 %v2281
    %2458 = vmatpush1.bf16.msra.mxu0 %v2280
    %2459 = vmatprep.mubr.bf16.mxu0 %v1784
    %2460 = vmatmul.mubr.bf16.gmra.mrb[0].mxu0 %v1783
    %v2461 = vpop.f32.mrb[0].mxu0
    %v2462 = vadd.f32 0.0, %v2461
    %v2463 = vpop.f32.mrb[0].mxu0
    %v2464 = vadd.f32 0.0, %v2463
    %v2465 = vpop.f32.mrb[0].mxu0
    %v2466 = vadd.f32 0.0, %v2465
    %v2467 = vpop.f32.mrb[0].mxu0
    %v2468 = vadd.f32 0.0, %v2467
    %2469 = vdwg.mxu0
    %2470 = vmatprep.subr.bf16.mxu0 %v2284
    %2471 = vmatpush1.bf16.msra.mxu0 %v2283
    %2472 = vmatprep.subr.bf16.mxu0 %v2287
    %2473 = vmatpush1.bf16.msra.mxu0 %v2286
    %2474 = vmatprep.subr.bf16.mxu0 %v2290
    %2475 = vmatpush1.bf16.msra.mxu0 %v2289
    %2476 = vmatprep.subr.bf16.mxu0 %v2293
    %2477 = vmatpush1.bf16.msra.mxu0 %v2292
    %2478 = vmatprep.subr.bf16.mxu0 %v2296
    %2479 = vmatpush1.bf16.msra.mxu0 %v2295
    %2480 = vmatprep.subr.bf16.mxu0 %v2299
    %2481 = vmatpush1.bf16.msra.mxu0 %v2298
    %2482 = vmatprep.subr.bf16.mxu0 %v2302
    %2483 = vmatpush1.bf16.msra.mxu0 %v2301
    %2484 = vmatprep.subr.bf16.mxu0 %v2305
    %2485 = vmatpush1.bf16.msra.mxu0 %v2304
    %2486 = vmatprep.subr.bf16.mxu0 %v2308
    %2487 = vmatpush1.bf16.msra.mxu0 %v2307
    %2488 = vmatprep.subr.bf16.mxu0 %v2311
    %2489 = vmatpush1.bf16.msra.mxu0 %v2310
    %2490 = vmatprep.subr.bf16.mxu0 %v2314
    %2491 = vmatpush1.bf16.msra.mxu0 %v2313
    %2492 = vmatprep.subr.bf16.mxu0 %v2317
    %2493 = vmatpush1.bf16.msra.mxu0 %v2316
    %2494 = vmatprep.subr.bf16.mxu0 %v2320
    %2495 = vmatpush1.bf16.msra.mxu0 %v2319
    %2496 = vmatprep.subr.bf16.mxu0 %v2323
    %2497 = vmatpush1.bf16.msra.mxu0 %v2322
    %2498 = vmatprep.subr.bf16.mxu0 %v2326
    %2499 = vmatpush1.bf16.msra.mxu0 %v2325
    %2500 = vmatprep.subr.bf16.mxu0 %v2329
    %2501 = vmatpush1.bf16.msra.mxu0 %v2328
    %2502 = vmatprep.mubr.bf16.mxu0 %v1786
    %2503 = vmatmul.mubr.bf16.gmra.mrb[0].mxu0 %v1785
    %v2504 = vpop.f32.mrb[0].mxu0
    %v2505 = vadd.f32 %v2462, %v2504
    %v2506 = vpop.f32.mrb[0].mxu0
    %v2507 = vadd.f32 %v2464, %v2506
    %v2508 = vpop.f32.mrb[0].mxu0
    %v2509 = vadd.f32 %v2466, %v2508
    %v2510 = vpop.f32.mrb[0].mxu0
    %v2511 = vadd.f32 %v2468, %v2510
    %2512 = vdwg.mxu0
    %2513 = vmatprep.subr.bf16.mxu0 0
    %2514 = vmatpush1.bf16.msra.mxu0 %v2237
    %2515 = vmatprep.subr.bf16.mxu0 0
    %2516 = vmatpush1.bf16.msra.mxu0 %v2240
    %2517 = vmatprep.subr.bf16.mxu0 0
    %2518 = vmatpush1.bf16.msra.mxu0 %v2243
    %2519 = vmatprep.subr.bf16.mxu0 0
    %2520 = vmatpush1.bf16.msra.mxu0 %v2246
    %2521 = vmatprep.subr.bf16.mxu0 0
    %2522 = vmatpush1.bf16.msra.mxu0 %v2249
    %2523 = vmatprep.subr.bf16.mxu0 0
    %2524 = vmatpush1.bf16.msra.mxu0 %v2252
    %2525 = vmatprep.subr.bf16.mxu0 0
    %2526 = vmatpush1.bf16.msra.mxu0 %v2255
    %2527 = vmatprep.subr.bf16.mxu0 0
    %2528 = vmatpush1.bf16.msra.mxu0 %v2258
    %2529 = vmatprep.subr.bf16.mxu0 0
    %2530 = vmatpush1.bf16.msra.mxu0 %v2261
    %2531 = vmatprep.subr.bf16.mxu0 0
    %2532 = vmatpush1.bf16.msra.mxu0 %v2264
    %2533 = vmatprep.subr.bf16.mxu0 0
    %2534 = vmatpush1.bf16.msra.mxu0 %v2267
    %2535 = vmatprep.subr.bf16.mxu0 0
    %2536 = vmatpush1.bf16.msra.mxu0 %v2270
    %2537 = vmatprep.subr.bf16.mxu0 0
    %2538 = vmatpush1.bf16.msra.mxu0 %v2273
    %2539 = vmatprep.subr.bf16.mxu0 0
    %2540 = vmatpush1.bf16.msra.mxu0 %v2276
    %2541 = vmatprep.subr.bf16.mxu0 0
    %2542 = vmatpush1.bf16.msra.mxu0 %v2279
    %2543 = vmatprep.subr.bf16.mxu0 0
    %2544 = vmatpush1.bf16.msra.mxu0 %v2282
    %2545 = vmatprep.mubr.bf16.mxu0 %v1784
    %2546 = vmatmul.mubr.bf16.gmra.mrb[0].mxu0 %v1783
    %v2547 = vpop.f32.mrb[0].mxu0
    %v2548 = vadd.f32 0.0, %v2547
    %v2549 = vpop.f32.mrb[0].mxu0
    %v2550 = vpop.f32.mrb[0].mxu0
    %v2551 = vadd.f32 0.0, %v2550
    %v2552 = vpop.f32.mrb[0].mxu0
    %2553 = vdwg.mxu0
    %2554 = vmatprep.subr.bf16.mxu0 0
    %2555 = vmatpush1.bf16.msra.mxu0 %v2285
    %2556 = vmatprep.subr.bf16.mxu0 0
    %2557 = vmatpush1.bf16.msra.mxu0 %v2288
    %2558 = vmatprep.subr.bf16.mxu0 0
    %2559 = vmatpush1.bf16.msra.mxu0 %v2291
    %2560 = vmatprep.subr.bf16.mxu0 0
    %2561 = vmatpush1.bf16.msra.mxu0 %v2294
    %2562 = vmatprep.subr.bf16.mxu0 0
    %2563 = vmatpush1.bf16.msra.mxu0 %v2297
    %2564 = vmatprep.subr.bf16.mxu0 0
    %2565 = vmatpush1.bf16.msra.mxu0 %v2300
    %2566 = vmatprep.subr.bf16.mxu0 0
    %2567 = vmatpush1.bf16.msra.mxu0 %v2303
    %2568 = vmatprep.subr.bf16.mxu0 0
    %2569 = vmatpush1.bf16.msra.mxu0 %v2306
    %2570 = vmatprep.subr.bf16.mxu0 0
    %2571 = vmatpush1.bf16.msra.mxu0 %v2309
    %2572 = vmatprep.subr.bf16.mxu0 0
    %2573 = vmatpush1.bf16.msra.mxu0 %v2312
    %2574 = vmatprep.subr.bf16.mxu0 0
    %2575 = vmatpush1.bf16.msra.mxu0 %v2315
    %2576 = vmatprep.subr.bf16.mxu0 0
    %2577 = vmatpush1.bf16.msra.mxu0 %v2318
    %2578 = vmatprep.subr.bf16.mxu0 0
    %2579 = vmatpush1.bf16.msra.mxu0 %v2321
    %2580 = vmatprep.subr.bf16.mxu0 0
    %2581 = vmatpush1.bf16.msra.mxu0 %v2324
    %2582 = vmatprep.subr.bf16.mxu0 0
    %2583 = vmatpush1.bf16.msra.mxu0 %v2327
    %2584 = vmatprep.subr.bf16.mxu0 0
    %2585 = vmatpush1.bf16.msra.mxu0 %v2330
    %2586 = vmatprep.mubr.bf16.mxu0 %v1786
    %2587 = vmatmul.mubr.bf16.gmra.mrb[0].mxu0 %v1785
    %v2588 = vpop.f32.mrb[0].mxu0
    %v2589 = vadd.f32 %v2548, %v2588
    %v2590 = vpop.f32.mrb[0].mxu0
    %v2591 = vpop.f32.mrb[0].mxu0
    %v2592 = vadd.f32 %v2551, %v2591
    %v2593 = vpop.f32.mrb[0].mxu0
    %2594 = vdwg.mxu0
    %v2723 = vunpack.c.l.b16 %v877
    %v2724 = vunpack.c.h.b16 %v877
    %v2725 = vunpack.c.l.b16 %v878
    %v2726 = vunpack.c.l.b16 %v879
    %v2727 = vunpack.c.h.b16 %v879
    %v2728 = vunpack.c.l.b16 %v880
    %v2729 = vunpack.c.l.b16 %v881
    %v2730 = vunpack.c.h.b16 %v881
    %v2731 = vunpack.c.l.b16 %v882
    %v2732 = vunpack.c.l.b16 %v883
    %v2733 = vunpack.c.h.b16 %v883
    %v2734 = vunpack.c.l.b16 %v884
    %v2735 = vunpack.c.l.b16 %v885
    %v2736 = vunpack.c.h.b16 %v885
    %v2737 = vunpack.c.l.b16 %v886
    %v2738 = vunpack.c.l.b16 %v887
    %v2739 = vunpack.c.h.b16 %v887
    %v2740 = vunpack.c.l.b16 %v888
    %v2741 = vunpack.c.l.b16 %v889
    %v2742 = vunpack.c.h.b16 %v889
    %v2743 = vunpack.c.l.b16 %v890
    %v2744 = vunpack.c.l.b16 %v891
    %v2745 = vunpack.c.h.b16 %v891
    %v2746 = vunpack.c.l.b16 %v892
    %v2747 = vunpack.c.l.b16 %v893
    %v2748 = vunpack.c.h.b16 %v893
    %v2749 = vunpack.c.l.b16 %v894
    %v2750 = vunpack.c.l.b16 %v895
    %v2751 = vunpack.c.h.b16 %v895
    %v2752 = vunpack.c.l.b16 %v896
    %v2753 = vunpack.c.l.b16 %v897
    %v2754 = vunpack.c.h.b16 %v897
    %v2755 = vunpack.c.l.b16 %v898
    %v2756 = vunpack.c.l.b16 %v899
    %v2757 = vunpack.c.h.b16 %v899
    %v2758 = vunpack.c.l.b16 %v900
    %v2759 = vunpack.c.l.b16 %v901
    %v2760 = vunpack.c.h.b16 %v901
    %v2761 = vunpack.c.l.b16 %v902
    %v2762 = vunpack.c.l.b16 %v903
    %v2763 = vunpack.c.h.b16 %v903
    %v2764 = vunpack.c.l.b16 %v904
    %v2765 = vunpack.c.l.b16 %v905
    %v2766 = vunpack.c.h.b16 %v905
    %v2767 = vunpack.c.l.b16 %v906
    %v2768 = vunpack.c.l.b16 %v907
    %v2769 = vunpack.c.h.b16 %v907
    %v2770 = vunpack.c.l.b16 %v908
    %v2771 = vunpack.c.l.b16 %v909
    %v2772 = vunpack.c.h.b16 %v909
    %v2773 = vunpack.c.l.b16 %v910
    %v2774 = vunpack.c.l.b16 %v911
    %v2775 = vunpack.c.h.b16 %v911
    %v2776 = vunpack.c.l.b16 %v912
    %v2777 = vunpack.c.l.b16 %v913
    %v2778 = vunpack.c.h.b16 %v913
    %v2779 = vunpack.c.l.b16 %v914
    %v2780 = vunpack.c.l.b16 %v915
    %v2781 = vunpack.c.h.b16 %v915
    %v2782 = vunpack.c.l.b16 %v916
    %v2783 = vunpack.c.l.b16 %v917
    %v2784 = vunpack.c.h.b16 %v917
    %v2785 = vunpack.c.l.b16 %v918
    %v2786 = vunpack.c.l.b16 %v919
    %v2787 = vunpack.c.h.b16 %v919
    %v2788 = vunpack.c.l.b16 %v920
    %v2789 = vunpack.c.l.b16 %v921
    %v2790 = vunpack.c.h.b16 %v921
    %v2791 = vunpack.c.l.b16 %v922
    %v2792 = vunpack.c.l.b16 %v923
    %v2793 = vunpack.c.h.b16 %v923
    %v2794 = vunpack.c.l.b16 %v924
    %v2795 = vunpack.c.l.b16 %v925
    %v2796 = vunpack.c.h.b16 %v925
    %v2797 = vunpack.c.l.b16 %v926
    %v2798 = vunpack.c.l.b16 %v927
    %v2799 = vunpack.c.h.b16 %v927
    %v2800 = vunpack.c.l.b16 %v928
    %v2801 = vunpack.c.l.b16 %v929
    %v2802 = vunpack.c.h.b16 %v929
    %v2803 = vunpack.c.l.b16 %v930
    %v2804 = vunpack.c.l.b16 %v931
    %v2805 = vunpack.c.h.b16 %v931
    %v2806 = vunpack.c.l.b16 %v932
    %v2807 = vunpack.c.l.b16 %v933
    %v2808 = vunpack.c.h.b16 %v933
    %v2809 = vunpack.c.l.b16 %v934
    %v2810 = vunpack.c.l.b16 %v935
    %v2811 = vunpack.c.h.b16 %v935
    %v2812 = vunpack.c.l.b16 %v936
    %v2813 = vunpack.c.l.b16 %v937
    %v2814 = vunpack.c.h.b16 %v937
    %v2815 = vunpack.c.l.b16 %v938
    %v2816 = vunpack.c.l.b16 %v939
    %v2817 = vunpack.c.h.b16 %v939
    %v2818 = vunpack.c.l.b16 %v940
    %v2819 = vunpack.c.l.b16 %v941
    %v2820 = vunpack.c.h.b16 %v941
    %v2821 = vunpack.c.l.b16 %v942
    %v2822 = vunpack.c.l.b16 %v943
    %v2823 = vunpack.c.h.b16 %v943
    %v2824 = vunpack.c.l.b16 %v944
    %v2825 = vunpack.c.l.b16 %v945
    %v2826 = vunpack.c.h.b16 %v945
    %v2827 = vunpack.c.l.b16 %v946
    %v2828 = vunpack.c.l.b16 %v947
    %v2829 = vunpack.c.h.b16 %v947
    %v2830 = vunpack.c.l.b16 %v948
    %v2831 = vunpack.c.l.b16 %v949
    %v2832 = vunpack.c.h.b16 %v949
    %v2833 = vunpack.c.l.b16 %v950
    %v2834 = vunpack.c.l.b16 %v951
    %v2835 = vunpack.c.h.b16 %v951
    %v2836 = vunpack.c.l.b16 %v952
    %v2837 = vunpack.c.l.b16 %v953
    %v2838 = vunpack.c.h.b16 %v953
    %v2839 = vunpack.c.l.b16 %v954
    %v2840 = vunpack.c.l.b16 %v955
    %v2841 = vunpack.c.h.b16 %v955
    %v2842 = vunpack.c.l.b16 %v956
    %v2843 = vunpack.c.l.b16 %v957
    %v2844 = vunpack.c.h.b16 %v957
    %v2845 = vunpack.c.l.b16 %v958
    %v2846 = vunpack.c.l.b16 %v959
    %v2847 = vunpack.c.h.b16 %v959
    %v2848 = vunpack.c.l.b16 %v960
    %v2849 = vunpack.c.l.b16 %v961
    %v2850 = vunpack.c.h.b16 %v961
    %v2851 = vunpack.c.l.b16 %v962
    %v2852 = vunpack.c.l.b16 %v963
    %v2853 = vunpack.c.h.b16 %v963
    %v2854 = vunpack.c.l.b16 %v964
    %v2855 = vunpack.c.l.b16 %v965
    %v2856 = vunpack.c.h.b16 %v965
    %v2857 = vunpack.c.l.b16 %v966
    %v2858 = vunpack.c.l.b16 %v967
    %v2859 = vunpack.c.h.b16 %v967
    %v2860 = vunpack.c.l.b16 %v968
    %v2861 = vunpack.c.l.b16 %v969
    %v2862 = vunpack.c.h.b16 %v969
    %v2863 = vunpack.c.l.b16 %v970
    %v2864 = vunpack.c.l.b16 %v971
    %v2865 = vunpack.c.h.b16 %v971
    %v2866 = vunpack.c.l.b16 %v972
    %v2867 = vunpack.c.l.b16 %v973
    %v2868 = vunpack.c.h.b16 %v973
    %v2869 = vunpack.c.l.b16 %v974
    %v2870 = vunpack.c.l.b16 %v975
    %v2871 = vunpack.c.h.b16 %v975
    %v2872 = vunpack.c.l.b16 %v976
    %v2873 = vunpack.c.l.b16 %v977
    %v2874 = vunpack.c.h.b16 %v977
    %v2875 = vunpack.c.l.b16 %v978
    %v2876 = vunpack.c.l.b16 %v979
    %v2877 = vunpack.c.h.b16 %v979
    %v2878 = vunpack.c.l.b16 %v980
    %v2879 = vunpack.c.l.b16 %v981
    %v2880 = vunpack.c.h.b16 %v981
    %v2881 = vunpack.c.l.b16 %v982
    %v2882 = vunpack.c.l.b16 %v983
    %v2883 = vunpack.c.h.b16 %v983
    %v2884 = vunpack.c.l.b16 %v984
    %v2885 = vunpack.c.l.b16 %v985
    %v2886 = vunpack.c.h.b16 %v985
    %v2887 = vunpack.c.l.b16 %v986
    %v2888 = vunpack.c.l.b16 %v987
    %v2889 = vunpack.c.h.b16 %v987
    %v2890 = vunpack.c.l.b16 %v988
    %v2891 = vunpack.c.l.b16 %v989
    %v2892 = vunpack.c.h.b16 %v989
    %v2893 = vunpack.c.l.b16 %v990
    %v2894 = vunpack.c.l.b16 %v991
    %v2895 = vunpack.c.h.b16 %v991
    %v2896 = vunpack.c.l.b16 %v992
    %v2897 = vunpack.c.l.b16 %v993
    %v2898 = vunpack.c.h.b16 %v993
    %v2899 = vunpack.c.l.b16 %v994
    %v2900 = vunpack.c.l.b16 %v995
    %v2901 = vunpack.c.h.b16 %v995
    %v2902 = vunpack.c.l.b16 %v996
    %v2903 = vunpack.c.l.b16 %v997
    %v2904 = vunpack.c.h.b16 %v997
    %v2905 = vunpack.c.l.b16 %v998
    %v2906 = vunpack.c.l.b16 %v999
    %v2907 = vunpack.c.h.b16 %v999
    %v2908 = vunpack.c.l.b16 %v1000
    %v2909 = vunpack.c.l.b16 %v1001
    %v2910 = vunpack.c.h.b16 %v1001
    %v2911 = vunpack.c.l.b16 %v1002
    %v2912 = vunpack.c.l.b16 %v1003
    %v2913 = vunpack.c.h.b16 %v1003
    %v2914 = vunpack.c.l.b16 %v1004
    %v2915 = vpack.c.b16 %v2726, %v2723
    %v2916 = vpack.c.b16 %v2727, %v2724
    %v2917 = vpack.c.b16 %v2728, %v2725
    %v2918 = vpack.c.b16 %v2732, %v2729
    %v2919 = vpack.c.b16 %v2733, %v2730
    %v2920 = vpack.c.b16 %v2734, %v2731
    %v2921 = vpack.c.b16 %v2738, %v2735
    %v2922 = vpack.c.b16 %v2739, %v2736
    %v2923 = vpack.c.b16 %v2740, %v2737
    %v2924 = vpack.c.b16 %v2744, %v2741
    %v2925 = vpack.c.b16 %v2745, %v2742
    %v2926 = vpack.c.b16 %v2746, %v2743
    %v2927 = vpack.c.b16 %v2750, %v2747
    %v2928 = vpack.c.b16 %v2751, %v2748
    %v2929 = vpack.c.b16 %v2752, %v2749
    %v2930 = vpack.c.b16 %v2756, %v2753
    %v2931 = vpack.c.b16 %v2757, %v2754
    %v2932 = vpack.c.b16 %v2758, %v2755
    %v2933 = vpack.c.b16 %v2762, %v2759
    %v2934 = vpack.c.b16 %v2763, %v2760
    %v2935 = vpack.c.b16 %v2764, %v2761
    %v2936 = vpack.c.b16 %v2768, %v2765
    %v2937 = vpack.c.b16 %v2769, %v2766
    %v2938 = vpack.c.b16 %v2770, %v2767
    %v2939 = vpack.c.b16 %v2774, %v2771
    %v2940 = vpack.c.b16 %v2775, %v2772
    %v2941 = vpack.c.b16 %v2776, %v2773
    %v2942 = vpack.c.b16 %v2780, %v2777
    %v2943 = vpack.c.b16 %v2781, %v2778
    %v2944 = vpack.c.b16 %v2782, %v2779
    %v2945 = vpack.c.b16 %v2786, %v2783
    %v2946 = vpack.c.b16 %v2787, %v2784
    %v2947 = vpack.c.b16 %v2788, %v2785
    %v2948 = vpack.c.b16 %v2792, %v2789
    %v2949 = vpack.c.b16 %v2793, %v2790
    %v2950 = vpack.c.b16 %v2794, %v2791
    %v2951 = vpack.c.b16 %v2798, %v2795
    %v2952 = vpack.c.b16 %v2799, %v2796
    %v2953 = vpack.c.b16 %v2800, %v2797
    %v2954 = vpack.c.b16 %v2804, %v2801
    %v2955 = vpack.c.b16 %v2805, %v2802
    %v2956 = vpack.c.b16 %v2806, %v2803
    %v2957 = vpack.c.b16 %v2810, %v2807
    %v2958 = vpack.c.b16 %v2811, %v2808
    %v2959 = vpack.c.b16 %v2812, %v2809
    %v2960 = vpack.c.b16 %v2816, %v2813
    %v2961 = vpack.c.b16 %v2817, %v2814
    %v2962 = vpack.c.b16 %v2818, %v2815
    %v2963 = vpack.c.b16 %v2822, %v2819
    %v2964 = vpack.c.b16 %v2823, %v2820
    %v2965 = vpack.c.b16 %v2824, %v2821
    %v2966 = vpack.c.b16 %v2828, %v2825
    %v2967 = vpack.c.b16 %v2829, %v2826
    %v2968 = vpack.c.b16 %v2830, %v2827
    %v2969 = vpack.c.b16 %v2834, %v2831
    %v2970 = vpack.c.b16 %v2835, %v2832
    %v2971 = vpack.c.b16 %v2836, %v2833
    %v2972 = vpack.c.b16 %v2840, %v2837
    %v2973 = vpack.c.b16 %v2841, %v2838
    %v2974 = vpack.c.b16 %v2842, %v2839
    %v2975 = vpack.c.b16 %v2846, %v2843
    %v2976 = vpack.c.b16 %v2847, %v2844
    %v2977 = vpack.c.b16 %v2848, %v2845
    %v2978 = vpack.c.b16 %v2852, %v2849
    %v2979 = vpack.c.b16 %v2853, %v2850
    %v2980 = vpack.c.b16 %v2854, %v2851
    %v2981 = vpack.c.b16 %v2858, %v2855
    %v2982 = vpack.c.b16 %v2859, %v2856
    %v2983 = vpack.c.b16 %v2860, %v2857
    %v2984 = vpack.c.b16 %v2864, %v2861
    %v2985 = vpack.c.b16 %v2865, %v2862
    %v2986 = vpack.c.b16 %v2866, %v2863
    %v2987 = vpack.c.b16 %v2870, %v2867
    %v2988 = vpack.c.b16 %v2871, %v2868
    %v2989 = vpack.c.b16 %v2872, %v2869
    %v2990 = vpack.c.b16 %v2876, %v2873
    %v2991 = vpack.c.b16 %v2877, %v2874
    %v2992 = vpack.c.b16 %v2878, %v2875
    %v2993 = vpack.c.b16 %v2882, %v2879
    %v2994 = vpack.c.b16 %v2883, %v2880
    %v2995 = vpack.c.b16 %v2884, %v2881
    %v2996 = vpack.c.b16 %v2888, %v2885
    %v2997 = vpack.c.b16 %v2889, %v2886
    %v2998 = vpack.c.b16 %v2890, %v2887
    %v2999 = vpack.c.b16 %v2894, %v2891
    %v3000 = vpack.c.b16 %v2895, %v2892
    %v3001 = vpack.c.b16 %v2896, %v2893
    %v3002 = vpack.c.b16 %v2900, %v2897
    %v3003 = vpack.c.b16 %v2901, %v2898
    %v3004 = vpack.c.b16 %v2902, %v2899
    %v3005 = vpack.c.b16 %v2906, %v2903
    %v3006 = vpack.c.b16 %v2907, %v2904
    %v3007 = vpack.c.b16 %v2908, %v2905
    %v3008 = vpack.c.b16 %v2912, %v2909
    %v3009 = vpack.c.b16 %v2913, %v2910
    %v3010 = vpack.c.b16 %v2914, %v2911
    %3107 = vmatprep.subr.bf16.mxu0 %v2916
    %3108 = vmatpush1.bf16.msra.mxu0 %v2915
    %3109 = vmatprep.subr.bf16.mxu0 %v2919
    %3110 = vmatpush1.bf16.msra.mxu0 %v2918
    %3111 = vmatprep.subr.bf16.mxu0 %v2922
    %3112 = vmatpush1.bf16.msra.mxu0 %v2921
    %3113 = vmatprep.subr.bf16.mxu0 %v2925
    %3114 = vmatpush1.bf16.msra.mxu0 %v2924
    %3115 = vmatprep.subr.bf16.mxu0 %v2928
    %3116 = vmatpush1.bf16.msra.mxu0 %v2927
    %3117 = vmatprep.subr.bf16.mxu0 %v2931
    %3118 = vmatpush1.bf16.msra.mxu0 %v2930
    %3119 = vmatprep.subr.bf16.mxu0 %v2934
    %3120 = vmatpush1.bf16.msra.mxu0 %v2933
    %3121 = vmatprep.subr.bf16.mxu0 %v2937
    %3122 = vmatpush1.bf16.msra.mxu0 %v2936
    %3123 = vmatprep.subr.bf16.mxu0 %v2940
    %3124 = vmatpush1.bf16.msra.mxu0 %v2939
    %3125 = vmatprep.subr.bf16.mxu0 %v2943
    %3126 = vmatpush1.bf16.msra.mxu0 %v2942
    %3127 = vmatprep.subr.bf16.mxu0 %v2946
    %3128 = vmatpush1.bf16.msra.mxu0 %v2945
    %3129 = vmatprep.subr.bf16.mxu0 %v2949
    %3130 = vmatpush1.bf16.msra.mxu0 %v2948
    %3131 = vmatprep.subr.bf16.mxu0 %v2952
    %3132 = vmatpush1.bf16.msra.mxu0 %v2951
    %3133 = vmatprep.subr.bf16.mxu0 %v2955
    %3134 = vmatpush1.bf16.msra.mxu0 %v2954
    %3135 = vmatprep.subr.bf16.mxu0 %v2958
    %3136 = vmatpush1.bf16.msra.mxu0 %v2957
    %3137 = vmatprep.subr.bf16.mxu0 %v2961
    %3138 = vmatpush1.bf16.msra.mxu0 %v2960
    %3139 = vmatprep.mubr.bf16.mxu0 %v874
    %3140 = vmatmul.mubr.bf16.gmra.mrb[0].mxu0 %v873
    %v3141 = vpop.f32.mrb[0].mxu0
    %v3142 = vadd.f32 %v2505, %v3141
    %v3143 = vpop.f32.mrb[0].mxu0
    %v3144 = vadd.f32 %v2507, %v3143
    %v3145 = vpop.f32.mrb[0].mxu0
    %v3146 = vadd.f32 %v2509, %v3145
    %v3147 = vpop.f32.mrb[0].mxu0
    %v3148 = vadd.f32 %v2511, %v3147
    %3149 = vdwg.mxu0
    %3150 = vmatprep.subr.bf16.mxu0 %v2964
    %3151 = vmatpush1.bf16.msra.mxu0 %v2963
    %3152 = vmatprep.subr.bf16.mxu0 %v2967
    %3153 = vmatpush1.bf16.msra.mxu0 %v2966
    %3154 = vmatprep.subr.bf16.mxu0 %v2970
    %3155 = vmatpush1.bf16.msra.mxu0 %v2969
    %3156 = vmatprep.subr.bf16.mxu0 %v2973
    %3157 = vmatpush1.bf16.msra.mxu0 %v2972
    %3158 = vmatprep.subr.bf16.mxu0 %v2976
    %3159 = vmatpush1.bf16.msra.mxu0 %v2975
    %3160 = vmatprep.subr.bf16.mxu0 %v2979
    %3161 = vmatpush1.bf16.msra.mxu0 %v2978
    %3162 = vmatprep.subr.bf16.mxu0 %v2982
    %3163 = vmatpush1.bf16.msra.mxu0 %v2981
    %3164 = vmatprep.subr.bf16.mxu0 %v2985
    %3165 = vmatpush1.bf16.msra.mxu0 %v2984
    %3166 = vmatprep.subr.bf16.mxu0 %v2988
    %3167 = vmatpush1.bf16.msra.mxu0 %v2987
    %3168 = vmatprep.subr.bf16.mxu0 %v2991
    %3169 = vmatpush1.bf16.msra.mxu0 %v2990
    %3170 = vmatprep.subr.bf16.mxu0 %v2994
    %3171 = vmatpush1.bf16.msra.mxu0 %v2993
    %3172 = vmatprep.subr.bf16.mxu0 %v2997
    %3173 = vmatpush1.bf16.msra.mxu0 %v2996
    %3174 = vmatprep.subr.bf16.mxu0 %v3000
    %3175 = vmatpush1.bf16.msra.mxu0 %v2999
    %3176 = vmatprep.subr.bf16.mxu0 %v3003
    %3177 = vmatpush1.bf16.msra.mxu0 %v3002
    %3178 = vmatprep.subr.bf16.mxu0 %v3006
    %3179 = vmatpush1.bf16.msra.mxu0 %v3005
    %3180 = vmatprep.subr.bf16.mxu0 %v3009
    %3181 = vmatpush1.bf16.msra.mxu0 %v3008
    %3182 = vmatprep.mubr.bf16.mxu0 %v876
    %3183 = vmatmul.mubr.bf16.gmra.mrb[0].mxu0 %v875
    %v3184 = vpop.f32.mrb[0].mxu0
    %v3185 = vadd.f32 %v3142, %v3184
    %v3186 = vpop.f32.mrb[0].mxu0
    %v3187 = vadd.f32 %v3144, %v3186
    %v3188 = vpop.f32.mrb[0].mxu0
    %v3189 = vadd.f32 %v3146, %v3188
    %v3190 = vpop.f32.mrb[0].mxu0
    %v3191 = vadd.f32 %v3148, %v3190
    %3192 = vdwg.mxu0
    %3193 = vmatprep.subr.bf16.mxu0 0
    %3194 = vmatpush1.bf16.msra.mxu0 %v2917
    %3195 = vmatprep.subr.bf16.mxu0 0
    %3196 = vmatpush1.bf16.msra.mxu0 %v2920
    %3197 = vmatprep.subr.bf16.mxu0 0
    %3198 = vmatpush1.bf16.msra.mxu0 %v2923
    %3199 = vmatprep.subr.bf16.mxu0 0
    %3200 = vmatpush1.bf16.msra.mxu0 %v2926
    %3201 = vmatprep.subr.bf16.mxu0 0
    %3202 = vmatpush1.bf16.msra.mxu0 %v2929
    %3203 = vmatprep.subr.bf16.mxu0 0
    %3204 = vmatpush1.bf16.msra.mxu0 %v2932
    %3205 = vmatprep.subr.bf16.mxu0 0
    %3206 = vmatpush1.bf16.msra.mxu0 %v2935
    %3207 = vmatprep.subr.bf16.mxu0 0
    %3208 = vmatpush1.bf16.msra.mxu0 %v2938
    %3209 = vmatprep.subr.bf16.mxu0 0
    %3210 = vmatpush1.bf16.msra.mxu0 %v2941
    %3211 = vmatprep.subr.bf16.mxu0 0
    %3212 = vmatpush1.bf16.msra.mxu0 %v2944
    %3213 = vmatprep.subr.bf16.mxu0 0
    %3214 = vmatpush1.bf16.msra.mxu0 %v2947
    %3215 = vmatprep.subr.bf16.mxu0 0
    %3216 = vmatpush1.bf16.msra.mxu0 %v2950
    %3217 = vmatprep.subr.bf16.mxu0 0
    %3218 = vmatpush1.bf16.msra.mxu0 %v2953
    %3219 = vmatprep.subr.bf16.mxu0 0
    %3220 = vmatpush1.bf16.msra.mxu0 %v2956
    %3221 = vmatprep.subr.bf16.mxu0 0
    %3222 = vmatpush1.bf16.msra.mxu0 %v2959
    %3223 = vmatprep.subr.bf16.mxu0 0
    %3224 = vmatpush1.bf16.msra.mxu0 %v2962
    %3225 = vmatprep.mubr.bf16.mxu0 %v874
    %3226 = vmatmul.mubr.bf16.gmra.mrb[0].mxu0 %v873
    %v3227 = vpop.f32.mrb[0].mxu0
    %v3228 = vadd.f32 %v2589, %v3227
    %v3229 = vpop.f32.mrb[0].mxu0
    %v3230 = vpop.f32.mrb[0].mxu0
    %v3231 = vadd.f32 %v2592, %v3230
    %v3232 = vpop.f32.mrb[0].mxu0
    %3233 = vdwg.mxu0
    %3234 = vmatprep.subr.bf16.mxu0 0
    %3235 = vmatpush1.bf16.msra.mxu0 %v2965
    %3236 = vmatprep.subr.bf16.mxu0 0
    %3237 = vmatpush1.bf16.msra.mxu0 %v2968
    %3238 = vmatprep.subr.bf16.mxu0 0
    %3239 = vmatpush1.bf16.msra.mxu0 %v2971
    %3240 = vmatprep.subr.bf16.mxu0 0
    %3241 = vmatpush1.bf16.msra.mxu0 %v2974
    %3242 = vmatprep.subr.bf16.mxu0 0
    %3243 = vmatpush1.bf16.msra.mxu0 %v2977
    %3244 = vmatprep.subr.bf16.mxu0 0
    %3245 = vmatpush1.bf16.msra.mxu0 %v2980
    %3246 = vmatprep.subr.bf16.mxu0 0
    %3247 = vmatpush1.bf16.msra.mxu0 %v2983
    %3248 = vmatprep.subr.bf16.mxu0 0
    %3249 = vmatpush1.bf16.msra.mxu0 %v2986
    %3250 = vmatprep.subr.bf16.mxu0 0
    %3251 = vmatpush1.bf16.msra.mxu0 %v2989
    %3252 = vmatprep.subr.bf16.mxu0 0
    %3253 = vmatpush1.bf16.msra.mxu0 %v2992
    %3254 = vmatprep.subr.bf16.mxu0 0
    %3255 = vmatpush1.bf16.msra.mxu0 %v2995
    %3256 = vmatprep.subr.bf16.mxu0 0
    %3257 = vmatpush1.bf16.msra.mxu0 %v2998
    %3258 = vmatprep.subr.bf16.mxu0 0
    %3259 = vmatpush1.bf16.msra.mxu0 %v3001
    %3260 = vmatprep.subr.bf16.mxu0 0
    %3261 = vmatpush1.bf16.msra.mxu0 %v3004
    %3262 = vmatprep.subr.bf16.mxu0 0
    %3263 = vmatpush1.bf16.msra.mxu0 %v3007
    %3264 = vmatprep.subr.bf16.mxu0 0
    %3265 = vmatpush1.bf16.msra.mxu0 %v3010
    %3266 = vmatprep.mubr.bf16.mxu0 %v876
    %3267 = vmatmul.mubr.bf16.gmra.mrb[0].mxu0 %v875
    %v3268 = vpop.f32.mrb[0].mxu0
    %v3269 = vadd.f32 %v3228, %v3268
    %v3270 = vpop.f32.mrb[0].mxu0
    %v3271 = vpop.f32.mrb[0].mxu0
    %v3272 = vadd.f32 %v3231, %v3271
    %v3273 = vpop.f32.mrb[0].mxu0
    %3274 = vdwg.mxu0
    %v3275 = vld [vmem:[#allocation5 + $0x20] sm:$0xff]
    %v3276 = vld [vmem:[#allocation5 + $0x28] sm:$0xff]
    %v3277 = vld [vmem:[#allocation5 + $0x50] sm:$0xff]
    %v3278 = vld [vmem:[#allocation5 + $0x58] sm:$0xff]
    %v3279 = vld [vmem:[#allocation5 + $0x80] sm:$0xff]
    %v3280 = vld [vmem:[#allocation5 + $0x88] sm:$0xff]
    %v3281 = vld [vmem:[#allocation5 + $0xb0] sm:$0xff]
    %v3282 = vld [vmem:[#allocation5 + $0xb8] sm:$0xff]
    %v3283 = vld [vmem:[#allocation5 + $0xe0] sm:$0xff]
    %v3284 = vld [vmem:[#allocation5 + $0xe8] sm:$0xff]
    %v3285 = vld [vmem:[#allocation5 + $0x110] sm:$0xff]
    %v3286 = vld [vmem:[#allocation5 + $0x118] sm:$0xff]
    %v3287 = vld [vmem:[#allocation5 + $0x140] sm:$0xff]
    %v3288 = vld [vmem:[#allocation5 + $0x148] sm:$0xff]
    %v3289 = vld [vmem:[#allocation5 + $0x170] sm:$0xff]
    %v3290 = vld [vmem:[#allocation5 + $0x178] sm:$0xff]
    %v3291 = vld [vmem:[#allocation5 + $0x1a0] sm:$0xff]
    %v3292 = vld [vmem:[#allocation5 + $0x1a8] sm:$0xff]
    %v3293 = vld [vmem:[#allocation5 + $0x1d0] sm:$0xff]
    %v3294 = vld [vmem:[#allocation5 + $0x1d8] sm:$0xff]
    %v3295 = vld [vmem:[#allocation5 + $0x200] sm:$0xff]
    %v3296 = vld [vmem:[#allocation5 + $0x208] sm:$0xff]
    %v3297 = vld [vmem:[#allocation5 + $0x230] sm:$0xff]
    %v3298 = vld [vmem:[#allocation5 + $0x238] sm:$0xff]
    %v3299 = vld [vmem:[#allocation5 + $0x260] sm:$0xff]
    %v3300 = vld [vmem:[#allocation5 + $0x268] sm:$0xff]
    %v3301 = vld [vmem:[#allocation5 + $0x290] sm:$0xff]
    %v3302 = vld [vmem:[#allocation5 + $0x298] sm:$0xff]
    %v3303 = vld [vmem:[#allocation5 + $0x2c0] sm:$0xff]
    %v3304 = vld [vmem:[#allocation5 + $0x2c8] sm:$0xff]
    %v3305 = vld [vmem:[#allocation5 + $0x2f0] sm:$0xff]
    %v3306 = vld [vmem:[#allocation5 + $0x2f8] sm:$0xff]
    %v3307 = vld [vmem:[#allocation5 + $0x320] sm:$0xff]
    %v3308 = vld [vmem:[#allocation5 + $0x328] sm:$0xff]
    %v3309 = vld [vmem:[#allocation5 + $0x350] sm:$0xff]
    %v3310 = vld [vmem:[#allocation5 + $0x358] sm:$0xff]
    %v3311 = vld [vmem:[#allocation5 + $0x380] sm:$0xff]
    %v3312 = vld [vmem:[#allocation5 + $0x388] sm:$0xff]
    %v3313 = vld [vmem:[#allocation5 + $0x3b0] sm:$0xff]
    %v3314 = vld [vmem:[#allocation5 + $0x3b8] sm:$0xff]
    %v3315 = vld [vmem:[#allocation5 + $0x3e0] sm:$0xff]
    %v3316 = vld [vmem:[#allocation5 + $0x3e8] sm:$0xff]
    %v3317 = vld [vmem:[#allocation5 + $0x410] sm:$0xff]
    %v3318 = vld [vmem:[#allocation5 + $0x418] sm:$0xff]
    %v3319 = vld [vmem:[#allocation5 + $0x440] sm:$0xff]
    %v3320 = vld [vmem:[#allocation5 + $0x448] sm:$0xff]
    %v3321 = vld [vmem:[#allocation5 + $0x470] sm:$0xff]
    %v3322 = vld [vmem:[#allocation5 + $0x478] sm:$0xff]
    %v3323 = vld [vmem:[#allocation5 + $0x4a0] sm:$0xff]
    %v3324 = vld [vmem:[#allocation5 + $0x4a8] sm:$0xff]
    %v3325 = vld [vmem:[#allocation5 + $0x4d0] sm:$0xff]
    %v3326 = vld [vmem:[#allocation5 + $0x4d8] sm:$0xff]
    %v3327 = vld [vmem:[#allocation5 + $0x500] sm:$0xff]
    %v3328 = vld [vmem:[#allocation5 + $0x508] sm:$0xff]
    %v3329 = vld [vmem:[#allocation5 + $0x530] sm:$0xff]
    %v3330 = vld [vmem:[#allocation5 + $0x538] sm:$0xff]
    %v3331 = vld [vmem:[#allocation5 + $0x560] sm:$0xff]
    %v3332 = vld [vmem:[#allocation5 + $0x568] sm:$0xff]
    %v3333 = vld [vmem:[#allocation5 + $0x590] sm:$0xff]
    %v3334 = vld [vmem:[#allocation5 + $0x598] sm:$0xff]
    %v3335 = vld [vmem:[#allocation5 + $0x5c0] sm:$0xff]
    %v3336 = vld [vmem:[#allocation5 + $0x5c8] sm:$0xff]
    %v3337 = vld [vmem:[#allocation5 + $0x5f0] sm:$0xff]
    %v3338 = vld [vmem:[#allocation5 + $0x5f8] sm:$0xff]
    %v3339 = vld [vmem:[#allocation5 + $0x620] sm:$0xff]
    %v3340 = vld [vmem:[#allocation5 + $0x628] sm:$0xff]
    %v3341 = vld [vmem:[#allocation5 + $0x650] sm:$0xff]
    %v3342 = vld [vmem:[#allocation5 + $0x658] sm:$0xff]
    %v3343 = vld [vmem:[#allocation5 + $0x680] sm:$0xff]
    %v3344 = vld [vmem:[#allocation5 + $0x688] sm:$0xff]
    %v3345 = vld [vmem:[#allocation5 + $0x6b0] sm:$0xff]
    %v3346 = vld [vmem:[#allocation5 + $0x6b8] sm:$0xff]
    %v3347 = vld [vmem:[#allocation5 + $0x6e0] sm:$0xff]
    %v3348 = vld [vmem:[#allocation5 + $0x6e8] sm:$0xff]
    %v3349 = vld [vmem:[#allocation5 + $0x710] sm:$0xff]
    %v3350 = vld [vmem:[#allocation5 + $0x718] sm:$0xff]
    %v3351 = vld [vmem:[#allocation5 + $0x740] sm:$0xff]
    %v3352 = vld [vmem:[#allocation5 + $0x748] sm:$0xff]
    %v3353 = vld [vmem:[#allocation5 + $0x770] sm:$0xff]
    %v3354 = vld [vmem:[#allocation5 + $0x778] sm:$0xff]
    %v3355 = vld [vmem:[#allocation5 + $0x7a0] sm:$0xff]
    %v3356 = vld [vmem:[#allocation5 + $0x7a8] sm:$0xff]
    %v3357 = vld [vmem:[#allocation5 + $0x7d0] sm:$0xff]
    %v3358 = vld [vmem:[#allocation5 + $0x7d8] sm:$0xff]
    %v3359 = vld [vmem:[#allocation5 + $0x800] sm:$0xff]
    %v3360 = vld [vmem:[#allocation5 + $0x808] sm:$0xff]
    %v3361 = vld [vmem:[#allocation5 + $0x830] sm:$0xff]
    %v3362 = vld [vmem:[#allocation5 + $0x838] sm:$0xff]
    %v3363 = vld [vmem:[#allocation5 + $0x860] sm:$0xff]
    %v3364 = vld [vmem:[#allocation5 + $0x868] sm:$0xff]
    %v3365 = vld [vmem:[#allocation5 + $0x890] sm:$0xff]
    %v3366 = vld [vmem:[#allocation5 + $0x898] sm:$0xff]
    %v3367 = vld [vmem:[#allocation5 + $0x8c0] sm:$0xff]
    %v3368 = vld [vmem:[#allocation5 + $0x8c8] sm:$0xff]
    %v3369 = vld [vmem:[#allocation5 + $0x8f0] sm:$0xff]
    %v3370 = vld [vmem:[#allocation5 + $0x8f8] sm:$0xff]
    %v3371 = vld [vmem:[#allocation7 + $0x8] sm:$0xf]
    %v3373 = vlaneseq
    %v3374 = vshrl.u32 %v3373, 7
    %v3375 = vsub.s32 0, %v3374
    %v3376 = vrot.slane %v3371, %v3375
    %v3377 = vlaneseq
    %v3378 = vshrl.u32 %v3377, 7
    %v3379 = vsub.s32 1, %v3378
    %v3380 = vrot.slane %v3371, %v3379
    %v3381 = vlaneseq
    %v3382 = vshrl.u32 %v3381, 7
    %v3383 = vsub.s32 2, %v3382
    %v3384 = vrot.slane %v3371, %v3383
    %v3385 = vlaneseq
    %v3386 = vshrl.u32 %v3385, 7
    %v3387 = vsub.s32 3, %v3386
    %v3388 = vrot.slane %v3371, %v3387
    %v3489 = vunpack.c.l.b16 %v3275
    %v3490 = vunpack.c.h.b16 %v3275
    %v3491 = vunpack.c.l.b16 %v3276
    %v3492 = vunpack.c.h.b16 %v3276
    %v3493 = vunpack.c.l.b16 %v3277
    %v3494 = vunpack.c.h.b16 %v3277
    %v3495 = vunpack.c.l.b16 %v3278
    %v3496 = vunpack.c.h.b16 %v3278
    %v3497 = vunpack.c.l.b16 %v3279
    %v3498 = vunpack.c.h.b16 %v3279
    %v3499 = vunpack.c.l.b16 %v3280
    %v3500 = vunpack.c.h.b16 %v3280
    %v3501 = vunpack.c.l.b16 %v3281
    %v3502 = vunpack.c.h.b16 %v3281
    %v3503 = vunpack.c.l.b16 %v3282
    %v3504 = vunpack.c.h.b16 %v3282
    %v3505 = vunpack.c.l.b16 %v3283
    %v3506 = vunpack.c.h.b16 %v3283
    %v3507 = vunpack.c.l.b16 %v3284
    %v3508 = vunpack.c.h.b16 %v3284
    %v3509 = vunpack.c.l.b16 %v3285
    %v3510 = vunpack.c.h.b16 %v3285
    %v3511 = vunpack.c.l.b16 %v3286
    %v3512 = vunpack.c.h.b16 %v3286
    %v3513 = vunpack.c.l.b16 %v3287
    %v3514 = vunpack.c.h.b16 %v3287
    %v3515 = vunpack.c.l.b16 %v3288
    %v3516 = vunpack.c.h.b16 %v3288
    %v3517 = vunpack.c.l.b16 %v3289
    %v3518 = vunpack.c.h.b16 %v3289
    %v3519 = vunpack.c.l.b16 %v3290
    %v3520 = vunpack.c.h.b16 %v3290
    %v3521 = vunpack.c.l.b16 %v3291
    %v3522 = vunpack.c.h.b16 %v3291
    %v3523 = vunpack.c.l.b16 %v3292
    %v3524 = vunpack.c.h.b16 %v3292
    %v3525 = vunpack.c.l.b16 %v3293
    %v3526 = vunpack.c.h.b16 %v3293
    %v3527 = vunpack.c.l.b16 %v3294
    %v3528 = vunpack.c.h.b16 %v3294
    %v3529 = vunpack.c.l.b16 %v3295
    %v3530 = vunpack.c.h.b16 %v3295
    %v3531 = vunpack.c.l.b16 %v3296
    %v3532 = vunpack.c.h.b16 %v3296
    %v3533 = vunpack.c.l.b16 %v3297
    %v3534 = vunpack.c.h.b16 %v3297
    %v3535 = vunpack.c.l.b16 %v3298
    %v3536 = vunpack.c.h.b16 %v3298
    %v3537 = vunpack.c.l.b16 %v3299
    %v3538 = vunpack.c.h.b16 %v3299
    %v3539 = vunpack.c.l.b16 %v3300
    %v3540 = vunpack.c.h.b16 %v3300
    %v3541 = vunpack.c.l.b16 %v3301
    %v3542 = vunpack.c.h.b16 %v3301
    %v3543 = vunpack.c.l.b16 %v3302
    %v3544 = vunpack.c.h.b16 %v3302
    %v3545 = vunpack.c.l.b16 %v3303
    %v3546 = vunpack.c.h.b16 %v3303
    %v3547 = vunpack.c.l.b16 %v3304
    %v3548 = vunpack.c.h.b16 %v3304
    %v3549 = vunpack.c.l.b16 %v3305
    %v3550 = vunpack.c.h.b16 %v3305
    %v3551 = vunpack.c.l.b16 %v3306
    %v3552 = vunpack.c.h.b16 %v3306
    %v3553 = vunpack.c.l.b16 %v3307
    %v3554 = vunpack.c.h.b16 %v3307
    %v3555 = vunpack.c.l.b16 %v3308
    %v3556 = vunpack.c.h.b16 %v3308
    %v3557 = vunpack.c.l.b16 %v3309
    %v3558 = vunpack.c.h.b16 %v3309
    %v3559 = vunpack.c.l.b16 %v3310
    %v3560 = vunpack.c.h.b16 %v3310
    %v3561 = vunpack.c.l.b16 %v3311
    %v3562 = vunpack.c.h.b16 %v3311
    %v3563 = vunpack.c.l.b16 %v3312
    %v3564 = vunpack.c.h.b16 %v3312
    %v3565 = vunpack.c.l.b16 %v3313
    %v3566 = vunpack.c.h.b16 %v3313
    %v3567 = vunpack.c.l.b16 %v3314
    %v3568 = vunpack.c.h.b16 %v3314
    %v3569 = vunpack.c.l.b16 %v3315
    %v3570 = vunpack.c.h.b16 %v3315
    %v3571 = vunpack.c.l.b16 %v3316
    %v3572 = vunpack.c.h.b16 %v3316
    %v3573 = vunpack.c.l.b16 %v3317
    %v3574 = vunpack.c.h.b16 %v3317
    %v3575 = vunpack.c.l.b16 %v3318
    %v3576 = vunpack.c.h.b16 %v3318
    %v3577 = vunpack.c.l.b16 %v3319
    %v3578 = vunpack.c.h.b16 %v3319
    %v3579 = vunpack.c.l.b16 %v3320
    %v3580 = vunpack.c.h.b16 %v3320
    %v3581 = vunpack.c.l.b16 %v3321
    %v3582 = vunpack.c.h.b16 %v3321
    %v3583 = vunpack.c.l.b16 %v3322
    %v3584 = vunpack.c.h.b16 %v3322
    %v3585 = vunpack.c.l.b16 %v3323
    %v3586 = vunpack.c.h.b16 %v3323
    %v3587 = vunpack.c.l.b16 %v3324
    %v3588 = vunpack.c.h.b16 %v3324
    %v3589 = vunpack.c.l.b16 %v3325
    %v3590 = vunpack.c.h.b16 %v3325
    %v3591 = vunpack.c.l.b16 %v3326
    %v3592 = vunpack.c.h.b16 %v3326
    %v3593 = vunpack.c.l.b16 %v3327
    %v3594 = vunpack.c.h.b16 %v3327
    %v3595 = vunpack.c.l.b16 %v3328
    %v3596 = vunpack.c.h.b16 %v3328
    %v3597 = vunpack.c.l.b16 %v3329
    %v3598 = vunpack.c.h.b16 %v3329
    %v3599 = vunpack.c.l.b16 %v3330
    %v3600 = vunpack.c.h.b16 %v3330
    %v3601 = vunpack.c.l.b16 %v3331
    %v3602 = vunpack.c.h.b16 %v3331
    %v3603 = vunpack.c.l.b16 %v3332
    %v3604 = vunpack.c.h.b16 %v3332
    %v3605 = vunpack.c.l.b16 %v3333
    %v3606 = vunpack.c.h.b16 %v3333
    %v3607 = vunpack.c.l.b16 %v3334
    %v3608 = vunpack.c.h.b16 %v3334
    %v3609 = vunpack.c.l.b16 %v3335
    %v3610 = vunpack.c.h.b16 %v3335
    %v3611 = vunpack.c.l.b16 %v3336
    %v3612 = vunpack.c.h.b16 %v3336
    %v3613 = vunpack.c.l.b16 %v3337
    %v3614 = vunpack.c.h.b16 %v3337
    %v3615 = vunpack.c.l.b16 %v3338
    %v3616 = vunpack.c.h.b16 %v3338
    %v3617 = vunpack.c.l.b16 %v3339
    %v3618 = vunpack.c.h.b16 %v3339
    %v3619 = vunpack.c.l.b16 %v3340
    %v3620 = vunpack.c.h.b16 %v3340
    %v3621 = vunpack.c.l.b16 %v3341
    %v3622 = vunpack.c.h.b16 %v3341
    %v3623 = vunpack.c.l.b16 %v3342
    %v3624 = vunpack.c.h.b16 %v3342
    %v3625 = vunpack.c.l.b16 %v3343
    %v3626 = vunpack.c.h.b16 %v3343
    %v3627 = vunpack.c.l.b16 %v3344
    %v3628 = vunpack.c.h.b16 %v3344
    %v3629 = vunpack.c.l.b16 %v3345
    %v3630 = vunpack.c.h.b16 %v3345
    %v3631 = vunpack.c.l.b16 %v3346
    %v3632 = vunpack.c.h.b16 %v3346
    %v3633 = vunpack.c.l.b16 %v3347
    %v3634 = vunpack.c.h.b16 %v3347
    %v3635 = vunpack.c.l.b16 %v3348
    %v3636 = vunpack.c.h.b16 %v3348
    %v3637 = vunpack.c.l.b16 %v3349
    %v3638 = vunpack.c.h.b16 %v3349
    %v3639 = vunpack.c.l.b16 %v3350
    %v3640 = vunpack.c.h.b16 %v3350
    %v3641 = vunpack.c.l.b16 %v3351
    %v3642 = vunpack.c.h.b16 %v3351
    %v3643 = vunpack.c.l.b16 %v3352
    %v3644 = vunpack.c.h.b16 %v3352
    %v3645 = vunpack.c.l.b16 %v3353
    %v3646 = vunpack.c.h.b16 %v3353
    %v3647 = vunpack.c.l.b16 %v3354
    %v3648 = vunpack.c.h.b16 %v3354
    %v3649 = vunpack.c.l.b16 %v3355
    %v3650 = vunpack.c.h.b16 %v3355
    %v3651 = vunpack.c.l.b16 %v3356
    %v3652 = vunpack.c.h.b16 %v3356
    %v3653 = vunpack.c.l.b16 %v3357
    %v3654 = vunpack.c.h.b16 %v3357
    %v3655 = vunpack.c.l.b16 %v3358
    %v3656 = vunpack.c.h.b16 %v3358
    %v3657 = vunpack.c.l.b16 %v3359
    %v3658 = vunpack.c.h.b16 %v3359
    %v3659 = vunpack.c.l.b16 %v3360
    %v3660 = vunpack.c.h.b16 %v3360
    %v3661 = vunpack.c.l.b16 %v3361
    %v3662 = vunpack.c.h.b16 %v3361
    %v3663 = vunpack.c.l.b16 %v3362
    %v3664 = vunpack.c.h.b16 %v3362
    %v3665 = vunpack.c.l.b16 %v3363
    %v3666 = vunpack.c.h.b16 %v3363
    %v3667 = vunpack.c.l.b16 %v3364
    %v3668 = vunpack.c.h.b16 %v3364
    %v3669 = vunpack.c.l.b16 %v3365
    %v3670 = vunpack.c.h.b16 %v3365
    %v3671 = vunpack.c.l.b16 %v3366
    %v3672 = vunpack.c.h.b16 %v3366
    %v3673 = vunpack.c.l.b16 %v3367
    %v3674 = vunpack.c.h.b16 %v3367
    %v3675 = vunpack.c.l.b16 %v3368
    %v3676 = vunpack.c.h.b16 %v3368
    %v3677 = vunpack.c.l.b16 %v3369
    %v3678 = vunpack.c.h.b16 %v3369
    %v3679 = vunpack.c.l.b16 %v3370
    %v3680 = vunpack.c.h.b16 %v3370
    %v3681 = vpack.c.b16 %v3493, %v3489
    %v3682 = vpack.c.b16 %v3494, %v3490
    %v3683 = vpack.c.b16 %v3495, %v3491
    %v3684 = vpack.c.b16 %v3496, %v3492
    %v3685 = vpack.c.b16 %v3501, %v3497
    %v3686 = vpack.c.b16 %v3502, %v3498
    %v3687 = vpack.c.b16 %v3503, %v3499
    %v3688 = vpack.c.b16 %v3504, %v3500
    %v3689 = vpack.c.b16 %v3509, %v3505
    %v3690 = vpack.c.b16 %v3510, %v3506
    %v3691 = vpack.c.b16 %v3511, %v3507
    %v3692 = vpack.c.b16 %v3512, %v3508
    %v3693 = vpack.c.b16 %v3517, %v3513
    %v3694 = vpack.c.b16 %v3518, %v3514
    %v3695 = vpack.c.b16 %v3519, %v3515
    %v3696 = vpack.c.b16 %v3520, %v3516
    %v3697 = vpack.c.b16 %v3525, %v3521
    %v3698 = vpack.c.b16 %v3526, %v3522
    %v3699 = vpack.c.b16 %v3527, %v3523
    %v3700 = vpack.c.b16 %v3528, %v3524
    %v3701 = vpack.c.b16 %v3533, %v3529
    %v3702 = vpack.c.b16 %v3534, %v3530
    %v3703 = vpack.c.b16 %v3535, %v3531
    %v3704 = vpack.c.b16 %v3536, %v3532
    %v3705 = vpack.c.b16 %v3541, %v3537
    %v3706 = vpack.c.b16 %v3542, %v3538
    %v3707 = vpack.c.b16 %v3543, %v3539
    %v3708 = vpack.c.b16 %v3544, %v3540
    %v3709 = vpack.c.b16 %v3549, %v3545
    %v3710 = vpack.c.b16 %v3550, %v3546
    %v3711 = vpack.c.b16 %v3551, %v3547
    %v3712 = vpack.c.b16 %v3552, %v3548
    %v3713 = vpack.c.b16 %v3557, %v3553
    %v3714 = vpack.c.b16 %v3558, %v3554
    %v3715 = vpack.c.b16 %v3559, %v3555
    %v3716 = vpack.c.b16 %v3560, %v3556
    %v3717 = vpack.c.b16 %v3565, %v3561
    %v3718 = vpack.c.b16 %v3566, %v3562
    %v3719 = vpack.c.b16 %v3567, %v3563
    %v3720 = vpack.c.b16 %v3568, %v3564
    %v3721 = vpack.c.b16 %v3573, %v3569
    %v3722 = vpack.c.b16 %v3574, %v3570
    %v3723 = vpack.c.b16 %v3575, %v3571
    %v3724 = vpack.c.b16 %v3576, %v3572
    %v3725 = vpack.c.b16 %v3581, %v3577
    %v3726 = vpack.c.b16 %v3582, %v3578
    %v3727 = vpack.c.b16 %v3583, %v3579
    %v3728 = vpack.c.b16 %v3584, %v3580
    %v3729 = vpack.c.b16 %v3589, %v3585
    %v3730 = vpack.c.b16 %v3590, %v3586
    %v3731 = vpack.c.b16 %v3591, %v3587
    %v3732 = vpack.c.b16 %v3592, %v3588
    %v3733 = vpack.c.b16 %v3597, %v3593
    %v3734 = vpack.c.b16 %v3598, %v3594
    %v3735 = vpack.c.b16 %v3599, %v3595
    %v3736 = vpack.c.b16 %v3600, %v3596
    %v3737 = vpack.c.b16 %v3605, %v3601
    %v3738 = vpack.c.b16 %v3606, %v3602
    %v3739 = vpack.c.b16 %v3607, %v3603
    %v3740 = vpack.c.b16 %v3608, %v3604
    %v3741 = vpack.c.b16 %v3613, %v3609
    %v3742 = vpack.c.b16 %v3614, %v3610
    %v3743 = vpack.c.b16 %v3615, %v3611
    %v3744 = vpack.c.b16 %v3616, %v3612
    %v3745 = vpack.c.b16 %v3621, %v3617
    %v3746 = vpack.c.b16 %v3622, %v3618
    %v3747 = vpack.c.b16 %v3623, %v3619
    %v3748 = vpack.c.b16 %v3624, %v3620
    %v3749 = vpack.c.b16 %v3629, %v3625
    %v3750 = vpack.c.b16 %v3630, %v3626
    %v3751 = vpack.c.b16 %v3631, %v3627
    %v3752 = vpack.c.b16 %v3632, %v3628
    %v3753 = vpack.c.b16 %v3637, %v3633
    %v3754 = vpack.c.b16 %v3638, %v3634
    %v3755 = vpack.c.b16 %v3639, %v3635
    %v3756 = vpack.c.b16 %v3640, %v3636
    %v3757 = vpack.c.b16 %v3645, %v3641
    %v3758 = vpack.c.b16 %v3646, %v3642
    %v3759 = vpack.c.b16 %v3647, %v3643
    %v3760 = vpack.c.b16 %v3648, %v3644
    %v3761 = vpack.c.b16 %v3653, %v3649
    %v3762 = vpack.c.b16 %v3654, %v3650
    %v3763 = vpack.c.b16 %v3655, %v3651
    %v3764 = vpack.c.b16 %v3656, %v3652
    %v3765 = vpack.c.b16 %v3661, %v3657
    %v3766 = vpack.c.b16 %v3662, %v3658
    %v3767 = vpack.c.b16 %v3663, %v3659
    %v3768 = vpack.c.b16 %v3664, %v3660
    %v3769 = vpack.c.b16 %v3669, %v3665
    %v3770 = vpack.c.b16 %v3670, %v3666
    %v3771 = vpack.c.b16 %v3671, %v3667
    %v3772 = vpack.c.b16 %v3672, %v3668
    %v3773 = vpack.c.b16 %v3677, %v3673
    %v3774 = vpack.c.b16 %v3678, %v3674
    %v3775 = vpack.c.b16 %v3679, %v3675
    %v3776 = vpack.c.b16 %v3680, %v3676
    %3873 = vmatprep.subr.bf16.mxu0 %v3682
    %3874 = vmatpush1.bf16.msra.mxu0 %v3681
    %3875 = vmatprep.subr.bf16.mxu0 %v3686
    %3876 = vmatpush1.bf16.msra.mxu0 %v3685
    %3877 = vmatprep.subr.bf16.mxu0 %v3690
    %3878 = vmatpush1.bf16.msra.mxu0 %v3689
    %3879 = vmatprep.subr.bf16.mxu0 %v3694
    %3880 = vmatpush1.bf16.msra.mxu0 %v3693
    %3881 = vmatprep.subr.bf16.mxu0 %v3698
    %3882 = vmatpush1.bf16.msra.mxu0 %v3697
    %3883 = vmatprep.subr.bf16.mxu0 %v3702
    %3884 = vmatpush1.bf16.msra.mxu0 %v3701
    %3885 = vmatprep.subr.bf16.mxu0 %v3706
    %3886 = vmatpush1.bf16.msra.mxu0 %v3705
    %3887 = vmatprep.subr.bf16.mxu0 %v3710
    %3888 = vmatpush1.bf16.msra.mxu0 %v3709
    %3889 = vmatprep.subr.bf16.mxu0 %v3714
    %3890 = vmatpush1.bf16.msra.mxu0 %v3713
    %3891 = vmatprep.subr.bf16.mxu0 %v3718
    %3892 = vmatpush1.bf16.msra.mxu0 %v3717
    %3893 = vmatprep.subr.bf16.mxu0 %v3722
    %3894 = vmatpush1.bf16.msra.mxu0 %v3721
    %3895 = vmatprep.subr.bf16.mxu0 %v3726
    %3896 = vmatpush1.bf16.msra.mxu0 %v3725
    %3897 = vmatprep.subr.bf16.mxu0 %v3730
    %3898 = vmatpush1.bf16.msra.mxu0 %v3729
    %3899 = vmatprep.subr.bf16.mxu0 %v3734
    %3900 = vmatpush1.bf16.msra.mxu0 %v3733
    %3901 = vmatprep.subr.bf16.mxu0 %v3738
    %3902 = vmatpush1.bf16.msra.mxu0 %v3737
    %3903 = vmatprep.subr.bf16.mxu0 %v3742
    %3904 = vmatpush1.bf16.msra.mxu0 %v3741
    %3905 = vmatprep.mubr.bf16.mxu0 %v93
    %3906 = vmatmul.mubr.bf16.gmra.mrb[0].mxu0 %v92
    %v3907 = vpop.f32.mrb[0].mxu0
    %v3908 = vadd.f32 %v3376, %v3907
    %v3909 = vpop.f32.mrb[0].mxu0
    %v3910 = vadd.f32 %v3380, %v3909
    %v3911 = vpop.f32.mrb[0].mxu0
    %v3912 = vadd.f32 %v3376, %v3911
    %v3913 = vpop.f32.mrb[0].mxu0
    %v3914 = vadd.f32 %v3380, %v3913
    %3915 = vdwg.mxu0
    %3916 = vmatprep.subr.bf16.mxu0 %v3746
    %3917 = vmatpush1.bf16.msra.mxu0 %v3745
    %3918 = vmatprep.subr.bf16.mxu0 %v3750
    %3919 = vmatpush1.bf16.msra.mxu0 %v3749
    %3920 = vmatprep.subr.bf16.mxu0 %v3754
    %3921 = vmatpush1.bf16.msra.mxu0 %v3753
    %3922 = vmatprep.subr.bf16.mxu0 %v3758
    %3923 = vmatpush1.bf16.msra.mxu0 %v3757
    %3924 = vmatprep.subr.bf16.mxu0 %v3762
    %3925 = vmatpush1.bf16.msra.mxu0 %v3761
    %3926 = vmatprep.subr.bf16.mxu0 %v3766
    %3927 = vmatpush1.bf16.msra.mxu0 %v3765
    %3928 = vmatprep.subr.bf16.mxu0 %v3770
    %3929 = vmatpush1.bf16.msra.mxu0 %v3769
    %3930 = vmatprep.subr.bf16.mxu0 %v3774
    %3931 = vmatpush1.bf16.msra.mxu0 %v3773
    %3932 = vmatprep.subr.bf16.mxu0 0
    %3933 = vmatpush1.bf16.msra.mxu0 0
    %3934 = vmatprep.subr.bf16.mxu0 0
    %3935 = vmatpush1.bf16.msra.mxu0 0
    %3936 = vmatprep.subr.bf16.mxu0 0
    %3937 = vmatpush1.bf16.msra.mxu0 0
    %3938 = vmatprep.subr.bf16.mxu0 0
    %3939 = vmatpush1.bf16.msra.mxu0 0
    %3940 = vmatprep.subr.bf16.mxu0 0
    %3941 = vmatpush1.bf16.msra.mxu0 0
    %3942 = vmatprep.subr.bf16.mxu0 0
    %3943 = vmatpush1.bf16.msra.mxu0 0
    %3944 = vmatprep.subr.bf16.mxu0 0
    %3945 = vmatpush1.bf16.msra.mxu0 0
    %3946 = vmatprep.subr.bf16.mxu0 0
    %3947 = vmatpush1.bf16.msra.mxu0 0
    %3948 = vmatprep.mubr.bf16.mxu0 0
    %3949 = vmatmul.mubr.bf16.gmra.mrb[0].mxu0 %v94
    %v3950 = vpop.f32.mrb[0].mxu0
    %v3951 = vadd.f32 %v3908, %v3950
    %v3952 = vpop.f32.mrb[0].mxu0
    %v3953 = vadd.f32 %v3910, %v3952
    %v3954 = vpop.f32.mrb[0].mxu0
    %v3955 = vadd.f32 %v3912, %v3954
    %v3956 = vpop.f32.mrb[0].mxu0
    %v3957 = vadd.f32 %v3914, %v3956
    %3958 = vdwg.mxu0
    %3959 = vmatprep.subr.bf16.mxu0 %v3684
    %3960 = vmatpush1.bf16.msra.mxu0 %v3683
    %3961 = vmatprep.subr.bf16.mxu0 %v3688
    %3962 = vmatpush1.bf16.msra.mxu0 %v3687
    %3963 = vmatprep.subr.bf16.mxu0 %v3692
    %3964 = vmatpush1.bf16.msra.mxu0 %v3691
    %3965 = vmatprep.subr.bf16.mxu0 %v3696
    %3966 = vmatpush1.bf16.msra.mxu0 %v3695
    %3967 = vmatprep.subr.bf16.mxu0 %v3700
    %3968 = vmatpush1.bf16.msra.mxu0 %v3699
    %3969 = vmatprep.subr.bf16.mxu0 %v3704
    %3970 = vmatpush1.bf16.msra.mxu0 %v3703
    %3971 = vmatprep.subr.bf16.mxu0 %v3708
    %3972 = vmatpush1.bf16.msra.mxu0 %v3707
    %3973 = vmatprep.subr.bf16.mxu0 %v3712
    %3974 = vmatpush1.bf16.msra.mxu0 %v3711
    %3975 = vmatprep.subr.bf16.mxu0 %v3716
    %3976 = vmatpush1.bf16.msra.mxu0 %v3715
    %3977 = vmatprep.subr.bf16.mxu0 %v3720
    %3978 = vmatpush1.bf16.msra.mxu0 %v3719
    %3979 = vmatprep.subr.bf16.mxu0 %v3724
    %3980 = vmatpush1.bf16.msra.mxu0 %v3723
    %3981 = vmatprep.subr.bf16.mxu0 %v3728
    %3982 = vmatpush1.bf16.msra.mxu0 %v3727
    %3983 = vmatprep.subr.bf16.mxu0 %v3732
    %3984 = vmatpush1.bf16.msra.mxu0 %v3731
    %3985 = vmatprep.subr.bf16.mxu0 %v3736
    %3986 = vmatpush1.bf16.msra.mxu0 %v3735
    %3987 = vmatprep.subr.bf16.mxu0 %v3740
    %3988 = vmatpush1.bf16.msra.mxu0 %v3739
    %3989 = vmatprep.subr.bf16.mxu0 %v3744
    %3990 = vmatpush1.bf16.msra.mxu0 %v3743
    %3991 = vmatprep.mubr.bf16.mxu0 %v93
    %3992 = vmatmul.mubr.bf16.gmra.mrb[0].mxu0 %v92
    %v3993 = vpop.f32.mrb[0].mxu0
    %v3994 = vadd.f32 %v3384, %v3993
    %v3995 = vpop.f32.mrb[0].mxu0
    %v3996 = vadd.f32 %v3388, %v3995
    %v3997 = vpop.f32.mrb[0].mxu0
    %v3998 = vadd.f32 %v3384, %v3997
    %v3999 = vpop.f32.mrb[0].mxu0
    %v4000 = vadd.f32 %v3388, %v3999
    %4001 = vdwg.mxu0
    %4002 = vmatprep.subr.bf16.mxu0 %v3748
    %4003 = vmatpush1.bf16.msra.mxu0 %v3747
    %4004 = vmatprep.subr.bf16.mxu0 %v3752
    %4005 = vmatpush1.bf16.msra.mxu0 %v3751
    %4006 = vmatprep.subr.bf16.mxu0 %v3756
    %4007 = vmatpush1.bf16.msra.mxu0 %v3755
    %4008 = vmatprep.subr.bf16.mxu0 %v3760
    %4009 = vmatpush1.bf16.msra.mxu0 %v3759
    %4010 = vmatprep.subr.bf16.mxu0 %v3764
    %4011 = vmatpush1.bf16.msra.mxu0 %v3763
    %4012 = vmatprep.subr.bf16.mxu0 %v3768
    %4013 = vmatpush1.bf16.msra.mxu0 %v3767
    %4014 = vmatprep.subr.bf16.mxu0 %v3772
    %4015 = vmatpush1.bf16.msra.mxu0 %v3771
    %4016 = vmatprep.subr.bf16.mxu0 %v3776
    %4017 = vmatpush1.bf16.msra.mxu0 %v3775
    %4018 = vmatprep.subr.bf16.mxu0 0
    %4019 = vmatpush1.bf16.msra.mxu0 0
    %4020 = vmatprep.subr.bf16.mxu0 0
    %4021 = vmatpush1.bf16.msra.mxu0 0
    %4022 = vmatprep.subr.bf16.mxu0 0
    %4023 = vmatpush1.bf16.msra.mxu0 0
    %4024 = vmatprep.subr.bf16.mxu0 0
    %4025 = vmatpush1.bf16.msra.mxu0 0
    %4026 = vmatprep.subr.bf16.mxu0 0
    %4027 = vmatpush1.bf16.msra.mxu0 0
    %4028 = vmatprep.subr.bf16.mxu0 0
    %4029 = vmatpush1.bf16.msra.mxu0 0
    %4030 = vmatprep.subr.bf16.mxu0 0
    %4031 = vmatpush1.bf16.msra.mxu0 0
    %4032 = vmatprep.subr.bf16.mxu0 0
    %4033 = vmatpush1.bf16.msra.mxu0 0
    %4034 = vmatprep.mubr.bf16.mxu0 0
    %4035 = vmatmul.mubr.bf16.gmra.mrb[0].mxu0 %v94
    %v4036 = vpop.f32.mrb[0].mxu0
    %v4037 = vadd.f32 %v3994, %v4036
    %v4038 = vpop.f32.mrb[0].mxu0
    %v4039 = vadd.f32 %v3996, %v4038
    %v4040 = vpop.f32.mrb[0].mxu0
    %v4041 = vadd.f32 %v3998, %v4040
    %v4042 = vpop.f32.mrb[0].mxu0
    %v4043 = vadd.f32 %v4000, %v4042
    %4044 = vdwg.mxu0
    %v4045 = vmax.f32 %v3951, 0.0
    %v4046 = vmax.f32 %v3953, 0.0
    %v4047 = vmax.f32 %v4037, 0.0
    %v4048 = vmax.f32 %v4039, 0.0
    %v4049 = vmax.f32 %v3955, 0.0
    %v4050 = vmax.f32 %v3957, 0.0
    %v4051 = vmax.f32 %v4041, 0.0
    %v4052 = vmax.f32 %v4043, 0.0
    %v4053 = vpack.c.bf16 %v4049, %v4045
    %v4054 = vpack.c.bf16 %v4050, %v4046
    %v4055 = vpack.c.bf16 %v4051, %v4047
    %v4056 = vpack.c.bf16 %v4052, %v4048
    %v4057 = vld [vmem:[#allocation8 + $0x600] sm:$0xff]
    %v4058 = vld [vmem:[#allocation8 + $0x608] sm:$0xf]
    %v4059 = vld [vmem:[#allocation8 + $0x60c] sm:$0xff]
    %v4060 = vld [vmem:[#allocation8 + $0x614] sm:$0xf]
    %v4061 = vld [vmem:[#allocation8 + $0x618] sm:$0xff]
    %v4062 = vld [vmem:[#allocation8 + $0x620] sm:$0xf]
    %v4063 = vld [vmem:[#allocation8 + $0x624] sm:$0xff]
    %v4064 = vld [vmem:[#allocation8 + $0x62c] sm:$0xf]
    %v4065 = vld [vmem:[#allocation8 + $0x630] sm:$0xff]
    %v4066 = vld [vmem:[#allocation8 + $0x638] sm:$0xf]
    %v4067 = vld [vmem:[#allocation8 + $0x63c] sm:$0xff]
    %v4068 = vld [vmem:[#allocation8 + $0x644] sm:$0xf]
    %v4069 = vld [vmem:[#allocation8 + $0x648] sm:$0xff]
    %v4070 = vld [vmem:[#allocation8 + $0x650] sm:$0xf]
    %v4071 = vld [vmem:[#allocation8 + $0x654] sm:$0xff]
    %v4072 = vld [vmem:[#allocation8 + $0x65c] sm:$0xf]
    %v4073 = vld [vmem:[#allocation8 + $0x660] sm:$0xff]
    %v4074 = vld [vmem:[#allocation8 + $0x668] sm:$0xf]
    %v4075 = vld [vmem:[#allocation8 + $0x66c] sm:$0xff]
    %v4076 = vld [vmem:[#allocation8 + $0x674] sm:$0xf]
    %v4077 = vld [vmem:[#allocation8 + $0x678] sm:$0xff]
    %v4078 = vld [vmem:[#allocation8 + $0x680] sm:$0xf]
    %v4079 = vld [vmem:[#allocation8 + $0x684] sm:$0xff]
    %v4080 = vld [vmem:[#allocation8 + $0x68c] sm:$0xf]
    %v4081 = vld [vmem:[#allocation8 + $0x690] sm:$0xff]
    %v4082 = vld [vmem:[#allocation8 + $0x698] sm:$0xf]
    %v4083 = vld [vmem:[#allocation8 + $0x69c] sm:$0xff]
    %v4084 = vld [vmem:[#allocation8 + $0x6a4] sm:$0xf]
    %v4085 = vld [vmem:[#allocation8 + $0x6a8] sm:$0xff]
    %v4086 = vld [vmem:[#allocation8 + $0x6b0] sm:$0xf]
    %v4087 = vld [vmem:[#allocation8 + $0x6b4] sm:$0xff]
    %v4088 = vld [vmem:[#allocation8 + $0x6bc] sm:$0xf]
    %v4089 = vld [vmem:[#allocation8 + $0x6c0] sm:$0xff]
    %v4090 = vld [vmem:[#allocation8 + $0x6c8] sm:$0xf]
    %v4091 = vld [vmem:[#allocation8 + $0x6cc] sm:$0xff]
    %v4092 = vld [vmem:[#allocation8 + $0x6d4] sm:$0xf]
    %v4093 = vld [vmem:[#allocation8 + $0x6d8] sm:$0xff]
    %v4094 = vld [vmem:[#allocation8 + $0x6e0] sm:$0xf]
    %v4095 = vld [vmem:[#allocation8 + $0x6e4] sm:$0xff]
    %v4096 = vld [vmem:[#allocation8 + $0x6ec] sm:$0xf]
    %v4097 = vld [vmem:[#allocation8 + $0x6f0] sm:$0xff]
    %v4098 = vld [vmem:[#allocation8 + $0x6f8] sm:$0xf]
    %v4099 = vld [vmem:[#allocation8 + $0x6fc] sm:$0xff]
    %v4100 = vld [vmem:[#allocation8 + $0x704] sm:$0xf]
    %v4101 = vld [vmem:[#allocation8 + $0x708] sm:$0xff]
    %v4102 = vld [vmem:[#allocation8 + $0x710] sm:$0xf]
    %v4103 = vld [vmem:[#allocation8 + $0x714] sm:$0xff]
    %v4104 = vld [vmem:[#allocation8 + $0x71c] sm:$0xf]
    %v4105 = vld [vmem:[#allocation8 + $0x720] sm:$0xff]
    %v4106 = vld [vmem:[#allocation8 + $0x728] sm:$0xf]
    %v4107 = vld [vmem:[#allocation8 + $0x72c] sm:$0xff]
    %v4108 = vld [vmem:[#allocation8 + $0x734] sm:$0xf]
    %v4109 = vld [vmem:[#allocation8 + $0x738] sm:$0xff]
    %v4110 = vld [vmem:[#allocation8 + $0x740] sm:$0xf]
    %v4111 = vld [vmem:[#allocation8 + $0x744] sm:$0xff]
    %v4112 = vld [vmem:[#allocation8 + $0x74c] sm:$0xf]
    %v4113 = vld [vmem:[#allocation8 + $0x750] sm:$0xff]
    %v4114 = vld [vmem:[#allocation8 + $0x758] sm:$0xf]
    %v4115 = vld [vmem:[#allocation8 + $0x75c] sm:$0xff]
    %v4116 = vld [vmem:[#allocation8 + $0x764] sm:$0xf]
    %v4117 = vld [vmem:[#allocation8 + $0x768] sm:$0xff]
    %v4118 = vld [vmem:[#allocation8 + $0x770] sm:$0xf]
    %v4119 = vld [vmem:[#allocation8 + $0x774] sm:$0xff]
    %v4120 = vld [vmem:[#allocation8 + $0x77c] sm:$0xf]
    %v4121 = vld [vmem:[#allocation8 + $0x780] sm:$0xff]
    %v4122 = vld [vmem:[#allocation8 + $0x788] sm:$0xf]
    %v4123 = vld [vmem:[#allocation8 + $0x78c] sm:$0xff]
    %v4124 = vld [vmem:[#allocation8 + $0x794] sm:$0xf]
    %v4125 = vld [vmem:[#allocation8 + $0x798] sm:$0xff]
    %v4126 = vld [vmem:[#allocation8 + $0x7a0] sm:$0xf]
    %v4127 = vld [vmem:[#allocation8 + $0x7a4] sm:$0xff]
    %v4128 = vld [vmem:[#allocation8 + $0x7ac] sm:$0xf]
    %v4129 = vld [vmem:[#allocation8 + $0x7b0] sm:$0xff]
    %v4130 = vld [vmem:[#allocation8 + $0x7b8] sm:$0xf]
    %v4131 = vld [vmem:[#allocation8 + $0x7bc] sm:$0xff]
    %v4132 = vld [vmem:[#allocation8 + $0x7c4] sm:$0xf]
    %v4133 = vld [vmem:[#allocation8 + $0x7c8] sm:$0xff]
    %v4134 = vld [vmem:[#allocation8 + $0x7d0] sm:$0xf]
    %v4135 = vld [vmem:[#allocation8 + $0x7d4] sm:$0xff]
    %v4136 = vld [vmem:[#allocation8 + $0x7dc] sm:$0xf]
    %v4137 = vld [vmem:[#allocation8 + $0x7e0] sm:$0xff]
    %v4138 = vld [vmem:[#allocation8 + $0x7e8] sm:$0xf]
    %v4139 = vld [vmem:[#allocation8 + $0x7ec] sm:$0xff]
    %v4140 = vld [vmem:[#allocation8 + $0x7f4] sm:$0xf]
    %v4141 = vld [vmem:[#allocation8 + $0x7f8] sm:$0xff]
    %v4142 = vld [vmem:[#allocation8 + $0x800] sm:$0xf]
    %v4143 = vld [vmem:[#allocation8 + $0x804] sm:$0xff]
    %v4144 = vld [vmem:[#allocation8 + $0x80c] sm:$0xf]
    %v4145 = vld [vmem:[#allocation8 + $0x810] sm:$0xff]
    %v4146 = vld [vmem:[#allocation8 + $0x818] sm:$0xf]
    %v4147 = vld [vmem:[#allocation8 + $0x81c] sm:$0xff]
    %v4148 = vld [vmem:[#allocation8 + $0x824] sm:$0xf]
    %v4149 = vld [vmem:[#allocation8 + $0x828] sm:$0xff]
    %v4150 = vld [vmem:[#allocation8 + $0x830] sm:$0xf]
    %v4151 = vld [vmem:[#allocation8 + $0x834] sm:$0xff]
    %v4152 = vld [vmem:[#allocation8 + $0x83c] sm:$0xf]
    %v4153 = vld [vmem:[#allocation8 + $0x840] sm:$0xff]
    %v4154 = vld [vmem:[#allocation8 + $0x848] sm:$0xf]
    %v4155 = vld [vmem:[#allocation8 + $0x84c] sm:$0xff]
    %v4156 = vld [vmem:[#allocation8 + $0x854] sm:$0xf]
    %v4157 = vld [vmem:[#allocation8 + $0x858] sm:$0xff]
    %v4158 = vld [vmem:[#allocation8 + $0x860] sm:$0xf]
    %v4159 = vld [vmem:[#allocation8 + $0x864] sm:$0xff]
    %v4160 = vld [vmem:[#allocation8 + $0x86c] sm:$0xf]
    %v4161 = vld [vmem:[#allocation8 + $0x870] sm:$0xff]
    %v4162 = vld [vmem:[#allocation8 + $0x878] sm:$0xf]
    %v4163 = vld [vmem:[#allocation8 + $0x87c] sm:$0xff]
    %v4164 = vld [vmem:[#allocation8 + $0x884] sm:$0xf]
    %v4165 = vld [vmem:[#allocation8 + $0x888] sm:$0xff]
    %v4166 = vld [vmem:[#allocation8 + $0x890] sm:$0xf]
    %v4167 = vld [vmem:[#allocation8 + $0x894] sm:$0xff]
    %v4168 = vld [vmem:[#allocation8 + $0x89c] sm:$0xf]
    %v4169 = vld [vmem:[#allocation8 + $0x8a0] sm:$0xff]
    %v4170 = vld [vmem:[#allocation8 + $0x8a8] sm:$0xf]
    %v4171 = vld [vmem:[#allocation8 + $0x8ac] sm:$0xff]
    %v4172 = vld [vmem:[#allocation8 + $0x8b4] sm:$0xf]
    %v4173 = vld [vmem:[#allocation8 + $0x8b8] sm:$0xff]
    %v4174 = vld [vmem:[#allocation8 + $0x8c0] sm:$0xf]
    %v4175 = vld [vmem:[#allocation8 + $0x8c4] sm:$0xff]
    %v4176 = vld [vmem:[#allocation8 + $0x8cc] sm:$0xf]
    %v4177 = vld [vmem:[#allocation8 + $0x8d0] sm:$0xff]
    %v4178 = vld [vmem:[#allocation8 + $0x8d8] sm:$0xf]
    %v4179 = vld [vmem:[#allocation8 + $0x8dc] sm:$0xff]
    %v4180 = vld [vmem:[#allocation8 + $0x8e4] sm:$0xf]
    %v4181 = vld [vmem:[#allocation8 + $0x8e8] sm:$0xff]
    %v4182 = vld [vmem:[#allocation8 + $0x8f0] sm:$0xf]
    %v4183 = vld [vmem:[#allocation8 + $0x8f4] sm:$0xff]
    %v4184 = vld [vmem:[#allocation8 + $0x8fc] sm:$0xf]
    %v4313 = vunpack.c.l.b16 %v4057
    %v4314 = vunpack.c.h.b16 %v4057
    %v4315 = vunpack.c.l.b16 %v4058
    %v4316 = vunpack.c.l.b16 %v4059
    %v4317 = vunpack.c.h.b16 %v4059
    %v4318 = vunpack.c.l.b16 %v4060
    %v4319 = vunpack.c.l.b16 %v4061
    %v4320 = vunpack.c.h.b16 %v4061
    %v4321 = vunpack.c.l.b16 %v4062
    %v4322 = vunpack.c.l.b16 %v4063
    %v4323 = vunpack.c.h.b16 %v4063
    %v4324 = vunpack.c.l.b16 %v4064
    %v4325 = vunpack.c.l.b16 %v4065
    %v4326 = vunpack.c.h.b16 %v4065
    %v4327 = vunpack.c.l.b16 %v4066
    %v4328 = vunpack.c.l.b16 %v4067
    %v4329 = vunpack.c.h.b16 %v4067
    %v4330 = vunpack.c.l.b16 %v4068
    %v4331 = vunpack.c.l.b16 %v4069
    %v4332 = vunpack.c.h.b16 %v4069
    %v4333 = vunpack.c.l.b16 %v4070
    %v4334 = vunpack.c.l.b16 %v4071
    %v4335 = vunpack.c.h.b16 %v4071
    %v4336 = vunpack.c.l.b16 %v4072
    %v4337 = vunpack.c.l.b16 %v4073
    %v4338 = vunpack.c.h.b16 %v4073
    %v4339 = vunpack.c.l.b16 %v4074
    %v4340 = vunpack.c.l.b16 %v4075
    %v4341 = vunpack.c.h.b16 %v4075
    %v4342 = vunpack.c.l.b16 %v4076
    %v4343 = vunpack.c.l.b16 %v4077
    %v4344 = vunpack.c.h.b16 %v4077
    %v4345 = vunpack.c.l.b16 %v4078
    %v4346 = vunpack.c.l.b16 %v4079
    %v4347 = vunpack.c.h.b16 %v4079
    %v4348 = vunpack.c.l.b16 %v4080
    %v4349 = vunpack.c.l.b16 %v4081
    %v4350 = vunpack.c.h.b16 %v4081
    %v4351 = vunpack.c.l.b16 %v4082
    %v4352 = vunpack.c.l.b16 %v4083
    %v4353 = vunpack.c.h.b16 %v4083
    %v4354 = vunpack.c.l.b16 %v4084
    %v4355 = vunpack.c.l.b16 %v4085
    %v4356 = vunpack.c.h.b16 %v4085
    %v4357 = vunpack.c.l.b16 %v4086
    %v4358 = vunpack.c.l.b16 %v4087
    %v4359 = vunpack.c.h.b16 %v4087
    %v4360 = vunpack.c.l.b16 %v4088
    %v4361 = vunpack.c.l.b16 %v4089
    %v4362 = vunpack.c.h.b16 %v4089
    %v4363 = vunpack.c.l.b16 %v4090
    %v4364 = vunpack.c.l.b16 %v4091
    %v4365 = vunpack.c.h.b16 %v4091
    %v4366 = vunpack.c.l.b16 %v4092
    %v4367 = vunpack.c.l.b16 %v4093
    %v4368 = vunpack.c.h.b16 %v4093
    %v4369 = vunpack.c.l.b16 %v4094
    %v4370 = vunpack.c.l.b16 %v4095
    %v4371 = vunpack.c.h.b16 %v4095
    %v4372 = vunpack.c.l.b16 %v4096
    %v4373 = vunpack.c.l.b16 %v4097
    %v4374 = vunpack.c.h.b16 %v4097
    %v4375 = vunpack.c.l.b16 %v4098
    %v4376 = vunpack.c.l.b16 %v4099
    %v4377 = vunpack.c.h.b16 %v4099
    %v4378 = vunpack.c.l.b16 %v4100
    %v4379 = vunpack.c.l.b16 %v4101
    %v4380 = vunpack.c.h.b16 %v4101
    %v4381 = vunpack.c.l.b16 %v4102
    %v4382 = vunpack.c.l.b16 %v4103
    %v4383 = vunpack.c.h.b16 %v4103
    %v4384 = vunpack.c.l.b16 %v4104
    %v4385 = vunpack.c.l.b16 %v4105
    %v4386 = vunpack.c.h.b16 %v4105
    %v4387 = vunpack.c.l.b16 %v4106
    %v4388 = vunpack.c.l.b16 %v4107
    %v4389 = vunpack.c.h.b16 %v4107
    %v4390 = vunpack.c.l.b16 %v4108
    %v4391 = vunpack.c.l.b16 %v4109
    %v4392 = vunpack.c.h.b16 %v4109
    %v4393 = vunpack.c.l.b16 %v4110
    %v4394 = vunpack.c.l.b16 %v4111
    %v4395 = vunpack.c.h.b16 %v4111
    %v4396 = vunpack.c.l.b16 %v4112
    %v4397 = vunpack.c.l.b16 %v4113
    %v4398 = vunpack.c.h.b16 %v4113
    %v4399 = vunpack.c.l.b16 %v4114
    %v4400 = vunpack.c.l.b16 %v4115
    %v4401 = vunpack.c.h.b16 %v4115
    %v4402 = vunpack.c.l.b16 %v4116
    %v4403 = vunpack.c.l.b16 %v4117
    %v4404 = vunpack.c.h.b16 %v4117
    %v4405 = vunpack.c.l.b16 %v4118
    %v4406 = vunpack.c.l.b16 %v4119
    %v4407 = vunpack.c.h.b16 %v4119
    %v4408 = vunpack.c.l.b16 %v4120
    %v4409 = vunpack.c.l.b16 %v4121
    %v4410 = vunpack.c.h.b16 %v4121
    %v4411 = vunpack.c.l.b16 %v4122
    %v4412 = vunpack.c.l.b16 %v4123
    %v4413 = vunpack.c.h.b16 %v4123
    %v4414 = vunpack.c.l.b16 %v4124
    %v4415 = vunpack.c.l.b16 %v4125
    %v4416 = vunpack.c.h.b16 %v4125
    %v4417 = vunpack.c.l.b16 %v4126
    %v4418 = vunpack.c.l.b16 %v4127
    %v4419 = vunpack.c.h.b16 %v4127
    %v4420 = vunpack.c.l.b16 %v4128
    %v4421 = vunpack.c.l.b16 %v4129
    %v4422 = vunpack.c.h.b16 %v4129
    %v4423 = vunpack.c.l.b16 %v4130
    %v4424 = vunpack.c.l.b16 %v4131
    %v4425 = vunpack.c.h.b16 %v4131
    %v4426 = vunpack.c.l.b16 %v4132
    %v4427 = vunpack.c.l.b16 %v4133
    %v4428 = vunpack.c.h.b16 %v4133
    %v4429 = vunpack.c.l.b16 %v4134
    %v4430 = vunpack.c.l.b16 %v4135
    %v4431 = vunpack.c.h.b16 %v4135
    %v4432 = vunpack.c.l.b16 %v4136
    %v4433 = vunpack.c.l.b16 %v4137
    %v4434 = vunpack.c.h.b16 %v4137
    %v4435 = vunpack.c.l.b16 %v4138
    %v4436 = vunpack.c.l.b16 %v4139
    %v4437 = vunpack.c.h.b16 %v4139
    %v4438 = vunpack.c.l.b16 %v4140
    %v4439 = vunpack.c.l.b16 %v4141
    %v4440 = vunpack.c.h.b16 %v4141
    %v4441 = vunpack.c.l.b16 %v4142
    %v4442 = vunpack.c.l.b16 %v4143
    %v4443 = vunpack.c.h.b16 %v4143
    %v4444 = vunpack.c.l.b16 %v4144
    %v4445 = vunpack.c.l.b16 %v4145
    %v4446 = vunpack.c.h.b16 %v4145
    %v4447 = vunpack.c.l.b16 %v4146
    %v4448 = vunpack.c.l.b16 %v4147
    %v4449 = vunpack.c.h.b16 %v4147
    %v4450 = vunpack.c.l.b16 %v4148
    %v4451 = vunpack.c.l.b16 %v4149
    %v4452 = vunpack.c.h.b16 %v4149
    %v4453 = vunpack.c.l.b16 %v4150
    %v4454 = vunpack.c.l.b16 %v4151
    %v4455 = vunpack.c.h.b16 %v4151
    %v4456 = vunpack.c.l.b16 %v4152
    %v4457 = vunpack.c.l.b16 %v4153
    %v4458 = vunpack.c.h.b16 %v4153
    %v4459 = vunpack.c.l.b16 %v4154
    %v4460 = vunpack.c.l.b16 %v4155
    %v4461 = vunpack.c.h.b16 %v4155
    %v4462 = vunpack.c.l.b16 %v4156
    %v4463 = vunpack.c.l.b16 %v4157
    %v4464 = vunpack.c.h.b16 %v4157
    %v4465 = vunpack.c.l.b16 %v4158
    %v4466 = vunpack.c.l.b16 %v4159
    %v4467 = vunpack.c.h.b16 %v4159
    %v4468 = vunpack.c.l.b16 %v4160
    %v4469 = vunpack.c.l.b16 %v4161
    %v4470 = vunpack.c.h.b16 %v4161
    %v4471 = vunpack.c.l.b16 %v4162
    %v4472 = vunpack.c.l.b16 %v4163
    %v4473 = vunpack.c.h.b16 %v4163
    %v4474 = vunpack.c.l.b16 %v4164
    %v4475 = vunpack.c.l.b16 %v4165
    %v4476 = vunpack.c.h.b16 %v4165
    %v4477 = vunpack.c.l.b16 %v4166
    %v4478 = vunpack.c.l.b16 %v4167
    %v4479 = vunpack.c.h.b16 %v4167
    %v4480 = vunpack.c.l.b16 %v4168
    %v4481 = vunpack.c.l.b16 %v4169
    %v4482 = vunpack.c.h.b16 %v4169
    %v4483 = vunpack.c.l.b16 %v4170
    %v4484 = vunpack.c.l.b16 %v4171
    %v4485 = vunpack.c.h.b16 %v4171
    %v4486 = vunpack.c.l.b16 %v4172
    %v4487 = vunpack.c.l.b16 %v4173
    %v4488 = vunpack.c.h.b16 %v4173
    %v4489 = vunpack.c.l.b16 %v4174
    %v4490 = vunpack.c.l.b16 %v4175
    %v4491 = vunpack.c.h.b16 %v4175
    %v4492 = vunpack.c.l.b16 %v4176
    %v4493 = vunpack.c.l.b16 %v4177
    %v4494 = vunpack.c.h.b16 %v4177
    %v4495 = vunpack.c.l.b16 %v4178
    %v4496 = vunpack.c.l.b16 %v4179
    %v4497 = vunpack.c.h.b16 %v4179
    %v4498 = vunpack.c.l.b16 %v4180
    %v4499 = vunpack.c.l.b16 %v4181
    %v4500 = vunpack.c.h.b16 %v4181
    %v4501 = vunpack.c.l.b16 %v4182
    %v4502 = vunpack.c.l.b16 %v4183
    %v4503 = vunpack.c.h.b16 %v4183
    %v4504 = vunpack.c.l.b16 %v4184
    %v4505 = vpack.c.b16 %v4316, %v4313
    %v4506 = vpack.c.b16 %v4317, %v4314
    %v4507 = vpack.c.b16 %v4318, %v4315
    %v4508 = vpack.c.b16 %v4322, %v4319
    %v4509 = vpack.c.b16 %v4323, %v4320
    %v4510 = vpack.c.b16 %v4324, %v4321
    %v4511 = vpack.c.b16 %v4328, %v4325
    %v4512 = vpack.c.b16 %v4329, %v4326
    %v4513 = vpack.c.b16 %v4330, %v4327
    %v4514 = vpack.c.b16 %v4334, %v4331
    %v4515 = vpack.c.b16 %v4335, %v4332
    %v4516 = vpack.c.b16 %v4336, %v4333
    %v4517 = vpack.c.b16 %v4340, %v4337
    %v4518 = vpack.c.b16 %v4341, %v4338
    %v4519 = vpack.c.b16 %v4342, %v4339
    %v4520 = vpack.c.b16 %v4346, %v4343
    %v4521 = vpack.c.b16 %v4347, %v4344
    %v4522 = vpack.c.b16 %v4348, %v4345
    %v4523 = vpack.c.b16 %v4352, %v4349
    %v4524 = vpack.c.b16 %v4353, %v4350
    %v4525 = vpack.c.b16 %v4354, %v4351
    %v4526 = vpack.c.b16 %v4358, %v4355
    %v4527 = vpack.c.b16 %v4359, %v4356
    %v4528 = vpack.c.b16 %v4360, %v4357
    %v4529 = vpack.c.b16 %v4364, %v4361
    %v4530 = vpack.c.b16 %v4365, %v4362
    %v4531 = vpack.c.b16 %v4366, %v4363
    %v4532 = vpack.c.b16 %v4370, %v4367
    %v4533 = vpack.c.b16 %v4371, %v4368
    %v4534 = vpack.c.b16 %v4372, %v4369
    %v4535 = vpack.c.b16 %v4376, %v4373
    %v4536 = vpack.c.b16 %v4377, %v4374
    %v4537 = vpack.c.b16 %v4378, %v4375
    %v4538 = vpack.c.b16 %v4382, %v4379
    %v4539 = vpack.c.b16 %v4383, %v4380
    %v4540 = vpack.c.b16 %v4384, %v4381
    %v4541 = vpack.c.b16 %v4388, %v4385
    %v4542 = vpack.c.b16 %v4389, %v4386
    %v4543 = vpack.c.b16 %v4390, %v4387
    %v4544 = vpack.c.b16 %v4394, %v4391
    %v4545 = vpack.c.b16 %v4395, %v4392
    %v4546 = vpack.c.b16 %v4396, %v4393
    %v4547 = vpack.c.b16 %v4400, %v4397
    %v4548 = vpack.c.b16 %v4401, %v4398
    %v4549 = vpack.c.b16 %v4402, %v4399
    %v4550 = vpack.c.b16 %v4406, %v4403
    %v4551 = vpack.c.b16 %v4407, %v4404
    %v4552 = vpack.c.b16 %v4408, %v4405
    %v4553 = vpack.c.b16 %v4412, %v4409
    %v4554 = vpack.c.b16 %v4413, %v4410
    %v4555 = vpack.c.b16 %v4414, %v4411
    %v4556 = vpack.c.b16 %v4418, %v4415
    %v4557 = vpack.c.b16 %v4419, %v4416
    %v4558 = vpack.c.b16 %v4420, %v4417
    %v4559 = vpack.c.b16 %v4424, %v4421
    %v4560 = vpack.c.b16 %v4425, %v4422
    %v4561 = vpack.c.b16 %v4426, %v4423
    %v4562 = vpack.c.b16 %v4430, %v4427
    %v4563 = vpack.c.b16 %v4431, %v4428
    %v4564 = vpack.c.b16 %v4432, %v4429
    %v4565 = vpack.c.b16 %v4436, %v4433
    %v4566 = vpack.c.b16 %v4437, %v4434
    %v4567 = vpack.c.b16 %v4438, %v4435
    %v4568 = vpack.c.b16 %v4442, %v4439
    %v4569 = vpack.c.b16 %v4443, %v4440
    %v4570 = vpack.c.b16 %v4444, %v4441
    %v4571 = vpack.c.b16 %v4448, %v4445
    %v4572 = vpack.c.b16 %v4449, %v4446
    %v4573 = vpack.c.b16 %v4450, %v4447
    %v4574 = vpack.c.b16 %v4454, %v4451
    %v4575 = vpack.c.b16 %v4455, %v4452
    %v4576 = vpack.c.b16 %v4456, %v4453
    %v4577 = vpack.c.b16 %v4460, %v4457
    %v4578 = vpack.c.b16 %v4461, %v4458
    %v4579 = vpack.c.b16 %v4462, %v4459
    %v4580 = vpack.c.b16 %v4466, %v4463
    %v4581 = vpack.c.b16 %v4467, %v4464
    %v4582 = vpack.c.b16 %v4468, %v4465
    %v4583 = vpack.c.b16 %v4472, %v4469
    %v4584 = vpack.c.b16 %v4473, %v4470
    %v4585 = vpack.c.b16 %v4474, %v4471
    %v4586 = vpack.c.b16 %v4478, %v4475
    %v4587 = vpack.c.b16 %v4479, %v4476
    %v4588 = vpack.c.b16 %v4480, %v4477
    %v4589 = vpack.c.b16 %v4484, %v4481
    %v4590 = vpack.c.b16 %v4485, %v4482
    %v4591 = vpack.c.b16 %v4486, %v4483
    %v4592 = vpack.c.b16 %v4490, %v4487
    %v4593 = vpack.c.b16 %v4491, %v4488
    %v4594 = vpack.c.b16 %v4492, %v4489
    %v4595 = vpack.c.b16 %v4496, %v4493
    %v4596 = vpack.c.b16 %v4497, %v4494
    %v4597 = vpack.c.b16 %v4498, %v4495
    %v4598 = vpack.c.b16 %v4502, %v4499
    %v4599 = vpack.c.b16 %v4503, %v4500
    %v4600 = vpack.c.b16 %v4504, %v4501
    %4697 = vmatprep.subr.bf16.mxu0 %v4506
    %4698 = vmatpush1.bf16.msra.mxu0 %v4505
    %4699 = vmatprep.subr.bf16.mxu0 %v4509
    %4700 = vmatpush1.bf16.msra.mxu0 %v4508
    %4701 = vmatprep.subr.bf16.mxu0 %v4512
    %4702 = vmatpush1.bf16.msra.mxu0 %v4511
    %4703 = vmatprep.subr.bf16.mxu0 %v4515
    %4704 = vmatpush1.bf16.msra.mxu0 %v4514
    %4705 = vmatprep.subr.bf16.mxu0 %v4518
    %4706 = vmatpush1.bf16.msra.mxu0 %v4517
    %4707 = vmatprep.subr.bf16.mxu0 %v4521
    %4708 = vmatpush1.bf16.msra.mxu0 %v4520
    %4709 = vmatprep.subr.bf16.mxu0 %v4524
    %4710 = vmatpush1.bf16.msra.mxu0 %v4523
    %4711 = vmatprep.subr.bf16.mxu0 %v4527
    %4712 = vmatpush1.bf16.msra.mxu0 %v4526
    %4713 = vmatprep.subr.bf16.mxu0 %v4530
    %4714 = vmatpush1.bf16.msra.mxu0 %v4529
    %4715 = vmatprep.subr.bf16.mxu0 %v4533
    %4716 = vmatpush1.bf16.msra.mxu0 %v4532
    %4717 = vmatprep.subr.bf16.mxu0 %v4536
    %4718 = vmatpush1.bf16.msra.mxu0 %v4535
    %4719 = vmatprep.subr.bf16.mxu0 %v4539
    %4720 = vmatpush1.bf16.msra.mxu0 %v4538
    %4721 = vmatprep.subr.bf16.mxu0 %v4542
    %4722 = vmatpush1.bf16.msra.mxu0 %v4541
    %4723 = vmatprep.subr.bf16.mxu0 %v4545
    %4724 = vmatpush1.bf16.msra.mxu0 %v4544
    %4725 = vmatprep.subr.bf16.mxu0 %v4548
    %4726 = vmatpush1.bf16.msra.mxu0 %v4547
    %4727 = vmatprep.subr.bf16.mxu0 %v4551
    %4728 = vmatpush1.bf16.msra.mxu0 %v4550
    %4729 = vmatprep.mubr.bf16.mxu0 %v4054
    %4730 = vmatmul.mubr.bf16.gmra.mrb[0].mxu0 %v4053
    %v4731 = vpop.f32.mrb[0].mxu0
    %v4732 = vadd.f32 0.0, %v4731
    %v4733 = vpop.f32.mrb[0].mxu0
    %v4734 = vadd.f32 0.0, %v4733
    %v4735 = vpop.f32.mrb[0].mxu0
    %v4736 = vadd.f32 0.0, %v4735
    %v4737 = vpop.f32.mrb[0].mxu0
    %v4738 = vadd.f32 0.0, %v4737
    %4739 = vdwg.mxu0
    %4740 = vmatprep.subr.bf16.mxu0 %v4554
    %4741 = vmatpush1.bf16.msra.mxu0 %v4553
    %4742 = vmatprep.subr.bf16.mxu0 %v4557
    %4743 = vmatpush1.bf16.msra.mxu0 %v4556
    %4744 = vmatprep.subr.bf16.mxu0 %v4560
    %4745 = vmatpush1.bf16.msra.mxu0 %v4559
    %4746 = vmatprep.subr.bf16.mxu0 %v4563
    %4747 = vmatpush1.bf16.msra.mxu0 %v4562
    %4748 = vmatprep.subr.bf16.mxu0 %v4566
    %4749 = vmatpush1.bf16.msra.mxu0 %v4565
    %4750 = vmatprep.subr.bf16.mxu0 %v4569
    %4751 = vmatpush1.bf16.msra.mxu0 %v4568
    %4752 = vmatprep.subr.bf16.mxu0 %v4572
    %4753 = vmatpush1.bf16.msra.mxu0 %v4571
    %4754 = vmatprep.subr.bf16.mxu0 %v4575
    %4755 = vmatpush1.bf16.msra.mxu0 %v4574
    %4756 = vmatprep.subr.bf16.mxu0 %v4578
    %4757 = vmatpush1.bf16.msra.mxu0 %v4577
    %4758 = vmatprep.subr.bf16.mxu0 %v4581
    %4759 = vmatpush1.bf16.msra.mxu0 %v4580
    %4760 = vmatprep.subr.bf16.mxu0 %v4584
    %4761 = vmatpush1.bf16.msra.mxu0 %v4583
    %4762 = vmatprep.subr.bf16.mxu0 %v4587
    %4763 = vmatpush1.bf16.msra.mxu0 %v4586
    %4764 = vmatprep.subr.bf16.mxu0 %v4590
    %4765 = vmatpush1.bf16.msra.mxu0 %v4589
    %4766 = vmatprep.subr.bf16.mxu0 %v4593
    %4767 = vmatpush1.bf16.msra.mxu0 %v4592
    %4768 = vmatprep.subr.bf16.mxu0 %v4596
    %4769 = vmatpush1.bf16.msra.mxu0 %v4595
    %4770 = vmatprep.subr.bf16.mxu0 %v4599
    %4771 = vmatpush1.bf16.msra.mxu0 %v4598
    %4772 = vmatprep.mubr.bf16.mxu0 %v4056
    %4773 = vmatmul.mubr.bf16.gmra.mrb[0].mxu0 %v4055
    %v4774 = vpop.f32.mrb[0].mxu0
    %v4775 = vadd.f32 %v4732, %v4774
    %v4776 = vpop.f32.mrb[0].mxu0
    %v4777 = vadd.f32 %v4734, %v4776
    %v4778 = vpop.f32.mrb[0].mxu0
    %v4779 = vadd.f32 %v4736, %v4778
    %v4780 = vpop.f32.mrb[0].mxu0
    %v4781 = vadd.f32 %v4738, %v4780
    %4782 = vdwg.mxu0
    %4783 = vmatprep.subr.bf16.mxu0 0
    %4784 = vmatpush1.bf16.msra.mxu0 %v4507
    %4785 = vmatprep.subr.bf16.mxu0 0
    %4786 = vmatpush1.bf16.msra.mxu0 %v4510
    %4787 = vmatprep.subr.bf16.mxu0 0
    %4788 = vmatpush1.bf16.msra.mxu0 %v4513
    %4789 = vmatprep.subr.bf16.mxu0 0
    %4790 = vmatpush1.bf16.msra.mxu0 %v4516
    %4791 = vmatprep.subr.bf16.mxu0 0
    %4792 = vmatpush1.bf16.msra.mxu0 %v4519
    %4793 = vmatprep.subr.bf16.mxu0 0
    %4794 = vmatpush1.bf16.msra.mxu0 %v4522
    %4795 = vmatprep.subr.bf16.mxu0 0
    %4796 = vmatpush1.bf16.msra.mxu0 %v4525
    %4797 = vmatprep.subr.bf16.mxu0 0
    %4798 = vmatpush1.bf16.msra.mxu0 %v4528
    %4799 = vmatprep.subr.bf16.mxu0 0
    %4800 = vmatpush1.bf16.msra.mxu0 %v4531
    %4801 = vmatprep.subr.bf16.mxu0 0
    %4802 = vmatpush1.bf16.msra.mxu0 %v4534
    %4803 = vmatprep.subr.bf16.mxu0 0
    %4804 = vmatpush1.bf16.msra.mxu0 %v4537
    %4805 = vmatprep.subr.bf16.mxu0 0
    %4806 = vmatpush1.bf16.msra.mxu0 %v4540
    %4807 = vmatprep.subr.bf16.mxu0 0
    %4808 = vmatpush1.bf16.msra.mxu0 %v4543
    %4809 = vmatprep.subr.bf16.mxu0 0
    %4810 = vmatpush1.bf16.msra.mxu0 %v4546
    %4811 = vmatprep.subr.bf16.mxu0 0
    %4812 = vmatpush1.bf16.msra.mxu0 %v4549
    %4813 = vmatprep.subr.bf16.mxu0 0
    %4814 = vmatpush1.bf16.msra.mxu0 %v4552
    %4815 = vmatprep.mubr.bf16.mxu0 %v4054
    %4816 = vmatmul.mubr.bf16.gmra.mrb[0].mxu0 %v4053
    %v4817 = vpop.f32.mrb[0].mxu0
    %v4818 = vadd.f32 0.0, %v4817
    %v4819 = vpop.f32.mrb[0].mxu0
    %v4820 = vpop.f32.mrb[0].mxu0
    %v4821 = vadd.f32 0.0, %v4820
    %v4822 = vpop.f32.mrb[0].mxu0
    %4823 = vdwg.mxu0
    %4824 = vmatprep.subr.bf16.mxu0 0
    %4825 = vmatpush1.bf16.msra.mxu0 %v4555
    %4826 = vmatprep.subr.bf16.mxu0 0
    %4827 = vmatpush1.bf16.msra.mxu0 %v4558
    %4828 = vmatprep.subr.bf16.mxu0 0
    %4829 = vmatpush1.bf16.msra.mxu0 %v4561
    %4830 = vmatprep.subr.bf16.mxu0 0
    %4831 = vmatpush1.bf16.msra.mxu0 %v4564
    %4832 = vmatprep.subr.bf16.mxu0 0
    %4833 = vmatpush1.bf16.msra.mxu0 %v4567
    %4834 = vmatprep.subr.bf16.mxu0 0
    %4835 = vmatpush1.bf16.msra.mxu0 %v4570
    %4836 = vmatprep.subr.bf16.mxu0 0
    %4837 = vmatpush1.bf16.msra.mxu0 %v4573
    %4838 = vmatprep.subr.bf16.mxu0 0
    %4839 = vmatpush1.bf16.msra.mxu0 %v4576
    %4840 = vmatprep.subr.bf16.mxu0 0
    %4841 = vmatpush1.bf16.msra.mxu0 %v4579
    %4842 = vmatprep.subr.bf16.mxu0 0
    %4843 = vmatpush1.bf16.msra.mxu0 %v4582
    %4844 = vmatprep.subr.bf16.mxu0 0
    %4845 = vmatpush1.bf16.msra.mxu0 %v4585
    %4846 = vmatprep.subr.bf16.mxu0 0
    %4847 = vmatpush1.bf16.msra.mxu0 %v4588
    %4848 = vmatprep.subr.bf16.mxu0 0
    %4849 = vmatpush1.bf16.msra.mxu0 %v4591
    %4850 = vmatprep.subr.bf16.mxu0 0
    %4851 = vmatpush1.bf16.msra.mxu0 %v4594
    %4852 = vmatprep.subr.bf16.mxu0 0
    %4853 = vmatpush1.bf16.msra.mxu0 %v4597
    %4854 = vmatprep.subr.bf16.mxu0 0
    %4855 = vmatpush1.bf16.msra.mxu0 %v4600
    %4856 = vmatprep.mubr.bf16.mxu0 %v4056
    %4857 = vmatmul.mubr.bf16.gmra.mrb[0].mxu0 %v4055
    %v4858 = vpop.f32.mrb[0].mxu0
    %v4859 = vadd.f32 %v4818, %v4858
    %v4860 = vpop.f32.mrb[0].mxu0
    %v4861 = vpop.f32.mrb[0].mxu0
    %v4862 = vadd.f32 %v4821, %v4861
    %v4863 = vpop.f32.mrb[0].mxu0
    %4864 = vdwg.mxu0
    %v4865 = vadd.f32 %v3185, %v4775
    %v4866 = vadd.f32 %v3187, %v4777
    %v4867 = vadd.f32 %v3269, %v4859
    %v4868 = vadd.f32 %v3189, %v4779
    %v4869 = vadd.f32 %v3191, %v4781
    %v4870 = vadd.f32 %v3272, %v4862
    %v4871 = vld [vmem:[#allocation10] sm:$0x7]
    %v4873 = vlaneseq
    %v4874 = vshrl.u32 %v4873, 7
    %v4875 = vsub.s32 0, %v4874
    %v4876 = vrot.slane %v4871, %v4875
    %v4877 = vlaneseq
    %v4878 = vshrl.u32 %v4877, 7
    %v4879 = vsub.s32 1, %v4878
    %v4880 = vrot.slane %v4871, %v4879
    %v4881 = vlaneseq
    %v4882 = vshrl.u32 %v4881, 7
    %v4883 = vsub.s32 2, %v4882
    %v4884 = vrot.slane %v4871, %v4883
    %v4888 = vadd.f32 %v4865, %v4876
    %v4889 = vadd.f32 %v4866, %v4880
    %v4890 = vadd.f32 %v4867, %v4884
    %v4891 = vadd.f32 %v4868, %v4876
    %v4892 = vadd.f32 %v4869, %v4880
    %v4893 = vadd.f32 %v4870, %v4884
    %4894 = vst [vmem:[#allocation11] sm:$0xff] %v4888
    %4895 = vst [vmem:[#allocation11 + $0x8] sm:$0xff] %v4889
    %4896 = vst [vmem:[#allocation11 + $0x10] sm:$0xff] %v4890
    %4897 = vst [vmem:[#allocation11 + $0x18] sm:$0xff] %v4891
    %4898 = vst [vmem:[#allocation11 + $0x20] sm:$0xff] %v4892
    %4899 = vst [vmem:[#allocation11 + $0x28] sm:$0xff] %v4893
    // Predicated region
    $region42: #{feed_forward.1} parent=1 // pred_check
      _
    $region43: #{feed_forward.1} parent=1 // pred_check_branch
      %4901 = sbr.rel (0) target = $region45
    $region44: #{feed_forward.1} parent=1 // pred_region
      %s4903 = ssub.s32 768, 768
      %4904 = vsyncadd [#allocation4], %s4903
      %s4905 = sshll.u32 [#allocation11], 4
      %s4906 = int_to_ptr.vmem [resolvable:$true] %s4905
      %4911 = dma.vmem_to_hbm [thread:$0]  %s4906, 768, %s5, [#allocation4], 384, 384, 24
    $region45: #{feed_forward.1} parent=1 // pred_fallthru
      _
    // Predicated region
    $region46: #{feed_forward.1} parent=1 // pred_check
      _
    $region47: #{feed_forward.1} parent=1 // pred_check_branch
      %4913 = sbr.rel (0) target = $region49
    $region48: #{feed_forward.1} parent=1 // pred_region
      %4914 = dma.done [#allocation4], 768
    $region49: #{feed_forward.1} parent=1 // pred_fallthru
      _
    %4915 = vsyncpa [#allocation3], 1
    %4916 = vsyncpa [#allocation6], 1
    %4917 = vsyncpa [#allocation9], 1
    %4918 = vsyncpa [#allocation4], 1

</llo_original>
